<compile_context>
chip_gen: v7x
topology: tpu7x:2x2x1
jax: 0.10.0
libtpu: 0.0.40
codegen_flags: <defaults>
</compile_context>

<pallas_src>
import functools

import jax
import jax.numpy as jnp
from jax.experimental import pallas as pl
from jax.experimental.pallas import tpu as pltpu


def _round_up(x, m):
    return ((x + m - 1) // m) * m


def _encoder_maxpool_kernel(x_ref, w_ref, out_ref, acc_ref, *,
                            valid_len, tile_len, m_chunk, need_mask):
    """One (batch-tile, position-tile) grid step.

    x_ref  : (TB, D, TL)   f32 activations, native layout, positions minor
    w_ref  : (H_pad, D)    bf16 transposed encoder weight (VMEM resident)
    out_ref: (H_pad, TB)   f32 raw pooled max (written on the last position tile)
    acc_ref: (H_pad, TB)   f32 running-max scratch
    """
    li = pl.program_id(1)

    @pl.when(li == 0)
    def _init():
        acc_ref[...] = jnp.full(acc_ref.shape, -jnp.inf, dtype=acc_ref.dtype)

    w_t = w_ref[...]                                       # (H_pad, D) bf16
    tb = x_ref.shape[0]
    h_pad = w_t.shape[0]
    tile_base = li * tile_len                              # first position of this tile

    # Static chunking of the position (lane) axis keeps the (H_pad, m_chunk) f32
    # MXU result small enough to avoid staging large intermediates through VMEM.
    bounds = [(c0, min(c0 + m_chunk, tile_len))
              for c0 in range(0, tile_len, m_chunk)]

    cols = []
    for b in range(tb):                                    # static unroll over batch rows
        row_max = jnp.full((h_pad, 1), -jnp.inf, dtype=jnp.float32)
        for c0, c1 in bounds:                              # static unroll over chunks
            xc = x_ref[b, :, c0:c1].astype(jnp.bfloat16)   # (D, mc) bf16, cast in-kernel
            h = jnp.dot(w_t, xc,
                        preferred_element_type=jnp.float32)  # (H_pad, mc) f32 on MXU
            if need_mask:                                  # ragged last tile: pos >= L -> -inf
                pos = tile_base + c0 + jax.lax.broadcasted_iota(jnp.int32, h.shape, 1)
                h = jnp.where(pos < valid_len, h, -jnp.inf)
            row_max = jnp.maximum(row_max, jnp.max(h, axis=1, keepdims=True))
        cols.append(row_max)

    upd = cols[0] if tb == 1 else jnp.concatenate(cols, axis=1)   # (H_pad, TB)
    acc_ref[...] = jnp.maximum(acc_ref[...], upd)

    @pl.when(li == pl.num_programs(1) - 1)
    def _finalize():
        out_ref[...] = acc_ref[...]


def _encoder_maxpool(x, w_t, *, pos_tile, batch_tile):
    """max over positions of (x[b,:,l]^T @ W) for x in native (B, D, L) layout.

    Returns the raw (pre-bias, pre-ReLU) pooled features, shape (B, H_pad) f32.
    """
    B, D, L = x.shape
    H_pad = w_t.shape[0]

    # Batch tile: a divisor of B (no padding copy), capped at batch_tile and at B//2
    # so the parallel grid axis has >= 2 iterations (v7x has 2 TensorCores).
    tb_cap = min(batch_tile, B // 2) if B >= 2 else 1
    tb_cap = max(tb_cap, 1)
    TB = max(d for d in range(1, tb_cap + 1) if B % d == 0)
    n_bt = B // TB

    # Position (lane) tile + in-tile chunking.  (H_pad, m_chunk) f32 stays <= ~128 KiB.
    m_chunk = 256 if H_pad <= 128 else 128
    if L <= max(pos_tile, m_chunk):
        TL, n_lt = L, 1                       # single full-extent tile (any length is legal)
    else:
        TL = max(m_chunk, (pos_tile // m_chunk) * m_chunk)
        n_lt = pl.cdiv(L, TL)
    need_mask = (n_lt * TL) != L              # ragged last tile handled in-kernel

    kernel = functools.partial(
        _encoder_maxpool_kernel,
        valid_len=L, tile_len=TL, m_chunk=m_chunk, need_mask=need_mask)

    # VMEM budget from the actual blocks (double-buffered activations + resident weight
    # + out/acc).  Kept modest so the same config also fits v7x's 64 MiB VMEM.
    need = (2 * TB * D * TL * x.dtype.itemsize          # activation block, double buffered
            + 2 * H_pad * D * 2                          # resident bf16 weight
            + 3 * TB * H_pad * 4                         # out block (x2) + acc scratch
            + (1 << 20))
    vmem_limit = int(min(max(2 * need, 32 << 20), 96 << 20))

    out = pl.pallas_call(
        kernel,
        out_shape=jax.ShapeDtypeStruct((n_bt, H_pad, TB), jnp.float32),
        grid=(n_bt, n_lt),
        in_specs=[
            pl.BlockSpec((TB, D, TL), lambda bi, li: (bi, 0, li)),   # streaming activations
            pl.BlockSpec((H_pad, D), lambda bi, li: (0, 0)),         # weight, VMEM resident
        ],
        out_specs=pl.BlockSpec((None, H_pad, TB), lambda bi, li: (bi, 0, 0)),
        scratch_shapes=[pltpu.VMEM((H_pad, TB), jnp.float32)],
        compiler_params=pltpu.CompilerParams(
            dimension_semantics=("parallel", "arbitrary"),
            vmem_limit_bytes=vmem_limit),
    )(x, w_t)

    # (n_bt, H_pad, TB) -> (B, H_pad); tiny layout op on the pooled features only.
    return jnp.transpose(out, (0, 2, 1)).reshape(B, H_pad)


def concat_predictor_encoder(pre_embed, post_embed, w_enc, b_enc, w_pred, b_pred,
                             *, pos_tile=1024, batch_tile=8):
    """Fused encoder + global-max-pool in Pallas; bias/ReLU/predictor on (B,H) in XLA."""
    B, D, _ = pre_embed.shape
    Bq, Dq, _ = post_embed.shape
    assert B == Bq and D == Dq
    H = w_enc.shape[1]
    H_pad = _round_up(H, 128)

    # Pre-transpose + lane-pad the (tiny) encoder weight once in XLA.
    w_t = jnp.zeros((H_pad, D), jnp.bfloat16).at[:H, :].set(
        jnp.swapaxes(w_enc, 0, 1).astype(jnp.bfloat16))

    # max over cat(pre, post) positions == max(max over pre, max over post).
    p_pre = _encoder_maxpool(pre_embed, w_t, pos_tile=pos_tile, batch_tile=batch_tile)
    p_post = _encoder_maxpool(post_embed, w_t, pos_tile=pos_tile, batch_tile=batch_tile)
    pooled = jnp.maximum(p_pre, p_post)[:, :H]                         # (B, H) f32

    # Bias + ReLU hoisted past the pool (exact: bias constant over L, ReLU monotone).
    feat = jnp.maximum(pooled + b_enc.astype(jnp.float32), 0.0)
    # Predictor GEMM is tiny / lane-sparse -> stays in XLA.
    return feat @ w_pred.astype(jnp.float32) + b_pred.astype(jnp.float32)


def reference_forward(pre_embed, post_embed, w_enc, b_enc, w_pred, b_pred,
                      compute_dtype=jnp.float32):
    """Plain-JAX transliteration of the PyTorch module (for verification)."""
    x = jnp.concatenate([pre_embed, post_embed], axis=-1)    # (B, D, L)
    x = jnp.swapaxes(x, 1, 2)                                # (B, L, D)
    h = jnp.dot(x.astype(compute_dtype), w_enc.astype(compute_dtype),
                preferred_element_type=jnp.float32)
    h = jnp.maximum(h + b_enc, 0.0)                          # encoder (Linear + ReLU)
    pooled = jnp.max(h, axis=1)                              # global max pool
    return pooled @ w_pred + b_pred                          # predictor


if __name__ == "__main__":
    key = jax.random.PRNGKey(0)
    ks = jax.random.split(key, 6)

    # ---------------- test 1: small shapes, single position tile per call --------------
    B, D, Lp, Lq, H, C = 12, 32, 48, 32, 64, 5
    pre = jax.random.normal(ks[0], (B, D, Lp), dtype=jnp.float32)
    post = jax.random.normal(ks[1], (B, D, Lq), dtype=jnp.float32)
    w_enc = jax.random.normal(ks[2], (D, H), dtype=jnp.float32) * (1.0 / jnp.sqrt(D))
    b_enc = jax.random.normal(ks[3], (H,), dtype=jnp.float32) * 0.01
    w_pred = jax.random.normal(ks[4], (H, C), dtype=jnp.float32) * (1.0 / jnp.sqrt(H))
    b_pred = jax.random.normal(ks[5], (C,), dtype=jnp.float32) * 0.01

    fwd = jax.jit(concat_predictor_encoder)
    out = jax.block_until_ready(fwd(pre, post, w_enc, b_enc, w_pred, b_pred))
    assert out.shape == (B, C)
    assert bool(jnp.all(jnp.isfinite(out)))

    ref_bf16 = reference_forward(pre, post, w_enc, b_enc, w_pred, b_pred,
                                 compute_dtype=jnp.bfloat16)     # matched-precision
    ref_f32 = reference_forward(pre, post, w_enc, b_enc, w_pred, b_pred,
                                compute_dtype=jnp.float32)       # true f32 module
    assert bool(jnp.allclose(out, ref_bf16, atol=2e-3, rtol=2e-3)), (out, ref_bf16)
    assert bool(jnp.allclose(out, ref_f32, atol=3e-2, rtol=3e-2)), (out, ref_f32)

    # ---------------- test 2: multi position-tile / multi-chunk / multi batch-tile -----
    B2, Lp2, Lq2 = 4, 1024, 512
    pre2 = jax.random.normal(ks[0], (B2, D, Lp2), dtype=jnp.float32)
    post2 = jax.random.normal(ks[1], (B2, D, Lq2), dtype=jnp.float32)
    fwd2 = jax.jit(functools.partial(concat_predictor_encoder,
                                     pos_tile=512, batch_tile=2))
    out2 = jax.block_until_ready(fwd2(pre2, post2, w_enc, b_enc, w_pred, b_pred))
    ref2 = reference_forward(pre2, post2, w_enc, b_enc, w_pred, b_pred,
                             compute_dtype=jnp.bfloat16)
    assert out2.shape == (B2, C)
    assert bool(jnp.all(jnp.isfinite(out2)))
    assert bool(jnp.allclose(out2, ref2, atol=2e-3, rtol=2e-3)), (out2, ref2)

    print("KERNEL_OK")
</pallas_src>

<mosaic_0001>
module attributes {stable_mosaic.version = 11 : i64} {
  func.func @_encoder_maxpool_kernel(%arg0: i32, %arg1: i32, %arg2: memref<6x32x48xf32, #tpu.memory_space<vmem>>, %arg3: memref<128x32xbf16, #tpu.memory_space<vmem>>, %arg4: memref<1x128x6xf32, #tpu.memory_space<vmem>>, %arg5: memref<128x6xf32, #tpu.memory_space<vmem>>) attributes {dimension_semantics = [#tpu.dimension_semantics<parallel>, #tpu.dimension_semantics<arbitrary>], iteration_bounds = array<i64: 2, 1>, scalar_prefetch = 0 : i64, scratch_operands = 1 : i64, tpu.core_type = #tpu.core_type<tc>, window_params = [{transform_indices = @transform_0, window_bounds = array<i64: 6, 32, 48>}, {pipeline_mode = #tpu.pipeline_mode<synchronous>, transform_indices = @transform_1, window_bounds = array<i64: 128, 32>}, {transform_indices = @transform_2, window_bounds = array<i64: 1, 128, 6>}]} {
    %c0_i32 = arith.constant 0 : i32
    %0 = arith.cmpi eq, %arg1, %c0_i32 : i32
    %1 = arith.extui %0 : i1 to i32
    %c0_i32_0 = arith.constant 0 : i32
    %2 = arith.cmpi ne, %1, %c0_i32_0 : i32
    scf.if %2 {
      %cst_38 = arith.constant 0xFF800000 : f32
      %59 = vector.broadcast %cst_38 : f32 to vector<128x6xf32>
      %c0_39 = arith.constant 0 : index
      %c0_40 = arith.constant 0 : index
      %60 = vector.load %arg5[%c0_39, %c0_40] : memref<128x6xf32, #tpu.memory_space<vmem>>, vector<128x6xf32>
      tpu.vector_store %arg5[%c0_39, %c0_40], %59 {strides = array<i32>} : memref<128x6xf32, #tpu.memory_space<vmem>>, vector<128x6xf32>,
    } else {
    }
    %c0 = arith.constant 0 : index
    %c0_1 = arith.constant 0 : index
    %3 = vector.load %arg3[%c0, %c0_1] : memref<128x32xbf16, #tpu.memory_space<vmem>>, vector<128x32xbf16>
    %cst = arith.constant 0xFF800000 : f32
    %4 = vector.broadcast %cst : f32 to vector<128x1xf32>
    %c0_2 = arith.constant 0 : index
    %c0_3 = arith.constant 0 : index
    %c0_4 = arith.constant 0 : index
    %5 = vector.load %arg2[%c0_2, %c0_3, %c0_4] : memref<6x32x48xf32, #tpu.memory_space<vmem>>, vector<1x32x48xf32>
    %6 = vector.shape_cast %5 : vector<1x32x48xf32> to vector<32x48xf32>
    %7 = arith.truncf %6 : vector<32x48xf32> to vector<32x48xbf16>
    %cst_5 = arith.constant dense<0.000000e+00> : vector<128x48xf32>
    %8 = tpu.matmul %3, %7, %cst_5 {dimension_numbers = #tpu.dot_dimension_numbers<[1], [0], [0], [1], [0, 0, 1, 1], [], []>} : vector<128x32xbf16>, vector<32x48xbf16>, vector<128x48xf32> -> vector<128x48xf32>
    %cst_6 = arith.constant dense<0xFF800000> : vector<128xf32>
    %9 = vector.multi_reduction <maximumf>, %8, %cst_6 [1] : vector<128x48xf32> to vector<128xf32>
    %10 = vector.shape_cast %9 : vector<128xf32> to vector<128x1xf32>
    %11 = arith.maximumf %4, %10 : vector<128x1xf32>
    %cst_7 = arith.constant 0xFF800000 : f32
    %12 = vector.broadcast %cst_7 : f32 to vector<128x1xf32>
    %c1 = arith.constant 1 : index
    %c0_8 = arith.constant 0 : index
    %c0_9 = arith.constant 0 : index
    %13 = vector.load %arg2[%c1, %c0_8, %c0_9] : memref<6x32x48xf32, #tpu.memory_space<vmem>>, vector<1x32x48xf32>
    %14 = vector.shape_cast %13 : vector<1x32x48xf32> to vector<32x48xf32>
    %15 = arith.truncf %14 : vector<32x48xf32> to vector<32x48xbf16>
    %cst_10 = arith.constant dense<0.000000e+00> : vector<128x48xf32>
    %16 = tpu.matmul %3, %15, %cst_10 {dimension_numbers = #tpu.dot_dimension_numbers<[1], [0], [0], [1], [0, 0, 1, 1], [], []>} : vector<128x32xbf16>, vector<32x48xbf16>, vector<128x48xf32> -> vector<128x48xf32>
    %cst_11 = arith.constant dense<0xFF800000> : vector<128xf32>
    %17 = vector.multi_reduction <maximumf>, %16, %cst_11 [1] : vector<128x48xf32> to vector<128xf32>
    %18 = vector.shape_cast %17 : vector<128xf32> to vector<128x1xf32>
    %19 = arith.maximumf %12, %18 : vector<128x1xf32>
    %cst_12 = arith.constant 0xFF800000 : f32
    %20 = vector.broadcast %cst_12 : f32 to vector<128x1xf32>
    %c2 = arith.constant 2 : index
    %c0_13 = arith.constant 0 : index
    %c0_14 = arith.constant 0 : index
    %21 = vector.load %arg2[%c2, %c0_13, %c0_14] : memref<6x32x48xf32, #tpu.memory_space<vmem>>, vector<1x32x48xf32>
    %22 = vector.shape_cast %21 : vector<1x32x48xf32> to vector<32x48xf32>
    %23 = arith.truncf %22 : vector<32x48xf32> to vector<32x48xbf16>
    %cst_15 = arith.constant dense<0.000000e+00> : vector<128x48xf32>
    %24 = tpu.matmul %3, %23, %cst_15 {dimension_numbers = #tpu.dot_dimension_numbers<[1], [0], [0], [1], [0, 0, 1, 1], [], []>} : vector<128x32xbf16>, vector<32x48xbf16>, vector<128x48xf32> -> vector<128x48xf32>
    %cst_16 = arith.constant dense<0xFF800000> : vector<128xf32>
    %25 = vector.multi_reduction <maximumf>, %24, %cst_16 [1] : vector<128x48xf32> to vector<128xf32>
    %26 = vector.shape_cast %25 : vector<128xf32> to vector<128x1xf32>
    %27 = arith.maximumf %20, %26 : vector<128x1xf32>
    %cst_17 = arith.constant 0xFF800000 : f32
    %28 = vector.broadcast %cst_17 : f32 to vector<128x1xf32>
    %c3 = arith.constant 3 : index
    %c0_18 = arith.constant 0 : index
    %c0_19 = arith.constant 0 : index
    %29 = vector.load %arg2[%c3, %c0_18, %c0_19] : memref<6x32x48xf32, #tpu.memory_space<vmem>>, vector<1x32x48xf32>
    %30 = vector.shape_cast %29 : vector<1x32x48xf32> to vector<32x48xf32>
    %31 = arith.truncf %30 : vector<32x48xf32> to vector<32x48xbf16>
    %cst_20 = arith.constant dense<0.000000e+00> : vector<128x48xf32>
    %32 = tpu.matmul %3, %31, %cst_20 {dimension_numbers = #tpu.dot_dimension_numbers<[1], [0], [0], [1], [0, 0, 1, 1], [], []>} : vector<128x32xbf16>, vector<32x48xbf16>, vector<128x48xf32> -> vector<128x48xf32>
    %cst_21 = arith.constant dense<0xFF800000> : vector<128xf32>
    %33 = vector.multi_reduction <maximumf>, %32, %cst_21 [1] : vector<128x48xf32> to vector<128xf32>
    %34 = vector.shape_cast %33 : vector<128xf32> to vector<128x1xf32>
    %35 = arith.maximumf %28, %34 : vector<128x1xf32>
    %cst_22 = arith.constant 0xFF800000 : f32
    %36 = vector.broadcast %cst_22 : f32 to vector<128x1xf32>
    %c4 = arith.constant 4 : index
    %c0_23 = arith.constant 0 : index
    %c0_24 = arith.constant 0 : index
    %37 = vector.load %arg2[%c4, %c0_23, %c0_24] : memref<6x32x48xf32, #tpu.memory_space<vmem>>, vector<1x32x48xf32>
    %38 = vector.shape_cast %37 : vector<1x32x48xf32> to vector<32x48xf32>
    %39 = arith.truncf %38 : vector<32x48xf32> to vector<32x48xbf16>
    %cst_25 = arith.constant dense<0.000000e+00> : vector<128x48xf32>
    %40 = tpu.matmul %3, %39, %cst_25 {dimension_numbers = #tpu.dot_dimension_numbers<[1], [0], [0], [1], [0, 0, 1, 1], [], []>} : vector<128x32xbf16>, vector<32x48xbf16>, vector<128x48xf32> -> vector<128x48xf32>
    %cst_26 = arith.constant dense<0xFF800000> : vector<128xf32>
    %41 = vector.multi_reduction <maximumf>, %40, %cst_26 [1] : vector<128x48xf32> to vector<128xf32>
    %42 = vector.shape_cast %41 : vector<128xf32> to vector<128x1xf32>
    %43 = arith.maximumf %36, %42 : vector<128x1xf32>
    %cst_27 = arith.constant 0xFF800000 : f32
    %44 = vector.broadcast %cst_27 : f32 to vector<128x1xf32>
    %c5 = arith.constant 5 : index
    %c0_28 = arith.constant 0 : index
    %c0_29 = arith.constant 0 : index
    %45 = vector.load %arg2[%c5, %c0_28, %c0_29] : memref<6x32x48xf32, #tpu.memory_space<vmem>>, vector<1x32x48xf32>
    %46 = vector.shape_cast %45 : vector<1x32x48xf32> to vector<32x48xf32>
    %47 = arith.truncf %46 : vector<32x48xf32> to vector<32x48xbf16>
    %cst_30 = arith.constant dense<0.000000e+00> : vector<128x48xf32>
    %48 = tpu.matmul %3, %47, %cst_30 {dimension_numbers = #tpu.dot_dimension_numbers<[1], [0], [0], [1], [0, 0, 1, 1], [], []>} : vector<128x32xbf16>, vector<32x48xbf16>, vector<128x48xf32> -> vector<128x48xf32>
    %cst_31 = arith.constant dense<0xFF800000> : vector<128xf32>
    %49 = vector.multi_reduction <maximumf>, %48, %cst_31 [1] : vector<128x48xf32> to vector<128xf32>
    %50 = vector.shape_cast %49 : vector<128xf32> to vector<128x1xf32>
    %51 = arith.maximumf %44, %50 : vector<128x1xf32>
    %52 = tpu.concatenate %11, %19, %27, %35, %43, %51 in 1 : vector<128x1xf32>, vector<128x1xf32>, vector<128x1xf32>, vector<128x1xf32>, vector<128x1xf32>, vector<128x1xf32> -> vector<128x6xf32>
    %c0_32 = arith.constant 0 : index
    %c0_33 = arith.constant 0 : index
    %53 = vector.load %arg5[%c0_32, %c0_33] : memref<128x6xf32, #tpu.memory_space<vmem>>, vector<128x6xf32>
    %54 = arith.maximumf %53, %52 : vector<128x6xf32>
    %c0_34 = arith.constant 0 : index
    %c0_35 = arith.constant 0 : index
    %55 = vector.load %arg5[%c0_34, %c0_35] : memref<128x6xf32, #tpu.memory_space<vmem>>, vector<128x6xf32>
    tpu.vector_store %arg5[%c0_34, %c0_35], %54 {strides = array<i32>} : memref<128x6xf32, #tpu.memory_space<vmem>>, vector<128x6xf32>,
    %c0_i32_36 = arith.constant 0 : i32
    %56 = arith.cmpi eq, %arg1, %c0_i32_36 : i32
    %57 = arith.extui %56 : i1 to i32
    %c0_i32_37 = arith.constant 0 : i32
    %58 = arith.cmpi ne, %57, %c0_i32_37 : i32
    scf.if %58 {
      %c0_38 = arith.constant 0 : index
      %c0_39 = arith.constant 0 : index
      %59 = vector.load %arg5[%c0_38, %c0_39] : memref<128x6xf32, #tpu.memory_space<vmem>>, vector<128x6xf32>
      %c0_40 = arith.constant 0 : index
      %c0_41 = arith.constant 0 : index
      %c0_42 = arith.constant 0 : index
      %60 = vector.load %arg4[%c0_40, %c0_41, %c0_42] : memref<1x128x6xf32, #tpu.memory_space<vmem>>, vector<1x128x6xf32>
      %61 = vector.shape_cast %60 : vector<1x128x6xf32> to vector<128x6xf32>
      %62 = vector.shape_cast %59 : vector<128x6xf32> to vector<1x128x6xf32>
      tpu.vector_store %arg4[%c0_40, %c0_41, %c0_42], %62 {strides = array<i32>} : memref<1x128x6xf32, #tpu.memory_space<vmem>>, vector<1x128x6xf32>,
    } else {
    }
    return
  }
  func.func @transform_0(%arg0: i32, %arg1: i32) -> (i32, i32, i32) {
    %c0_i32 = arith.constant 0 : i32
    %c0_i32_0 = arith.constant 0 : i32
    return %arg0, %c0_i32, %arg1 : i32, i32, i32
  }
  func.func @transform_1(%arg0: i32, %arg1: i32) -> (i32, i32) {
    %c0_i32 = arith.constant 0 : i32
    %c0_i32_0 = arith.constant 0 : i32
    %c0_i32_1 = arith.constant 0 : i32
    return %c0_i32, %c0_i32_0 : i32, i32
  }
  func.func @transform_2(%arg0: i32, %arg1: i32) -> (i32, i32, i32) {
    %c0_i32 = arith.constant 0 : i32
    %c0_i32_0 = arith.constant 0 : i32
    %c0_i32_1 = arith.constant 0 : i32
    return %arg0, %c0_i32, %c0_i32_0 : i32, i32, i32
  }
}

module attributes {stable_mosaic.version = 11 : i64} {
  func.func @_encoder_maxpool_kernel(%arg0: i32, %arg1: i32, %arg2: memref<6x32x32xf32, #tpu.memory_space<vmem>>, %arg3: memref<128x32xbf16, #tpu.memory_space<vmem>>, %arg4: memref<1x128x6xf32, #tpu.memory_space<vmem>>, %arg5: memref<128x6xf32, #tpu.memory_space<vmem>>) attributes {dimension_semantics = [#tpu.dimension_semantics<parallel>, #tpu.dimension_semantics<arbitrary>], iteration_bounds = array<i64: 2, 1>, scalar_prefetch = 0 : i64, scratch_operands = 1 : i64, tpu.core_type = #tpu.core_type<tc>, window_params = [{transform_indices = @transform_0, window_bounds = array<i64: 6, 32, 32>}, {pipeline_mode = #tpu.pipeline_mode<synchronous>, transform_indices = @transform_1, window_bounds = array<i64: 128, 32>}, {transform_indices = @transform_2, window_bounds = array<i64: 1, 128, 6>}]} {
    %c0_i32 = arith.constant 0 : i32
    %0 = arith.cmpi eq, %arg1, %c0_i32 : i32
    %1 = arith.extui %0 : i1 to i32
    %c0_i32_0 = arith.constant 0 : i32
    %2 = arith.cmpi ne, %1, %c0_i32_0 : i32
    scf.if %2 {
      %cst_38 = arith.constant 0xFF800000 : f32
      %59 = vector.broadcast %cst_38 : f32 to vector<128x6xf32>
      %c0_39 = arith.constant 0 : index
      %c0_40 = arith.constant 0 : index
      %60 = vector.load %arg5[%c0_39, %c0_40] : memref<128x6xf32, #tpu.memory_space<vmem>>, vector<128x6xf32>
      tpu.vector_store %arg5[%c0_39, %c0_40], %59 {strides = array<i32>} : memref<128x6xf32, #tpu.memory_space<vmem>>, vector<128x6xf32>,
    } else {
    }
    %c0 = arith.constant 0 : index
    %c0_1 = arith.constant 0 : index
    %3 = vector.load %arg3[%c0, %c0_1] : memref<128x32xbf16, #tpu.memory_space<vmem>>, vector<128x32xbf16>
    %cst = arith.constant 0xFF800000 : f32
    %4 = vector.broadcast %cst : f32 to vector<128x1xf32>
    %c0_2 = arith.constant 0 : index
    %c0_3 = arith.constant 0 : index
    %c0_4 = arith.constant 0 : index
    %5 = vector.load %arg2[%c0_2, %c0_3, %c0_4] : memref<6x32x32xf32, #tpu.memory_space<vmem>>, vector<1x32x32xf32>
    %6 = vector.shape_cast %5 : vector<1x32x32xf32> to vector<32x32xf32>
    %7 = arith.truncf %6 : vector<32x32xf32> to vector<32x32xbf16>
    %cst_5 = arith.constant dense<0.000000e+00> : vector<128x32xf32>
    %8 = tpu.matmul %3, %7, %cst_5 {dimension_numbers = #tpu.dot_dimension_numbers<[1], [0], [0], [1], [0, 0, 1, 1], [], []>} : vector<128x32xbf16>, vector<32x32xbf16>, vector<128x32xf32> -> vector<128x32xf32>
    %cst_6 = arith.constant dense<0xFF800000> : vector<128xf32>
    %9 = vector.multi_reduction <maximumf>, %8, %cst_6 [1] : vector<128x32xf32> to vector<128xf32>
    %10 = vector.shape_cast %9 : vector<128xf32> to vector<128x1xf32>
    %11 = arith.maximumf %4, %10 : vector<128x1xf32>
    %cst_7 = arith.constant 0xFF800000 : f32
    %12 = vector.broadcast %cst_7 : f32 to vector<128x1xf32>
    %c1 = arith.constant 1 : index
    %c0_8 = arith.constant 0 : index
    %c0_9 = arith.constant 0 : index
    %13 = vector.load %arg2[%c1, %c0_8, %c0_9] : memref<6x32x32xf32, #tpu.memory_space<vmem>>, vector<1x32x32xf32>
    %14 = vector.shape_cast %13 : vector<1x32x32xf32> to vector<32x32xf32>
    %15 = arith.truncf %14 : vector<32x32xf32> to vector<32x32xbf16>
    %cst_10 = arith.constant dense<0.000000e+00> : vector<128x32xf32>
    %16 = tpu.matmul %3, %15, %cst_10 {dimension_numbers = #tpu.dot_dimension_numbers<[1], [0], [0], [1], [0, 0, 1, 1], [], []>} : vector<128x32xbf16>, vector<32x32xbf16>, vector<128x32xf32> -> vector<128x32xf32>
    %cst_11 = arith.constant dense<0xFF800000> : vector<128xf32>
    %17 = vector.multi_reduction <maximumf>, %16, %cst_11 [1] : vector<128x32xf32> to vector<128xf32>
    %18 = vector.shape_cast %17 : vector<128xf32> to vector<128x1xf32>
    %19 = arith.maximumf %12, %18 : vector<128x1xf32>
    %cst_12 = arith.constant 0xFF800000 : f32
    %20 = vector.broadcast %cst_12 : f32 to vector<128x1xf32>
    %c2 = arith.constant 2 : index
    %c0_13 = arith.constant 0 : index
    %c0_14 = arith.constant 0 : index
    %21 = vector.load %arg2[%c2, %c0_13, %c0_14] : memref<6x32x32xf32, #tpu.memory_space<vmem>>, vector<1x32x32xf32>
    %22 = vector.shape_cast %21 : vector<1x32x32xf32> to vector<32x32xf32>
    %23 = arith.truncf %22 : vector<32x32xf32> to vector<32x32xbf16>
    %cst_15 = arith.constant dense<0.000000e+00> : vector<128x32xf32>
    %24 = tpu.matmul %3, %23, %cst_15 {dimension_numbers = #tpu.dot_dimension_numbers<[1], [0], [0], [1], [0, 0, 1, 1], [], []>} : vector<128x32xbf16>, vector<32x32xbf16>, vector<128x32xf32> -> vector<128x32xf32>
    %cst_16 = arith.constant dense<0xFF800000> : vector<128xf32>
    %25 = vector.multi_reduction <maximumf>, %24, %cst_16 [1] : vector<128x32xf32> to vector<128xf32>
    %26 = vector.shape_cast %25 : vector<128xf32> to vector<128x1xf32>
    %27 = arith.maximumf %20, %26 : vector<128x1xf32>
    %cst_17 = arith.constant 0xFF800000 : f32
    %28 = vector.broadcast %cst_17 : f32 to vector<128x1xf32>
    %c3 = arith.constant 3 : index
    %c0_18 = arith.constant 0 : index
    %c0_19 = arith.constant 0 : index
    %29 = vector.load %arg2[%c3, %c0_18, %c0_19] : memref<6x32x32xf32, #tpu.memory_space<vmem>>, vector<1x32x32xf32>
    %30 = vector.shape_cast %29 : vector<1x32x32xf32> to vector<32x32xf32>
    %31 = arith.truncf %30 : vector<32x32xf32> to vector<32x32xbf16>
    %cst_20 = arith.constant dense<0.000000e+00> : vector<128x32xf32>
    %32 = tpu.matmul %3, %31, %cst_20 {dimension_numbers = #tpu.dot_dimension_numbers<[1], [0], [0], [1], [0, 0, 1, 1], [], []>} : vector<128x32xbf16>, vector<32x32xbf16>, vector<128x32xf32> -> vector<128x32xf32>
    %cst_21 = arith.constant dense<0xFF800000> : vector<128xf32>
    %33 = vector.multi_reduction <maximumf>, %32, %cst_21 [1] : vector<128x32xf32> to vector<128xf32>
    %34 = vector.shape_cast %33 : vector<128xf32> to vector<128x1xf32>
    %35 = arith.maximumf %28, %34 : vector<128x1xf32>
    %cst_22 = arith.constant 0xFF800000 : f32
    %36 = vector.broadcast %cst_22 : f32 to vector<128x1xf32>
    %c4 = arith.constant 4 : index
    %c0_23 = arith.constant 0 : index
    %c0_24 = arith.constant 0 : index
    %37 = vector.load %arg2[%c4, %c0_23, %c0_24] : memref<6x32x32xf32, #tpu.memory_space<vmem>>, vector<1x32x32xf32>
    %38 = vector.shape_cast %37 : vector<1x32x32xf32> to vector<32x32xf32>
    %39 = arith.truncf %38 : vector<32x32xf32> to vector<32x32xbf16>
    %cst_25 = arith.constant dense<0.000000e+00> : vector<128x32xf32>
    %40 = tpu.matmul %3, %39, %cst_25 {dimension_numbers = #tpu.dot_dimension_numbers<[1], [0], [0], [1], [0, 0, 1, 1], [], []>} : vector<128x32xbf16>, vector<32x32xbf16>, vector<128x32xf32> -> vector<128x32xf32>
    %cst_26 = arith.constant dense<0xFF800000> : vector<128xf32>
    %41 = vector.multi_reduction <maximumf>, %40, %cst_26 [1] : vector<128x32xf32> to vector<128xf32>
    %42 = vector.shape_cast %41 : vector<128xf32> to vector<128x1xf32>
    %43 = arith.maximumf %36, %42 : vector<128x1xf32>
    %cst_27 = arith.constant 0xFF800000 : f32
    %44 = vector.broadcast %cst_27 : f32 to vector<128x1xf32>
    %c5 = arith.constant 5 : index
    %c0_28 = arith.constant 0 : index
    %c0_29 = arith.constant 0 : index
    %45 = vector.load %arg2[%c5, %c0_28, %c0_29] : memref<6x32x32xf32, #tpu.memory_space<vmem>>, vector<1x32x32xf32>
    %46 = vector.shape_cast %45 : vector<1x32x32xf32> to vector<32x32xf32>
    %47 = arith.truncf %46 : vector<32x32xf32> to vector<32x32xbf16>
    %cst_30 = arith.constant dense<0.000000e+00> : vector<128x32xf32>
    %48 = tpu.matmul %3, %47, %cst_30 {dimension_numbers = #tpu.dot_dimension_numbers<[1], [0], [0], [1], [0, 0, 1, 1], [], []>} : vector<128x32xbf16>, vector<32x32xbf16>, vector<128x32xf32> -> vector<128x32xf32>
    %cst_31 = arith.constant dense<0xFF800000> : vector<128xf32>
    %49 = vector.multi_reduction <maximumf>, %48, %cst_31 [1] : vector<128x32xf32> to vector<128xf32>
    %50 = vector.shape_cast %49 : vector<128xf32> to vector<128x1xf32>
    %51 = arith.maximumf %44, %50 : vector<128x1xf32>
    %52 = tpu.concatenate %11, %19, %27, %35, %43, %51 in 1 : vector<128x1xf32>, vector<128x1xf32>, vector<128x1xf32>, vector<128x1xf32>, vector<128x1xf32>, vector<128x1xf32> -> vector<128x6xf32>
    %c0_32 = arith.constant 0 : index
    %c0_33 = arith.constant 0 : index
    %53 = vector.load %arg5[%c0_32, %c0_33] : memref<128x6xf32, #tpu.memory_space<vmem>>, vector<128x6xf32>
    %54 = arith.maximumf %53, %52 : vector<128x6xf32>
    %c0_34 = arith.constant 0 : index
    %c0_35 = arith.constant 0 : index
    %55 = vector.load %arg5[%c0_34, %c0_35] : memref<128x6xf32, #tpu.memory_space<vmem>>, vector<128x6xf32>
    tpu.vector_store %arg5[%c0_34, %c0_35], %54 {strides = array<i32>} : memref<128x6xf32, #tpu.memory_space<vmem>>, vector<128x6xf32>,
    %c0_i32_36 = arith.constant 0 : i32
    %56 = arith.cmpi eq, %arg1, %c0_i32_36 : i32
    %57 = arith.extui %56 : i1 to i32
    %c0_i32_37 = arith.constant 0 : i32
    %58 = arith.cmpi ne, %57, %c0_i32_37 : i32
    scf.if %58 {
      %c0_38 = arith.constant 0 : index
      %c0_39 = arith.constant 0 : index
      %59 = vector.load %arg5[%c0_38, %c0_39] : memref<128x6xf32, #tpu.memory_space<vmem>>, vector<128x6xf32>
      %c0_40 = arith.constant 0 : index
      %c0_41 = arith.constant 0 : index
      %c0_42 = arith.constant 0 : index
      %60 = vector.load %arg4[%c0_40, %c0_41, %c0_42] : memref<1x128x6xf32, #tpu.memory_space<vmem>>, vector<1x128x6xf32>
      %61 = vector.shape_cast %60 : vector<1x128x6xf32> to vector<128x6xf32>
      %62 = vector.shape_cast %59 : vector<128x6xf32> to vector<1x128x6xf32>
      tpu.vector_store %arg4[%c0_40, %c0_41, %c0_42], %62 {strides = array<i32>} : memref<1x128x6xf32, #tpu.memory_space<vmem>>, vector<1x128x6xf32>,
    } else {
    }
    return
  }
  func.func @transform_0(%arg0: i32, %arg1: i32) -> (i32, i32, i32) {
    %c0_i32 = arith.constant 0 : i32
    %c0_i32_0 = arith.constant 0 : i32
    return %arg0, %c0_i32, %arg1 : i32, i32, i32
  }
  func.func @transform_1(%arg0: i32, %arg1: i32) -> (i32, i32) {
    %c0_i32 = arith.constant 0 : i32
    %c0_i32_0 = arith.constant 0 : i32
    %c0_i32_1 = arith.constant 0 : i32
    return %c0_i32, %c0_i32_0 : i32, i32
  }
  func.func @transform_2(%arg0: i32, %arg1: i32) -> (i32, i32, i32) {
    %c0_i32 = arith.constant 0 : i32
    %c0_i32_0 = arith.constant 0 : i32
    %c0_i32_1 = arith.constant 0 : i32
    return %arg0, %c0_i32, %c0_i32_0 : i32, i32, i32
  }
}

</mosaic_0001>

<llo_original>
// kernel: concat_predictor_encoder.3
$region0: #{concat_predictor_encoder.3}
  #allocation0 [shape = 'u32[]', space=smem, size = 0x4, offset = 0x4, fixed_abs, tag = 'smem constant byte address 0x4 - core index']
  #allocation1 [shape = 'u32[144,128]{1,0:T(1,128)}', space=vmem, size = 0x12000, scoped, tag = 'internal scratch']
  #allocation2 [shape = 'f32[128,6]{1,0:T(8,128)}', space=vmem, size = 0x10000, scoped, tag = 'scratch operand']
  %s0 = inlined_call_operand.vmem [shape: f32[12,32,32], index: 0, kind: input, shape index: {}]
  %s1 = inlined_call_operand.vmem [shape: bf16[128,32], index: 1, kind: input, shape index: {}]
  %s2 = inlined_call_operand.vmem [shape: f32[2,128,6], index: 2, kind: output, shape index: {}]
  %s3 = sld [smem:[#allocation0]]
  $region49: #{concat_predictor_encoder.3} parent=0
    _
  %s5 = ssub.s32 1, %s3
  %s6 = scalar_select 0, %s5, %s3
  loop: start=0, step=1, limit=4
  $region2: #{concat_predictor_encoder.3} parent=0 // loop_pre_header
    _
  $region3: #{concat_predictor_encoder.3} parent=0 // loop_header
    %s8 = sphi 0, %s12
    %p9 = scmp.ge.s32.totalorder %s8, 4
    %s15 = sphi 0, %s27
    %s16 = sphi 0, %s23
    %s17 = sphi 0, %s15
    %s18 = sphi 0, %s16
    %s19 = sphi 0, %s17
    %s20 = sphi 0, %s18
    %s32 = sphi 0, %s34
    %s35 = sphi 0, %s32
    %s36 = sphi 0, %s35
    %s52 = sphi 0, %s36
    %s56 = sphi 0, %s56
    %s58 = sphi 0, %s56
    %s59 = sphi 0, %s58
    %s73 = sphi 0, %s59
    %s79 = sphi 0, %s81
    %s82 = sphi 0, %s79
    %s83 = sphi 0, %s82
    %s99 = sphi 0, %s83
  $region4: #{concat_predictor_encoder.3} parent=0 // loop_header_branch
    %11 = sbr.rel (%p9) target = $region8
  $region5: #{concat_predictor_encoder.3} parent=0 // loop_body
    %s13 = ssub.s32 %s8, 1
    %s14 = ssub.s32 %s8, 2
    %s21 = sadd.s32 1, %s16
    %p22 = scmp.ge.s32.totalorder %s21, 1
    %s23 = scalar_select %p22, 0, %s21
    %s24 = sadd.s32 1, %s15
    %s25 = scalar_select %p22, %s24, %s15
    %p26 = scmp.ge.s32.totalorder %s25, 2
    %s27 = scalar_select %p26, 0, %s25
    %s28 = ssub.s32 %s15, %s27
    %s29 = ssub.s32 %s16, %s23
    %s30 = sor.u32 %s28, %s29
    %p31 = scmp.eq.s32.totalorder %s30, 0
    %s33 = sadd.s32 %s32, 1
    %s34 = scalar_select %p31, %s32, %s33
    %p37 = pneg %p31
    %p38 = scmp.eq.s32.totalorder %s8, 1
    %p39 = por %p37, %p38
    %p40 = scmp.ne.s32.totalorder %s32, %s35
    %p41 = scmp.eq.s32.totalorder %s8, 0
    %p42 = por %p40, %p41
    %p43 = scmp.ne.s32.totalorder %s32, %s35
    %p44 = scmp.eq.s32.totalorder %s13, 1
    %p45 = por %p43, %p44
    %p46 = scmp.ne.s32.totalorder %s35, %s36
    %p47 = scmp.eq.s32.totalorder %s13, 0
    %p48 = por %p46, %p47
    %p49 = scmp.ne.s32.totalorder %s35, %s36
    %p50 = scmp.eq.s32.totalorder %s14, 1
    %p51 = por %p49, %p50
    %p53 = scmp.ne.s32.totalorder %s36, %s52
    %p54 = scmp.eq.s32.totalorder %s14, 0
    %p55 = por %p53, %p54
    %s57 = sadd.s32 %s56, 1
    %p60 = scmp.eq.s32.totalorder %s8, 1
    %p61 = scmp.ne.s32.totalorder %s56, %s58
    %p62 = scmp.eq.s32.totalorder %s8, 0
    %p63 = por %p61, %p62
    %p64 = scmp.ne.s32.totalorder %s56, %s58
    %p65 = scmp.eq.s32.totalorder %s13, 1
    %p66 = por %p64, %p65
    %p67 = scmp.ne.s32.totalorder %s58, %s59
    %p68 = scmp.eq.s32.totalorder %s13, 0
    %p69 = por %p67, %p68
    %p70 = scmp.ne.s32.totalorder %s58, %s59
    %p71 = scmp.eq.s32.totalorder %s14, 1
    %p72 = por %p70, %p71
    %p74 = scmp.ne.s32.totalorder %s59, %s73
    %p75 = scmp.eq.s32.totalorder %s14, 0
    %p76 = por %p74, %p75
    %s77 = ssub.s32 %s15, %s27
    %p78 = scmp.eq.s32.totalorder %s77, 0
    %s80 = sadd.s32 %s79, 1
    %s81 = scalar_select %p78, %s79, %s80
    %p84 = pneg %p78
    %p85 = scmp.eq.s32.totalorder %s8, 1
    %p86 = por %p84, %p85
    %p87 = scmp.ne.s32.totalorder %s79, %s82
    %p88 = scmp.eq.s32.totalorder %s8, 0
    %p89 = por %p87, %p88
    %p90 = scmp.ne.s32.totalorder %s79, %s82
    %p91 = scmp.eq.s32.totalorder %s13, 1
    %p92 = por %p90, %p91
    %p93 = scmp.ne.s32.totalorder %s82, %s83
    %p94 = scmp.eq.s32.totalorder %s13, 0
    %p95 = por %p93, %p94
    %p96 = scmp.ne.s32.totalorder %s82, %s83
    %p97 = scmp.eq.s32.totalorder %s14, 1
    %p98 = por %p96, %p97
    %p100 = scmp.ne.s32.totalorder %s83, %s99
    %p101 = scmp.eq.s32.totalorder %s14, 0
    %p102 = por %p100, %p101
    %p103 = scmp.le.s32.totalorder 1, %s8
    %p104 = scmp.lt.s32.totalorder %s8, 3
    %p105 = pnand %p103, %p104
    %p106 = pneg %p105
    // Predicated region
    $region9: #{concat_predictor_encoder.3} parent=5 // pred_check
      _
    $region10: #{concat_predictor_encoder.3} parent=5 // pred_check_branch
      %108 = sbr.rel (%p105) target = $region12
    $region11: #{concat_predictor_encoder.3} parent=5 // pred_region
      %s109 = ssub.s32 %s8, 1
      // Predicated region
      $region13: #{concat_predictor_encoder.3} parent=11 // pred_check
        %p110 = pneg %p69
      $region14: #{concat_predictor_encoder.3} parent=11 // pred_check_branch
        %112 = sbr.rel (%p110) target = $region16
      $region15: #{concat_predictor_encoder.3} parent=11 // pred_region
        _
      $region16: #{concat_predictor_encoder.3} parent=11 // pred_fallthru
        _
    $region12: #{concat_predictor_encoder.3} parent=5 // pred_fallthru
      _
    %p113 = scmp.lt.s32.totalorder %s8, 2
    // Predicated region
    $region17: #{concat_predictor_encoder.3} parent=5 // pred_check
      %p114 = pneg %p113
    $region18: #{concat_predictor_encoder.3} parent=5 // pred_check_branch
      %116 = sbr.rel (%p114) target = $region20
    $region19: #{concat_predictor_encoder.3} parent=5 // pred_region
      // Predicated region
      $region21: #{concat_predictor_encoder.3} parent=19 // pred_check
        %p117 = pneg %p42
      $region22: #{concat_predictor_encoder.3} parent=19 // pred_check_branch
        %119 = sbr.rel (%p117) target = $region24
      $region23: #{concat_predictor_encoder.3} parent=19 // pred_region
        %s120 = smul.u32 6, %s15
        %p121 = scmp.lt.s32.totalorder %s120, 11
        %s122 = scalar_select %p121, %s120, 11
        %p123 = scmp.lt.s32.totalorder %s16, 0
        %s124 = scalar_select %p123, %s16, 0
        %s125 = smul.addr %s122, 4
        %s126 = sadd.s32 %s124, %s125
        %s127 = smul.addr %s126, 8
        %s128 = scalar_lea.vmem %s0, %s127
        %s129 = smul.u32 6, %s15
      $region24: #{concat_predictor_encoder.3} parent=19 // pred_fallthru
        _
    $region20: #{concat_predictor_encoder.3} parent=5 // pred_fallthru
      _
    %p130 = scmp.le.s32.totalorder 1, %s8
    %p131 = scmp.lt.s32.totalorder %s8, 3
    %p132 = pnand %p130, %p131
    %p133 = pneg %p132
    // Predicated region
    $region25: #{concat_predictor_encoder.3} parent=5 // pred_check
      _
    $region26: #{concat_predictor_encoder.3} parent=5 // pred_check_branch
      %135 = sbr.rel (%p132) target = $region28
    $region27: #{concat_predictor_encoder.3} parent=5 // pred_region
      %s136 = ssub.s32 %s8, 1
      %s137 = smul.u32 6, %s17
      %p138 = scmp.lt.s32.totalorder %s137, 11
      %s139 = scalar_select %p138, %s137, 11
      %p140 = scmp.lt.s32.totalorder %s18, 0
      %s141 = scalar_select %p140, %s18, 0
      %s142 = smul.addr %s139, 4
      %s143 = sadd.s32 %s141, %s142
      %s144 = smul.addr %s143, 8
      %s145 = scalar_lea.vmem %s0, %s144
      %p146 = pneg %p48
      %p147 = pneg %p45
      %p148 = pneg %p69
      %p149 = pneg %p66
      %p150 = pneg %p95
      %p151 = pneg %p92
      %p152 = scmp.lt.s32.totalorder %s17, 1
      %s153 = scalar_select %p152, %s17, 1
      %s154 = smul.addr %s153, 16
      %s155 = smul.addr %s154, 8
      %s156 = scalar_lea.vmem %s2, %s155
      %s157 = smul.u32 6, %s17
      %p158 = scmp.lt.s32.totalorder %s157, 11
      %s159 = scalar_select %p158, %s157, 11
      %p160 = scmp.lt.s32.totalorder %s18, 0
      %s161 = scalar_select %p160, %s18, 0
      %s162 = smul.addr %s159, 4
      %s163 = sadd.s32 %s161, %s162
      %s164 = smul.addr %s163, 8
      %s165 = scalar_lea.vmem %s0, %s164
      %s166 = smul.u32 6, %s17
      %p167 = scmp.lt.s32.totalorder %s17, 1
      %s168 = scalar_select %p167, %s17, 1
      %s169 = smul.addr %s168, 16
      %s170 = smul.addr %s169, 8
      %s171 = scalar_lea.vmem %s2, %s170
      %p173 = scmp.eq.s32.totalorder %s18, 0
      // Predicated region
      $region29: #{concat_predictor_encoder.3} parent=27 // pred_check
        %p174 = pneg %p173
      $region30: #{concat_predictor_encoder.3} parent=27 // pred_check_branch
        %176 = sbr.rel (%p174) target = $region32
      $region31: #{concat_predictor_encoder.3} parent=27 // pred_region
        %vm177 = vcmask 48128
        %178 = vst.msk [vmem:[#allocation2] sm:$0xff] %vm177, -inf
        %179 = vst.msk [vmem:[#allocation2 + $0x8] sm:$0xff] %vm177, -inf
        %180 = vst.msk [vmem:[#allocation2 + $0x10] sm:$0xff] %vm177, -inf
        %181 = vst.msk [vmem:[#allocation2 + $0x18] sm:$0xff] %vm177, -inf
        %182 = vst.msk [vmem:[#allocation2 + $0x20] sm:$0xff] %vm177, -inf
        %183 = vst.msk [vmem:[#allocation2 + $0x28] sm:$0xff] %vm177, -inf
        %184 = vst.msk [vmem:[#allocation2 + $0x30] sm:$0xff] %vm177, -inf
        %185 = vst.msk [vmem:[#allocation2 + $0x38] sm:$0xff] %vm177, -inf
        %186 = vst.msk [vmem:[#allocation2 + $0x40] sm:$0xff] %vm177, -inf
        %187 = vst.msk [vmem:[#allocation2 + $0x48] sm:$0xff] %vm177, -inf
        %188 = vst.msk [vmem:[#allocation2 + $0x50] sm:$0xff] %vm177, -inf
        %189 = vst.msk [vmem:[#allocation2 + $0x58] sm:$0xff] %vm177, -inf
        %190 = vst.msk [vmem:[#allocation2 + $0x60] sm:$0xff] %vm177, -inf
        %191 = vst.msk [vmem:[#allocation2 + $0x68] sm:$0xff] %vm177, -inf
        %192 = vst.msk [vmem:[#allocation2 + $0x70] sm:$0xff] %vm177, -inf
        %193 = vst.msk [vmem:[#allocation2 + $0x78] sm:$0xff] %vm177, -inf
      $region32: #{concat_predictor_encoder.3} parent=27 // pred_fallthru
        _
      %v194 = vld [vmem:[%s1] sm:$0xf]
      %v195 = vld [vmem:[%s1 + $0x4] sm:$0xf]
      %v196 = vld [vmem:[%s1 + $0x8] sm:$0xf]
      %v197 = vld [vmem:[%s1 + $0xc] sm:$0xf]
      %v198 = vld [vmem:[%s1 + $0x10] sm:$0xf]
      %v199 = vld [vmem:[%s1 + $0x14] sm:$0xf]
      %v200 = vld [vmem:[%s1 + $0x18] sm:$0xf]
      %v201 = vld [vmem:[%s1 + $0x1c] sm:$0xf]
      %v202 = vld [vmem:[%s1 + $0x20] sm:$0xf]
      %v203 = vld [vmem:[%s1 + $0x24] sm:$0xf]
      %v204 = vld [vmem:[%s1 + $0x28] sm:$0xf]
      %v205 = vld [vmem:[%s1 + $0x2c] sm:$0xf]
      %v206 = vld [vmem:[%s1 + $0x30] sm:$0xf]
      %v207 = vld [vmem:[%s1 + $0x34] sm:$0xf]
      %v208 = vld [vmem:[%s1 + $0x38] sm:$0xf]
      %v209 = vld [vmem:[%s1 + $0x3c] sm:$0xf]
      %v210 = vld [vmem:[%s165] sm:$0xff]
      %v211 = vld [vmem:[%s165 + $0x8] sm:$0xff]
      %v212 = vld [vmem:[%s165 + $0x10] sm:$0xff]
      %v213 = vld [vmem:[%s165 + $0x18] sm:$0xff]
      %v214 = vpack.c.bf16 %v211, %v210
      %v215 = vpack.c.bf16 %v213, %v212
      %v232 = vunpack.c.l.b16 %v194
      %v233 = vunpack.c.l.b16 %v195
      %v234 = vunpack.c.l.b16 %v196
      %v235 = vunpack.c.l.b16 %v197
      %v236 = vunpack.c.l.b16 %v198
      %v237 = vunpack.c.l.b16 %v199
      %v238 = vunpack.c.l.b16 %v200
      %v239 = vunpack.c.l.b16 %v201
      %v240 = vunpack.c.l.b16 %v202
      %v241 = vunpack.c.l.b16 %v203
      %v242 = vunpack.c.l.b16 %v204
      %v243 = vunpack.c.l.b16 %v205
      %v244 = vunpack.c.l.b16 %v206
      %v245 = vunpack.c.l.b16 %v207
      %v246 = vunpack.c.l.b16 %v208
      %v247 = vunpack.c.l.b16 %v209
      %v248 = vpack.c.b16 %v233, %v232
      %v249 = vpack.c.b16 %v235, %v234
      %v250 = vpack.c.b16 %v237, %v236
      %v251 = vpack.c.b16 %v239, %v238
      %v252 = vpack.c.b16 %v241, %v240
      %v253 = vpack.c.b16 %v243, %v242
      %v254 = vpack.c.b16 %v245, %v244
      %v255 = vpack.c.b16 %v247, %v246
      %vm256 = vcmask 261120
      %v258 = vsel %vm256, %v248, 0
      %v261 = vsel %vm256, %v249, 0
      %v264 = vsel %vm256, %v250, 0
      %v267 = vsel %vm256, %v251, 0
      %v270 = vsel %vm256, %v252, 0
      %v273 = vsel %vm256, %v253, 0
      %v276 = vsel %vm256, %v254, 0
      %v279 = vsel %vm256, %v255, 0
      %281 = vmatprep.subr.bf16.mxu0 0
      %282 = vmatpush1.bf16.msra.mxu0 %v214
      %283 = vmatprep.subr.bf16.mxu0 0
      %284 = vmatpush1.bf16.msra.mxu0 %v215
      %285 = vmatprep.subr.bf16.mxu0 0
      %286 = vmatpush1.bf16.msra.mxu0 0
      %287 = vmatprep.subr.bf16.mxu0 0
      %288 = vmatpush1.bf16.msra.mxu0 0
      %289 = vmatprep.subr.bf16.mxu0 0
      %290 = vmatpush1.bf16.msra.mxu0 0
      %291 = vmatprep.subr.bf16.mxu0 0
      %292 = vmatpush1.bf16.msra.mxu0 0
      %293 = vmatprep.subr.bf16.mxu0 0
      %294 = vmatpush1.bf16.msra.mxu0 0
      %295 = vmatprep.subr.bf16.mxu0 0
      %296 = vmatpush1.bf16.msra.mxu0 0
      %297 = vmatprep.subr.bf16.mxu0 0
      %298 = vmatpush1.bf16.msra.mxu0 0
      %299 = vmatprep.subr.bf16.mxu0 0
      %300 = vmatpush1.bf16.msra.mxu0 0
      %301 = vmatprep.subr.bf16.mxu0 0
      %302 = vmatpush1.bf16.msra.mxu0 0
      %303 = vmatprep.subr.bf16.mxu0 0
      %304 = vmatpush1.bf16.msra.mxu0 0
      %305 = vmatprep.subr.bf16.mxu0 0
      %306 = vmatpush1.bf16.msra.mxu0 0
      %307 = vmatprep.subr.bf16.mxu0 0
      %308 = vmatpush1.bf16.msra.mxu0 0
      %309 = vmatprep.subr.bf16.mxu0 0
      %310 = vmatpush1.bf16.msra.mxu0 0
      %311 = vmatprep.subr.bf16.mxu0 0
      %312 = vmatpush1.bf16.msra.mxu0 0
      %313 = vmatprep.mubr.bf16.mxu0 0
      %314 = vmatmul.mubr.bf16.gmra.mrb[0].mxu0 %v258
      %v315 = vpop.f32.mrb[0].mxu0
      %v316 = vadd.f32 0.0, %v315
      %v317 = vpop.f32.mrb[0].mxu0
      %v318 = vpop.f32.mrb[0].mxu0
      %v319 = vadd.f32 0.0, %v318
      %v320 = vpop.f32.mrb[0].mxu0
      %321 = vmatprep.mubr.bf16.mxu0 0
      %322 = vmatmul.mubr.bf16.gmra.mrb[0].mxu0 %v261
      %v323 = vpop.f32.mrb[0].mxu0
      %v324 = vadd.f32 0.0, %v323
      %v325 = vpop.f32.mrb[0].mxu0
      %v326 = vpop.f32.mrb[0].mxu0
      %v327 = vadd.f32 0.0, %v326
      %v328 = vpop.f32.mrb[0].mxu0
      %329 = vmatprep.mubr.bf16.mxu0 0
      %330 = vmatmul.mubr.bf16.gmra.mrb[0].mxu0 %v264
      %v331 = vpop.f32.mrb[0].mxu0
      %v332 = vadd.f32 0.0, %v331
      %v333 = vpop.f32.mrb[0].mxu0
      %v334 = vpop.f32.mrb[0].mxu0
      %v335 = vadd.f32 0.0, %v334
      %v336 = vpop.f32.mrb[0].mxu0
      %337 = vmatprep.mubr.bf16.mxu0 0
      %338 = vmatmul.mubr.bf16.gmra.mrb[0].mxu0 %v267
      %v339 = vpop.f32.mrb[0].mxu0
      %v340 = vadd.f32 0.0, %v339
      %v341 = vpop.f32.mrb[0].mxu0
      %v342 = vpop.f32.mrb[0].mxu0
      %v343 = vadd.f32 0.0, %v342
      %v344 = vpop.f32.mrb[0].mxu0
      %345 = vmatprep.mubr.bf16.mxu0 0
      %346 = vmatmul.mubr.bf16.gmra.mrb[0].mxu0 %v270
      %v347 = vpop.f32.mrb[0].mxu0
      %v348 = vadd.f32 0.0, %v347
      %v349 = vpop.f32.mrb[0].mxu0
      %v350 = vpop.f32.mrb[0].mxu0
      %v351 = vadd.f32 0.0, %v350
      %v352 = vpop.f32.mrb[0].mxu0
      %353 = vmatprep.mubr.bf16.mxu0 0
      %354 = vmatmul.mubr.bf16.gmra.mrb[0].mxu0 %v273
      %v355 = vpop.f32.mrb[0].mxu0
      %v356 = vadd.f32 0.0, %v355
      %v357 = vpop.f32.mrb[0].mxu0
      %v358 = vpop.f32.mrb[0].mxu0
      %v359 = vadd.f32 0.0, %v358
      %v360 = vpop.f32.mrb[0].mxu0
      %361 = vmatprep.mubr.bf16.mxu0 0
      %362 = vmatmul.mubr.bf16.gmra.mrb[0].mxu0 %v276
      %v363 = vpop.f32.mrb[0].mxu0
      %v364 = vadd.f32 0.0, %v363
      %v365 = vpop.f32.mrb[0].mxu0
      %v366 = vpop.f32.mrb[0].mxu0
      %v367 = vadd.f32 0.0, %v366
      %v368 = vpop.f32.mrb[0].mxu0
      %369 = vmatprep.mubr.bf16.mxu0 0
      %370 = vmatmul.mubr.bf16.gmra.mrb[0].mxu0 %v279
      %v371 = vpop.f32.mrb[0].mxu0
      %v372 = vadd.f32 0.0, %v371
      %v373 = vpop.f32.mrb[0].mxu0
      %v374 = vpop.f32.mrb[0].mxu0
      %v375 = vadd.f32 0.0, %v374
      %v376 = vpop.f32.mrb[0].mxu0
      %377 = vdwg.mxu0
      %v378 = vsel %vm256, %v316, -inf
      %379 = vmax.xlane.f32.xlu0 %v378
      %v380 = vpop.xlane.xlu0 %379
      %v381 = vsel %vm256, %v319, -inf
      %382 = vmax.xlane.f32.xlu0 %v381
      %v383 = vpop.xlane.xlu0 %382
      %v384 = vsel %vm256, %v324, -inf
      %385 = vmax.xlane.f32.xlu0 %v384
      %v386 = vpop.xlane.xlu0 %385
      %v387 = vsel %vm256, %v327, -inf
      %388 = vmax.xlane.f32.xlu0 %v387
      %v389 = vpop.xlane.xlu0 %388
      %v390 = vsel %vm256, %v332, -inf
      %391 = vmax.xlane.f32.xlu0 %v390
      %v392 = vpop.xlane.xlu0 %391
      %v393 = vsel %vm256, %v335, -inf
      %394 = vmax.xlane.f32.xlu0 %v393
      %v395 = vpop.xlane.xlu0 %394
      %v396 = vsel %vm256, %v340, -inf
      %397 = vmax.xlane.f32.xlu0 %v396
      %v398 = vpop.xlane.xlu0 %397
      %v399 = vsel %vm256, %v343, -inf
      %400 = vmax.xlane.f32.xlu0 %v399
      %v401 = vpop.xlane.xlu0 %400
      %v402 = vsel %vm256, %v348, -inf
      %403 = vmax.xlane.f32.xlu0 %v402
      %v404 = vpop.xlane.xlu0 %403
      %v405 = vsel %vm256, %v351, -inf
      %406 = vmax.xlane.f32.xlu0 %v405
      %v407 = vpop.xlane.xlu0 %406
      %v408 = vsel %vm256, %v356, -inf
      %409 = vmax.xlane.f32.xlu0 %v408
      %v410 = vpop.xlane.xlu0 %409
      %v411 = vsel %vm256, %v359, -inf
      %412 = vmax.xlane.f32.xlu0 %v411
      %v413 = vpop.xlane.xlu0 %412
      %v414 = vsel %vm256, %v364, -inf
      %415 = vmax.xlane.f32.xlu0 %v414
      %v416 = vpop.xlane.xlu0 %415
      %v417 = vsel %vm256, %v367, -inf
      %418 = vmax.xlane.f32.xlu0 %v417
      %v419 = vpop.xlane.xlu0 %418
      %v420 = vsel %vm256, %v372, -inf
      %421 = vmax.xlane.f32.xlu0 %v420
      %v422 = vpop.xlane.xlu0 %421
      %v423 = vsel %vm256, %v375, -inf
      %424 = vmax.xlane.f32.xlu0 %v423
      %v425 = vpop.xlane.xlu0 %424
      %s426 = scalar_lea.vmem %s165, 32
      %v427 = vld [vmem:[%s426] sm:$0xff]
      %v428 = vld [vmem:[%s426 + $0x8] sm:$0xff]
      %v429 = vld [vmem:[%s426 + $0x10] sm:$0xff]
      %v430 = vld [vmem:[%s426 + $0x18] sm:$0xff]
      %v431 = vpack.c.bf16 %v428, %v427
      %v432 = vpack.c.bf16 %v430, %v429
      %433 = vmatprep.subr.bf16.mxu0 0
      %434 = vmatpush1.bf16.msra.mxu0 %v431
      %435 = vmatprep.subr.bf16.mxu0 0
      %436 = vmatpush1.bf16.msra.mxu0 %v432
      %437 = vmatprep.subr.bf16.mxu0 0
      %438 = vmatpush1.bf16.msra.mxu0 0
      %439 = vmatprep.subr.bf16.mxu0 0
      %440 = vmatpush1.bf16.msra.mxu0 0
      %441 = vmatprep.subr.bf16.mxu0 0
      %442 = vmatpush1.bf16.msra.mxu0 0
      %443 = vmatprep.subr.bf16.mxu0 0
      %444 = vmatpush1.bf16.msra.mxu0 0
      %445 = vmatprep.subr.bf16.mxu0 0
      %446 = vmatpush1.bf16.msra.mxu0 0
      %447 = vmatprep.subr.bf16.mxu0 0
      %448 = vmatpush1.bf16.msra.mxu0 0
      %449 = vmatprep.subr.bf16.mxu0 0
      %450 = vmatpush1.bf16.msra.mxu0 0
      %451 = vmatprep.subr.bf16.mxu0 0
      %452 = vmatpush1.bf16.msra.mxu0 0
      %453 = vmatprep.subr.bf16.mxu0 0
      %454 = vmatpush1.bf16.msra.mxu0 0
      %455 = vmatprep.subr.bf16.mxu0 0
      %456 = vmatpush1.bf16.msra.mxu0 0
      %457 = vmatprep.subr.bf16.mxu0 0
      %458 = vmatpush1.bf16.msra.mxu0 0
      %459 = vmatprep.subr.bf16.mxu0 0
      %460 = vmatpush1.bf16.msra.mxu0 0
      %461 = vmatprep.subr.bf16.mxu0 0
      %462 = vmatpush1.bf16.msra.mxu0 0
      %463 = vmatprep.subr.bf16.mxu0 0
      %464 = vmatpush1.bf16.msra.mxu0 0
      %465 = vmatprep.mubr.bf16.mxu0 0
      %466 = vmatmul.mubr.bf16.gmra.mrb[0].mxu0 %v258
      %v467 = vpop.f32.mrb[0].mxu0
      %v468 = vadd.f32 0.0, %v467
      %v469 = vpop.f32.mrb[0].mxu0
      %v470 = vpop.f32.mrb[0].mxu0
      %v471 = vadd.f32 0.0, %v470
      %v472 = vpop.f32.mrb[0].mxu0
      %473 = vmatprep.mubr.bf16.mxu0 0
      %474 = vmatmul.mubr.bf16.gmra.mrb[0].mxu0 %v261
      %v475 = vpop.f32.mrb[0].mxu0
      %v476 = vadd.f32 0.0, %v475
      %v477 = vpop.f32.mrb[0].mxu0
      %v478 = vpop.f32.mrb[0].mxu0
      %v479 = vadd.f32 0.0, %v478
      %v480 = vpop.f32.mrb[0].mxu0
      %481 = vmatprep.mubr.bf16.mxu0 0
      %482 = vmatmul.mubr.bf16.gmra.mrb[0].mxu0 %v264
      %v483 = vpop.f32.mrb[0].mxu0
      %v484 = vadd.f32 0.0, %v483
      %v485 = vpop.f32.mrb[0].mxu0
      %v486 = vpop.f32.mrb[0].mxu0
      %v487 = vadd.f32 0.0, %v486
      %v488 = vpop.f32.mrb[0].mxu0
      %489 = vmatprep.mubr.bf16.mxu0 0
      %490 = vmatmul.mubr.bf16.gmra.mrb[0].mxu0 %v267
      %v491 = vpop.f32.mrb[0].mxu0
      %v492 = vadd.f32 0.0, %v491
      %v493 = vpop.f32.mrb[0].mxu0
      %v494 = vpop.f32.mrb[0].mxu0
      %v495 = vadd.f32 0.0, %v494
      %v496 = vpop.f32.mrb[0].mxu0
      %497 = vmatprep.mubr.bf16.mxu0 0
      %498 = vmatmul.mubr.bf16.gmra.mrb[0].mxu0 %v270
      %v499 = vpop.f32.mrb[0].mxu0
      %v500 = vadd.f32 0.0, %v499
      %v501 = vpop.f32.mrb[0].mxu0
      %v502 = vpop.f32.mrb[0].mxu0
      %v503 = vadd.f32 0.0, %v502
      %v504 = vpop.f32.mrb[0].mxu0
      %505 = vmatprep.mubr.bf16.mxu0 0
      %506 = vmatmul.mubr.bf16.gmra.mrb[0].mxu0 %v273
      %v507 = vpop.f32.mrb[0].mxu0
      %v508 = vadd.f32 0.0, %v507
      %v509 = vpop.f32.mrb[0].mxu0
      %v510 = vpop.f32.mrb[0].mxu0
      %v511 = vadd.f32 0.0, %v510
      %v512 = vpop.f32.mrb[0].mxu0
      %513 = vmatprep.mubr.bf16.mxu0 0
      %514 = vmatmul.mubr.bf16.gmra.mrb[0].mxu0 %v276
      %v515 = vpop.f32.mrb[0].mxu0
      %v516 = vadd.f32 0.0, %v515
      %v517 = vpop.f32.mrb[0].mxu0
      %v518 = vpop.f32.mrb[0].mxu0
      %v519 = vadd.f32 0.0, %v518
      %v520 = vpop.f32.mrb[0].mxu0
      %521 = vmatprep.mubr.bf16.mxu0 0
      %522 = vmatmul.mubr.bf16.gmra.mrb[0].mxu0 %v279
      %v523 = vpop.f32.mrb[0].mxu0
      %v524 = vadd.f32 0.0, %v523
      %v525 = vpop.f32.mrb[0].mxu0
      %v526 = vpop.f32.mrb[0].mxu0
      %v527 = vadd.f32 0.0, %v526
      %v528 = vpop.f32.mrb[0].mxu0
      %529 = vdwg.mxu0
      %v530 = vsel %vm256, %v468, -inf
      %531 = vmax.xlane.f32.xlu0 %v530
      %v532 = vpop.xlane.xlu0 %531
      %v533 = vsel %vm256, %v471, -inf
      %534 = vmax.xlane.f32.xlu0 %v533
      %v535 = vpop.xlane.xlu0 %534
      %v536 = vsel %vm256, %v476, -inf
      %537 = vmax.xlane.f32.xlu0 %v536
      %v538 = vpop.xlane.xlu0 %537
      %v539 = vsel %vm256, %v479, -inf
      %540 = vmax.xlane.f32.xlu0 %v539
      %v541 = vpop.xlane.xlu0 %540
      %v542 = vsel %vm256, %v484, -inf
      %543 = vmax.xlane.f32.xlu0 %v542
      %v544 = vpop.xlane.xlu0 %543
      %v545 = vsel %vm256, %v487, -inf
      %546 = vmax.xlane.f32.xlu0 %v545
      %v547 = vpop.xlane.xlu0 %546
      %v548 = vsel %vm256, %v492, -inf
      %549 = vmax.xlane.f32.xlu0 %v548
      %v550 = vpop.xlane.xlu0 %549
      %v551 = vsel %vm256, %v495, -inf
      %552 = vmax.xlane.f32.xlu0 %v551
      %v553 = vpop.xlane.xlu0 %552
      %v554 = vsel %vm256, %v500, -inf
      %555 = vmax.xlane.f32.xlu0 %v554
      %v556 = vpop.xlane.xlu0 %555
      %v557 = vsel %vm256, %v503, -inf
      %558 = vmax.xlane.f32.xlu0 %v557
      %v559 = vpop.xlane.xlu0 %558
      %v560 = vsel %vm256, %v508, -inf
      %561 = vmax.xlane.f32.xlu0 %v560
      %v562 = vpop.xlane.xlu0 %561
      %v563 = vsel %vm256, %v511, -inf
      %564 = vmax.xlane.f32.xlu0 %v563
      %v565 = vpop.xlane.xlu0 %564
      %v566 = vsel %vm256, %v516, -inf
      %567 = vmax.xlane.f32.xlu0 %v566
      %v568 = vpop.xlane.xlu0 %567
      %v569 = vsel %vm256, %v519, -inf
      %570 = vmax.xlane.f32.xlu0 %v569
      %v571 = vpop.xlane.xlu0 %570
      %v572 = vsel %vm256, %v524, -inf
      %573 = vmax.xlane.f32.xlu0 %v572
      %v574 = vpop.xlane.xlu0 %573
      %v575 = vsel %vm256, %v527, -inf
      %576 = vmax.xlane.f32.xlu0 %v575
      %v577 = vpop.xlane.xlu0 %576
      %s578 = scalar_lea.vmem %s165, 64
      %v579 = vld [vmem:[%s578] sm:$0xff]
      %v580 = vld [vmem:[%s578 + $0x8] sm:$0xff]
      %v581 = vld [vmem:[%s578 + $0x10] sm:$0xff]
      %v582 = vld [vmem:[%s578 + $0x18] sm:$0xff]
      %v583 = vpack.c.bf16 %v580, %v579
      %v584 = vpack.c.bf16 %v582, %v581
      %585 = vmatprep.subr.bf16.mxu0 0
      %586 = vmatpush1.bf16.msra.mxu0 %v583
      %587 = vmatprep.subr.bf16.mxu0 0
      %588 = vmatpush1.bf16.msra.mxu0 %v584
      %589 = vmatprep.subr.bf16.mxu0 0
      %590 = vmatpush1.bf16.msra.mxu0 0
      %591 = vmatprep.subr.bf16.mxu0 0
      %592 = vmatpush1.bf16.msra.mxu0 0
      %593 = vmatprep.subr.bf16.mxu0 0
      %594 = vmatpush1.bf16.msra.mxu0 0
      %595 = vmatprep.subr.bf16.mxu0 0
      %596 = vmatpush1.bf16.msra.mxu0 0
      %597 = vmatprep.subr.bf16.mxu0 0
      %598 = vmatpush1.bf16.msra.mxu0 0
      %599 = vmatprep.subr.bf16.mxu0 0
      %600 = vmatpush1.bf16.msra.mxu0 0
      %601 = vmatprep.subr.bf16.mxu0 0
      %602 = vmatpush1.bf16.msra.mxu0 0
      %603 = vmatprep.subr.bf16.mxu0 0
      %604 = vmatpush1.bf16.msra.mxu0 0
      %605 = vmatprep.subr.bf16.mxu0 0
      %606 = vmatpush1.bf16.msra.mxu0 0
      %607 = vmatprep.subr.bf16.mxu0 0
      %608 = vmatpush1.bf16.msra.mxu0 0
      %609 = vmatprep.subr.bf16.mxu0 0
      %610 = vmatpush1.bf16.msra.mxu0 0
      %611 = vmatprep.subr.bf16.mxu0 0
      %612 = vmatpush1.bf16.msra.mxu0 0
      %613 = vmatprep.subr.bf16.mxu0 0
      %614 = vmatpush1.bf16.msra.mxu0 0
      %615 = vmatprep.subr.bf16.mxu0 0
      %616 = vmatpush1.bf16.msra.mxu0 0
      %617 = vmatprep.mubr.bf16.mxu0 0
      %618 = vmatmul.mubr.bf16.gmra.mrb[0].mxu0 %v258
      %v619 = vpop.f32.mrb[0].mxu0
      %v620 = vadd.f32 0.0, %v619
      %v621 = vpop.f32.mrb[0].mxu0
      %v622 = vpop.f32.mrb[0].mxu0
      %v623 = vadd.f32 0.0, %v622
      %v624 = vpop.f32.mrb[0].mxu0
      %625 = vmatprep.mubr.bf16.mxu0 0
      %626 = vmatmul.mubr.bf16.gmra.mrb[0].mxu0 %v261
      %v627 = vpop.f32.mrb[0].mxu0
      %v628 = vadd.f32 0.0, %v627
      %v629 = vpop.f32.mrb[0].mxu0
      %v630 = vpop.f32.mrb[0].mxu0
      %v631 = vadd.f32 0.0, %v630
      %v632 = vpop.f32.mrb[0].mxu0
      %633 = vmatprep.mubr.bf16.mxu0 0
      %634 = vmatmul.mubr.bf16.gmra.mrb[0].mxu0 %v264
      %v635 = vpop.f32.mrb[0].mxu0
      %v636 = vadd.f32 0.0, %v635
      %v637 = vpop.f32.mrb[0].mxu0
      %v638 = vpop.f32.mrb[0].mxu0
      %v639 = vadd.f32 0.0, %v638
      %v640 = vpop.f32.mrb[0].mxu0
      %641 = vmatprep.mubr.bf16.mxu0 0
      %642 = vmatmul.mubr.bf16.gmra.mrb[0].mxu0 %v267
      %v643 = vpop.f32.mrb[0].mxu0
      %v644 = vadd.f32 0.0, %v643
      %v645 = vpop.f32.mrb[0].mxu0
      %v646 = vpop.f32.mrb[0].mxu0
      %v647 = vadd.f32 0.0, %v646
      %v648 = vpop.f32.mrb[0].mxu0
      %649 = vmatprep.mubr.bf16.mxu0 0
      %650 = vmatmul.mubr.bf16.gmra.mrb[0].mxu0 %v270
      %v651 = vpop.f32.mrb[0].mxu0
      %v652 = vadd.f32 0.0, %v651
      %v653 = vpop.f32.mrb[0].mxu0
      %v654 = vpop.f32.mrb[0].mxu0
      %v655 = vadd.f32 0.0, %v654
      %v656 = vpop.f32.mrb[0].mxu0
      %657 = vmatprep.mubr.bf16.mxu0 0
      %658 = vmatmul.mubr.bf16.gmra.mrb[0].mxu0 %v273
      %v659 = vpop.f32.mrb[0].mxu0
      %v660 = vadd.f32 0.0, %v659
      %v661 = vpop.f32.mrb[0].mxu0
      %v662 = vpop.f32.mrb[0].mxu0
      %v663 = vadd.f32 0.0, %v662
      %v664 = vpop.f32.mrb[0].mxu0
      %665 = vmatprep.mubr.bf16.mxu0 0
      %666 = vmatmul.mubr.bf16.gmra.mrb[0].mxu0 %v276
      %v667 = vpop.f32.mrb[0].mxu0
      %v668 = vadd.f32 0.0, %v667
      %v669 = vpop.f32.mrb[0].mxu0
      %v670 = vpop.f32.mrb[0].mxu0
      %v671 = vadd.f32 0.0, %v670
      %v672 = vpop.f32.mrb[0].mxu0
      %673 = vmatprep.mubr.bf16.mxu0 0
      %674 = vmatmul.mubr.bf16.gmra.mrb[0].mxu0 %v279
      %v675 = vpop.f32.mrb[0].mxu0
      %v676 = vadd.f32 0.0, %v675
      %v677 = vpop.f32.mrb[0].mxu0
      %v678 = vpop.f32.mrb[0].mxu0
      %v679 = vadd.f32 0.0, %v678
      %v680 = vpop.f32.mrb[0].mxu0
      %681 = vdwg.mxu0
      %v682 = vsel %vm256, %v620, -inf
      %683 = vmax.xlane.f32.xlu0 %v682
      %v684 = vpop.xlane.xlu0 %683
      %v685 = vsel %vm256, %v623, -inf
      %686 = vmax.xlane.f32.xlu0 %v685
      %v687 = vpop.xlane.xlu0 %686
      %v688 = vsel %vm256, %v628, -inf
      %689 = vmax.xlane.f32.xlu0 %v688
      %v690 = vpop.xlane.xlu0 %689
      %v691 = vsel %vm256, %v631, -inf
      %692 = vmax.xlane.f32.xlu0 %v691
      %v693 = vpop.xlane.xlu0 %692
      %v694 = vsel %vm256, %v636, -inf
      %695 = vmax.xlane.f32.xlu0 %v694
      %v696 = vpop.xlane.xlu0 %695
      %v697 = vsel %vm256, %v639, -inf
      %698 = vmax.xlane.f32.xlu0 %v697
      %v699 = vpop.xlane.xlu0 %698
      %v700 = vsel %vm256, %v644, -inf
      %701 = vmax.xlane.f32.xlu0 %v700
      %v702 = vpop.xlane.xlu0 %701
      %v703 = vsel %vm256, %v647, -inf
      %704 = vmax.xlane.f32.xlu0 %v703
      %v705 = vpop.xlane.xlu0 %704
      %v706 = vsel %vm256, %v652, -inf
      %707 = vmax.xlane.f32.xlu0 %v706
      %v708 = vpop.xlane.xlu0 %707
      %v709 = vsel %vm256, %v655, -inf
      %710 = vmax.xlane.f32.xlu0 %v709
      %v711 = vpop.xlane.xlu0 %710
      %v712 = vsel %vm256, %v660, -inf
      %713 = vmax.xlane.f32.xlu0 %v712
      %v714 = vpop.xlane.xlu0 %713
      %v715 = vsel %vm256, %v663, -inf
      %716 = vmax.xlane.f32.xlu0 %v715
      %v717 = vpop.xlane.xlu0 %716
      %v718 = vsel %vm256, %v668, -inf
      %719 = vmax.xlane.f32.xlu0 %v718
      %v720 = vpop.xlane.xlu0 %719
      %v721 = vsel %vm256, %v671, -inf
      %722 = vmax.xlane.f32.xlu0 %v721
      %v723 = vpop.xlane.xlu0 %722
      %v724 = vsel %vm256, %v676, -inf
      %725 = vmax.xlane.f32.xlu0 %v724
      %v726 = vpop.xlane.xlu0 %725
      %v727 = vsel %vm256, %v679, -inf
      %728 = vmax.xlane.f32.xlu0 %v727
      %v729 = vpop.xlane.xlu0 %728
      %s730 = scalar_lea.vmem %s165, 96
      %v731 = vld [vmem:[%s730] sm:$0xff]
      %v732 = vld [vmem:[%s730 + $0x8] sm:$0xff]
      %v733 = vld [vmem:[%s730 + $0x10] sm:$0xff]
      %v734 = vld [vmem:[%s730 + $0x18] sm:$0xff]
      %v735 = vpack.c.bf16 %v732, %v731
      %v736 = vpack.c.bf16 %v734, %v733
      %737 = vmatprep.subr.bf16.mxu0 0
      %738 = vmatpush1.bf16.msra.mxu0 %v735
      %739 = vmatprep.subr.bf16.mxu0 0
      %740 = vmatpush1.bf16.msra.mxu0 %v736
      %741 = vmatprep.subr.bf16.mxu0 0
      %742 = vmatpush1.bf16.msra.mxu0 0
      %743 = vmatprep.subr.bf16.mxu0 0
      %744 = vmatpush1.bf16.msra.mxu0 0
      %745 = vmatprep.subr.bf16.mxu0 0
      %746 = vmatpush1.bf16.msra.mxu0 0
      %747 = vmatprep.subr.bf16.mxu0 0
      %748 = vmatpush1.bf16.msra.mxu0 0
      %749 = vmatprep.subr.bf16.mxu0 0
      %750 = vmatpush1.bf16.msra.mxu0 0
      %751 = vmatprep.subr.bf16.mxu0 0
      %752 = vmatpush1.bf16.msra.mxu0 0
      %753 = vmatprep.subr.bf16.mxu0 0
      %754 = vmatpush1.bf16.msra.mxu0 0
      %755 = vmatprep.subr.bf16.mxu0 0
      %756 = vmatpush1.bf16.msra.mxu0 0
      %757 = vmatprep.subr.bf16.mxu0 0
      %758 = vmatpush1.bf16.msra.mxu0 0
      %759 = vmatprep.subr.bf16.mxu0 0
      %760 = vmatpush1.bf16.msra.mxu0 0
      %761 = vmatprep.subr.bf16.mxu0 0
      %762 = vmatpush1.bf16.msra.mxu0 0
      %763 = vmatprep.subr.bf16.mxu0 0
      %764 = vmatpush1.bf16.msra.mxu0 0
      %765 = vmatprep.subr.bf16.mxu0 0
      %766 = vmatpush1.bf16.msra.mxu0 0
      %767 = vmatprep.subr.bf16.mxu0 0
      %768 = vmatpush1.bf16.msra.mxu0 0
      %769 = vmatprep.mubr.bf16.mxu0 0
      %770 = vmatmul.mubr.bf16.gmra.mrb[0].mxu0 %v258
      %v771 = vpop.f32.mrb[0].mxu0
      %v772 = vadd.f32 0.0, %v771
      %v773 = vpop.f32.mrb[0].mxu0
      %v774 = vpop.f32.mrb[0].mxu0
      %v775 = vadd.f32 0.0, %v774
      %v776 = vpop.f32.mrb[0].mxu0
      %777 = vmatprep.mubr.bf16.mxu0 0
      %778 = vmatmul.mubr.bf16.gmra.mrb[0].mxu0 %v261
      %v779 = vpop.f32.mrb[0].mxu0
      %v780 = vadd.f32 0.0, %v779
      %v781 = vpop.f32.mrb[0].mxu0
      %v782 = vpop.f32.mrb[0].mxu0
      %v783 = vadd.f32 0.0, %v782
      %v784 = vpop.f32.mrb[0].mxu0
      %785 = vmatprep.mubr.bf16.mxu0 0
      %786 = vmatmul.mubr.bf16.gmra.mrb[0].mxu0 %v264
      %v787 = vpop.f32.mrb[0].mxu0
      %v788 = vadd.f32 0.0, %v787
      %v789 = vpop.f32.mrb[0].mxu0
      %v790 = vpop.f32.mrb[0].mxu0
      %v791 = vadd.f32 0.0, %v790
      %v792 = vpop.f32.mrb[0].mxu0
      %793 = vmatprep.mubr.bf16.mxu0 0
      %794 = vmatmul.mubr.bf16.gmra.mrb[0].mxu0 %v267
      %v795 = vpop.f32.mrb[0].mxu0
      %v796 = vadd.f32 0.0, %v795
      %v797 = vpop.f32.mrb[0].mxu0
      %v798 = vpop.f32.mrb[0].mxu0
      %v799 = vadd.f32 0.0, %v798
      %v800 = vpop.f32.mrb[0].mxu0
      %801 = vmatprep.mubr.bf16.mxu0 0
      %802 = vmatmul.mubr.bf16.gmra.mrb[0].mxu0 %v270
      %v803 = vpop.f32.mrb[0].mxu0
      %v804 = vadd.f32 0.0, %v803
      %v805 = vpop.f32.mrb[0].mxu0
      %v806 = vpop.f32.mrb[0].mxu0
      %v807 = vadd.f32 0.0, %v806
      %v808 = vpop.f32.mrb[0].mxu0
      %809 = vmatprep.mubr.bf16.mxu0 0
      %810 = vmatmul.mubr.bf16.gmra.mrb[0].mxu0 %v273
      %v811 = vpop.f32.mrb[0].mxu0
      %v812 = vadd.f32 0.0, %v811
      %v813 = vpop.f32.mrb[0].mxu0
      %v814 = vpop.f32.mrb[0].mxu0
      %v815 = vadd.f32 0.0, %v814
      %v816 = vpop.f32.mrb[0].mxu0
      %817 = vmatprep.mubr.bf16.mxu0 0
      %818 = vmatmul.mubr.bf16.gmra.mrb[0].mxu0 %v276
      %v819 = vpop.f32.mrb[0].mxu0
      %v820 = vadd.f32 0.0, %v819
      %v821 = vpop.f32.mrb[0].mxu0
      %v822 = vpop.f32.mrb[0].mxu0
      %v823 = vadd.f32 0.0, %v822
      %v824 = vpop.f32.mrb[0].mxu0
      %825 = vmatprep.mubr.bf16.mxu0 0
      %826 = vmatmul.mubr.bf16.gmra.mrb[0].mxu0 %v279
      %v827 = vpop.f32.mrb[0].mxu0
      %v828 = vadd.f32 0.0, %v827
      %v829 = vpop.f32.mrb[0].mxu0
      %v830 = vpop.f32.mrb[0].mxu0
      %v831 = vadd.f32 0.0, %v830
      %v832 = vpop.f32.mrb[0].mxu0
      %833 = vdwg.mxu0
      %v834 = vsel %vm256, %v772, -inf
      %835 = vmax.xlane.f32.xlu0 %v834
      %v836 = vpop.xlane.xlu0 %835
      %v837 = vsel %vm256, %v775, -inf
      %838 = vmax.xlane.f32.xlu0 %v837
      %v839 = vpop.xlane.xlu0 %838
      %v840 = vsel %vm256, %v780, -inf
      %841 = vmax.xlane.f32.xlu0 %v840
      %v842 = vpop.xlane.xlu0 %841
      %v843 = vsel %vm256, %v783, -inf
      %844 = vmax.xlane.f32.xlu0 %v843
      %v845 = vpop.xlane.xlu0 %844
      %v846 = vsel %vm256, %v788, -inf
      %847 = vmax.xlane.f32.xlu0 %v846
      %v848 = vpop.xlane.xlu0 %847
      %v849 = vsel %vm256, %v791, -inf
      %850 = vmax.xlane.f32.xlu0 %v849
      %v851 = vpop.xlane.xlu0 %850
      %v852 = vsel %vm256, %v796, -inf
      %853 = vmax.xlane.f32.xlu0 %v852
      %v854 = vpop.xlane.xlu0 %853
      %v855 = vsel %vm256, %v799, -inf
      %856 = vmax.xlane.f32.xlu0 %v855
      %v857 = vpop.xlane.xlu0 %856
      %v858 = vsel %vm256, %v804, -inf
      %859 = vmax.xlane.f32.xlu0 %v858
      %v860 = vpop.xlane.xlu0 %859
      %v861 = vsel %vm256, %v807, -inf
      %862 = vmax.xlane.f32.xlu0 %v861
      %v863 = vpop.xlane.xlu0 %862
      %v864 = vsel %vm256, %v812, -inf
      %865 = vmax.xlane.f32.xlu0 %v864
      %v866 = vpop.xlane.xlu0 %865
      %v867 = vsel %vm256, %v815, -inf
      %868 = vmax.xlane.f32.xlu0 %v867
      %v869 = vpop.xlane.xlu0 %868
      %v870 = vsel %vm256, %v820, -inf
      %871 = vmax.xlane.f32.xlu0 %v870
      %v872 = vpop.xlane.xlu0 %871
      %v873 = vsel %vm256, %v823, -inf
      %874 = vmax.xlane.f32.xlu0 %v873
      %v875 = vpop.xlane.xlu0 %874
      %v876 = vsel %vm256, %v828, -inf
      %877 = vmax.xlane.f32.xlu0 %v876
      %v878 = vpop.xlane.xlu0 %877
      %v879 = vsel %vm256, %v831, -inf
      %880 = vmax.xlane.f32.xlu0 %v879
      %v881 = vpop.xlane.xlu0 %880
      %s882 = scalar_lea.vmem %s165, 128
      %v883 = vld [vmem:[%s882] sm:$0xff]
      %v884 = vld [vmem:[%s882 + $0x8] sm:$0xff]
      %v885 = vld [vmem:[%s882 + $0x10] sm:$0xff]
      %v886 = vld [vmem:[%s882 + $0x18] sm:$0xff]
      %v887 = vpack.c.bf16 %v884, %v883
      %v888 = vpack.c.bf16 %v886, %v885
      %889 = vmatprep.subr.bf16.mxu0 0
      %890 = vmatpush1.bf16.msra.mxu0 %v887
      %891 = vmatprep.subr.bf16.mxu0 0
      %892 = vmatpush1.bf16.msra.mxu0 %v888
      %893 = vmatprep.subr.bf16.mxu0 0
      %894 = vmatpush1.bf16.msra.mxu0 0
      %895 = vmatprep.subr.bf16.mxu0 0
      %896 = vmatpush1.bf16.msra.mxu0 0
      %897 = vmatprep.subr.bf16.mxu0 0
      %898 = vmatpush1.bf16.msra.mxu0 0
      %899 = vmatprep.subr.bf16.mxu0 0
      %900 = vmatpush1.bf16.msra.mxu0 0
      %901 = vmatprep.subr.bf16.mxu0 0
      %902 = vmatpush1.bf16.msra.mxu0 0
      %903 = vmatprep.subr.bf16.mxu0 0
      %904 = vmatpush1.bf16.msra.mxu0 0
      %905 = vmatprep.subr.bf16.mxu0 0
      %906 = vmatpush1.bf16.msra.mxu0 0
      %907 = vmatprep.subr.bf16.mxu0 0
      %908 = vmatpush1.bf16.msra.mxu0 0
      %909 = vmatprep.subr.bf16.mxu0 0
      %910 = vmatpush1.bf16.msra.mxu0 0
      %911 = vmatprep.subr.bf16.mxu0 0
      %912 = vmatpush1.bf16.msra.mxu0 0
      %913 = vmatprep.subr.bf16.mxu0 0
      %914 = vmatpush1.bf16.msra.mxu0 0
      %915 = vmatprep.subr.bf16.mxu0 0
      %916 = vmatpush1.bf16.msra.mxu0 0
      %917 = vmatprep.subr.bf16.mxu0 0
      %918 = vmatpush1.bf16.msra.mxu0 0
      %919 = vmatprep.subr.bf16.mxu0 0
      %920 = vmatpush1.bf16.msra.mxu0 0
      %921 = vmatprep.mubr.bf16.mxu0 0
      %922 = vmatmul.mubr.bf16.gmra.mrb[0].mxu0 %v258
      %v923 = vpop.f32.mrb[0].mxu0
      %v924 = vadd.f32 0.0, %v923
      %v925 = vpop.f32.mrb[0].mxu0
      %v926 = vpop.f32.mrb[0].mxu0
      %v927 = vadd.f32 0.0, %v926
      %v928 = vpop.f32.mrb[0].mxu0
      %929 = vmatprep.mubr.bf16.mxu0 0
      %930 = vmatmul.mubr.bf16.gmra.mrb[0].mxu0 %v261
      %v931 = vpop.f32.mrb[0].mxu0
      %v932 = vadd.f32 0.0, %v931
      %v933 = vpop.f32.mrb[0].mxu0
      %v934 = vpop.f32.mrb[0].mxu0
      %v935 = vadd.f32 0.0, %v934
      %v936 = vpop.f32.mrb[0].mxu0
      %937 = vmatprep.mubr.bf16.mxu0 0
      %938 = vmatmul.mubr.bf16.gmra.mrb[0].mxu0 %v264
      %v939 = vpop.f32.mrb[0].mxu0
      %v940 = vadd.f32 0.0, %v939
      %v941 = vpop.f32.mrb[0].mxu0
      %v942 = vpop.f32.mrb[0].mxu0
      %v943 = vadd.f32 0.0, %v942
      %v944 = vpop.f32.mrb[0].mxu0
      %945 = vmatprep.mubr.bf16.mxu0 0
      %946 = vmatmul.mubr.bf16.gmra.mrb[0].mxu0 %v267
      %v947 = vpop.f32.mrb[0].mxu0
      %v948 = vadd.f32 0.0, %v947
      %v949 = vpop.f32.mrb[0].mxu0
      %v950 = vpop.f32.mrb[0].mxu0
      %v951 = vadd.f32 0.0, %v950
      %v952 = vpop.f32.mrb[0].mxu0
      %953 = vmatprep.mubr.bf16.mxu0 0
      %954 = vmatmul.mubr.bf16.gmra.mrb[0].mxu0 %v270
      %v955 = vpop.f32.mrb[0].mxu0
      %v956 = vadd.f32 0.0, %v955
      %v957 = vpop.f32.mrb[0].mxu0
      %v958 = vpop.f32.mrb[0].mxu0
      %v959 = vadd.f32 0.0, %v958
      %v960 = vpop.f32.mrb[0].mxu0
      %961 = vmatprep.mubr.bf16.mxu0 0
      %962 = vmatmul.mubr.bf16.gmra.mrb[0].mxu0 %v273
      %v963 = vpop.f32.mrb[0].mxu0
      %v964 = vadd.f32 0.0, %v963
      %v965 = vpop.f32.mrb[0].mxu0
      %v966 = vpop.f32.mrb[0].mxu0
      %v967 = vadd.f32 0.0, %v966
      %v968 = vpop.f32.mrb[0].mxu0
      %969 = vmatprep.mubr.bf16.mxu0 0
      %970 = vmatmul.mubr.bf16.gmra.mrb[0].mxu0 %v276
      %v971 = vpop.f32.mrb[0].mxu0
      %v972 = vadd.f32 0.0, %v971
      %v973 = vpop.f32.mrb[0].mxu0
      %v974 = vpop.f32.mrb[0].mxu0
      %v975 = vadd.f32 0.0, %v974
      %v976 = vpop.f32.mrb[0].mxu0
      %977 = vmatprep.mubr.bf16.mxu0 0
      %978 = vmatmul.mubr.bf16.gmra.mrb[0].mxu0 %v279
      %v979 = vpop.f32.mrb[0].mxu0
      %v980 = vadd.f32 0.0, %v979
      %v981 = vpop.f32.mrb[0].mxu0
      %v982 = vpop.f32.mrb[0].mxu0
      %v983 = vadd.f32 0.0, %v982
      %v984 = vpop.f32.mrb[0].mxu0
      %985 = vdwg.mxu0
      %v986 = vsel %vm256, %v924, -inf
      %987 = vmax.xlane.f32.xlu0 %v986
      %v988 = vpop.xlane.xlu0 %987
      %v989 = vsel %vm256, %v927, -inf
      %990 = vmax.xlane.f32.xlu0 %v989
      %v991 = vpop.xlane.xlu0 %990
      %v992 = vsel %vm256, %v932, -inf
      %993 = vmax.xlane.f32.xlu0 %v992
      %v994 = vpop.xlane.xlu0 %993
      %v995 = vsel %vm256, %v935, -inf
      %996 = vmax.xlane.f32.xlu0 %v995
      %v997 = vpop.xlane.xlu0 %996
      %v998 = vsel %vm256, %v940, -inf
      %999 = vmax.xlane.f32.xlu0 %v998
      %v1000 = vpop.xlane.xlu0 %999
      %v1001 = vsel %vm256, %v943, -inf
      %1002 = vmax.xlane.f32.xlu0 %v1001
      %v1003 = vpop.xlane.xlu0 %1002
      %v1004 = vsel %vm256, %v948, -inf
      %1005 = vmax.xlane.f32.xlu0 %v1004
      %v1006 = vpop.xlane.xlu0 %1005
      %v1007 = vsel %vm256, %v951, -inf
      %1008 = vmax.xlane.f32.xlu0 %v1007
      %v1009 = vpop.xlane.xlu0 %1008
      %v1010 = vsel %vm256, %v956, -inf
      %1011 = vmax.xlane.f32.xlu0 %v1010
      %v1012 = vpop.xlane.xlu0 %1011
      %v1013 = vsel %vm256, %v959, -inf
      %1014 = vmax.xlane.f32.xlu0 %v1013
      %v1015 = vpop.xlane.xlu0 %1014
      %v1016 = vsel %vm256, %v964, -inf
      %1017 = vmax.xlane.f32.xlu0 %v1016
      %v1018 = vpop.xlane.xlu0 %1017
      %v1019 = vsel %vm256, %v967, -inf
      %1020 = vmax.xlane.f32.xlu0 %v1019
      %v1021 = vpop.xlane.xlu0 %1020
      %v1022 = vsel %vm256, %v972, -inf
      %1023 = vmax.xlane.f32.xlu0 %v1022
      %v1024 = vpop.xlane.xlu0 %1023
      %v1025 = vsel %vm256, %v975, -inf
      %1026 = vmax.xlane.f32.xlu0 %v1025
      %v1027 = vpop.xlane.xlu0 %1026
      %v1028 = vsel %vm256, %v980, -inf
      %1029 = vmax.xlane.f32.xlu0 %v1028
      %v1030 = vpop.xlane.xlu0 %1029
      %v1031 = vsel %vm256, %v983, -inf
      %1032 = vmax.xlane.f32.xlu0 %v1031
      %v1033 = vpop.xlane.xlu0 %1032
      %s1034 = scalar_lea.vmem %s165, 160
      %v1035 = vld [vmem:[%s1034] sm:$0xff]
      %v1036 = vld [vmem:[%s1034 + $0x8] sm:$0xff]
      %v1037 = vld [vmem:[%s1034 + $0x10] sm:$0xff]
      %v1038 = vld [vmem:[%s1034 + $0x18] sm:$0xff]
      %v1039 = vpack.c.bf16 %v1036, %v1035
      %v1040 = vpack.c.bf16 %v1038, %v1037
      %1041 = vmatprep.subr.bf16.mxu0 0
      %1042 = vmatpush1.bf16.msra.mxu0 %v1039
      %1043 = vmatprep.subr.bf16.mxu0 0
      %1044 = vmatpush1.bf16.msra.mxu0 %v1040
      %1045 = vmatprep.subr.bf16.mxu0 0
      %1046 = vmatpush1.bf16.msra.mxu0 0
      %1047 = vmatprep.subr.bf16.mxu0 0
      %1048 = vmatpush1.bf16.msra.mxu0 0
      %1049 = vmatprep.subr.bf16.mxu0 0
      %1050 = vmatpush1.bf16.msra.mxu0 0
      %1051 = vmatprep.subr.bf16.mxu0 0
      %1052 = vmatpush1.bf16.msra.mxu0 0
      %1053 = vmatprep.subr.bf16.mxu0 0
      %1054 = vmatpush1.bf16.msra.mxu0 0
      %1055 = vmatprep.subr.bf16.mxu0 0
      %1056 = vmatpush1.bf16.msra.mxu0 0
      %1057 = vmatprep.subr.bf16.mxu0 0
      %1058 = vmatpush1.bf16.msra.mxu0 0
      %1059 = vmatprep.subr.bf16.mxu0 0
      %1060 = vmatpush1.bf16.msra.mxu0 0
      %1061 = vmatprep.subr.bf16.mxu0 0
      %1062 = vmatpush1.bf16.msra.mxu0 0
      %1063 = vmatprep.subr.bf16.mxu0 0
      %1064 = vmatpush1.bf16.msra.mxu0 0
      %1065 = vmatprep.subr.bf16.mxu0 0
      %1066 = vmatpush1.bf16.msra.mxu0 0
      %1067 = vmatprep.subr.bf16.mxu0 0
      %1068 = vmatpush1.bf16.msra.mxu0 0
      %1069 = vmatprep.subr.bf16.mxu0 0
      %1070 = vmatpush1.bf16.msra.mxu0 0
      %1071 = vmatprep.subr.bf16.mxu0 0
      %1072 = vmatpush1.bf16.msra.mxu0 0
      %1073 = vmatprep.mubr.bf16.mxu0 0
      %1074 = vmatmul.mubr.bf16.gmra.mrb[0].mxu0 %v258
      %v1075 = vpop.f32.mrb[0].mxu0
      %v1076 = vadd.f32 0.0, %v1075
      %v1077 = vpop.f32.mrb[0].mxu0
      %v1078 = vpop.f32.mrb[0].mxu0
      %v1079 = vadd.f32 0.0, %v1078
      %v1080 = vpop.f32.mrb[0].mxu0
      %1081 = vmatprep.mubr.bf16.mxu0 0
      %1082 = vmatmul.mubr.bf16.gmra.mrb[0].mxu0 %v261
      %v1083 = vpop.f32.mrb[0].mxu0
      %v1084 = vadd.f32 0.0, %v1083
      %v1085 = vpop.f32.mrb[0].mxu0
      %v1086 = vpop.f32.mrb[0].mxu0
      %v1087 = vadd.f32 0.0, %v1086
      %v1088 = vpop.f32.mrb[0].mxu0
      %1089 = vmatprep.mubr.bf16.mxu0 0
      %1090 = vmatmul.mubr.bf16.gmra.mrb[0].mxu0 %v264
      %v1091 = vpop.f32.mrb[0].mxu0
      %v1092 = vadd.f32 0.0, %v1091
      %v1093 = vpop.f32.mrb[0].mxu0
      %v1094 = vpop.f32.mrb[0].mxu0
      %v1095 = vadd.f32 0.0, %v1094
      %v1096 = vpop.f32.mrb[0].mxu0
      %1097 = vmatprep.mubr.bf16.mxu0 0
      %1098 = vmatmul.mubr.bf16.gmra.mrb[0].mxu0 %v267
      %v1099 = vpop.f32.mrb[0].mxu0
      %v1100 = vadd.f32 0.0, %v1099
      %v1101 = vpop.f32.mrb[0].mxu0
      %v1102 = vpop.f32.mrb[0].mxu0
      %v1103 = vadd.f32 0.0, %v1102
      %v1104 = vpop.f32.mrb[0].mxu0
      %1105 = vmatprep.mubr.bf16.mxu0 0
      %1106 = vmatmul.mubr.bf16.gmra.mrb[0].mxu0 %v270
      %v1107 = vpop.f32.mrb[0].mxu0
      %v1108 = vadd.f32 0.0, %v1107
      %v1109 = vpop.f32.mrb[0].mxu0
      %v1110 = vpop.f32.mrb[0].mxu0
      %v1111 = vadd.f32 0.0, %v1110
      %v1112 = vpop.f32.mrb[0].mxu0
      %1113 = vmatprep.mubr.bf16.mxu0 0
      %1114 = vmatmul.mubr.bf16.gmra.mrb[0].mxu0 %v273
      %v1115 = vpop.f32.mrb[0].mxu0
      %v1116 = vadd.f32 0.0, %v1115
      %v1117 = vpop.f32.mrb[0].mxu0
      %v1118 = vpop.f32.mrb[0].mxu0
      %v1119 = vadd.f32 0.0, %v1118
      %v1120 = vpop.f32.mrb[0].mxu0
      %1121 = vmatprep.mubr.bf16.mxu0 0
      %1122 = vmatmul.mubr.bf16.gmra.mrb[0].mxu0 %v276
      %v1123 = vpop.f32.mrb[0].mxu0
      %v1124 = vadd.f32 0.0, %v1123
      %v1125 = vpop.f32.mrb[0].mxu0
      %v1126 = vpop.f32.mrb[0].mxu0
      %v1127 = vadd.f32 0.0, %v1126
      %v1128 = vpop.f32.mrb[0].mxu0
      %1129 = vmatprep.mubr.bf16.mxu0 0
      %1130 = vmatmul.mubr.bf16.gmra.mrb[0].mxu0 %v279
      %v1131 = vpop.f32.mrb[0].mxu0
      %v1132 = vadd.f32 0.0, %v1131
      %v1133 = vpop.f32.mrb[0].mxu0
      %v1134 = vpop.f32.mrb[0].mxu0
      %v1135 = vadd.f32 0.0, %v1134
      %v1136 = vpop.f32.mrb[0].mxu0
      %1137 = vdwg.mxu0
      %v1138 = vsel %vm256, %v1076, -inf
      %1139 = vmax.xlane.f32.xlu0 %v1138
      %v1140 = vpop.xlane.xlu0 %1139
      %v1141 = vsel %vm256, %v1079, -inf
      %1142 = vmax.xlane.f32.xlu0 %v1141
      %v1143 = vpop.xlane.xlu0 %1142
      %v1144 = vsel %vm256, %v1084, -inf
      %1145 = vmax.xlane.f32.xlu0 %v1144
      %v1146 = vpop.xlane.xlu0 %1145
      %v1147 = vsel %vm256, %v1087, -inf
      %1148 = vmax.xlane.f32.xlu0 %v1147
      %v1149 = vpop.xlane.xlu0 %1148
      %v1150 = vsel %vm256, %v1092, -inf
      %1151 = vmax.xlane.f32.xlu0 %v1150
      %v1152 = vpop.xlane.xlu0 %1151
      %v1153 = vsel %vm256, %v1095, -inf
      %1154 = vmax.xlane.f32.xlu0 %v1153
      %v1155 = vpop.xlane.xlu0 %1154
      %v1156 = vsel %vm256, %v1100, -inf
      %1157 = vmax.xlane.f32.xlu0 %v1156
      %v1158 = vpop.xlane.xlu0 %1157
      %v1159 = vsel %vm256, %v1103, -inf
      %1160 = vmax.xlane.f32.xlu0 %v1159
      %v1161 = vpop.xlane.xlu0 %1160
      %v1162 = vsel %vm256, %v1108, -inf
      %1163 = vmax.xlane.f32.xlu0 %v1162
      %v1164 = vpop.xlane.xlu0 %1163
      %v1165 = vsel %vm256, %v1111, -inf
      %1166 = vmax.xlane.f32.xlu0 %v1165
      %v1167 = vpop.xlane.xlu0 %1166
      %v1168 = vsel %vm256, %v1116, -inf
      %1169 = vmax.xlane.f32.xlu0 %v1168
      %v1170 = vpop.xlane.xlu0 %1169
      %v1171 = vsel %vm256, %v1119, -inf
      %1172 = vmax.xlane.f32.xlu0 %v1171
      %v1173 = vpop.xlane.xlu0 %1172
      %v1174 = vsel %vm256, %v1124, -inf
      %1175 = vmax.xlane.f32.xlu0 %v1174
      %v1176 = vpop.xlane.xlu0 %1175
      %v1177 = vsel %vm256, %v1127, -inf
      %1178 = vmax.xlane.f32.xlu0 %v1177
      %v1179 = vpop.xlane.xlu0 %1178
      %v1180 = vsel %vm256, %v1132, -inf
      %1181 = vmax.xlane.f32.xlu0 %v1180
      %v1182 = vpop.xlane.xlu0 %1181
      %v1183 = vsel %vm256, %v1135, -inf
      %1184 = vmax.xlane.f32.xlu0 %v1183
      %v1185 = vpop.xlane.xlu0 %1184
      %vm1186 = vcmask 7168
      %v1187 = vsel %vm1186, %v380, %v532
      %v1188 = vsel %vm1186, %v383, %v535
      %v1189 = vsel %vm1186, %v386, %v538
      %v1190 = vsel %vm1186, %v389, %v541
      %v1191 = vsel %vm1186, %v392, %v544
      %v1192 = vsel %vm1186, %v395, %v547
      %v1193 = vsel %vm1186, %v398, %v550
      %v1194 = vsel %vm1186, %v401, %v553
      %v1195 = vsel %vm1186, %v404, %v556
      %v1196 = vsel %vm1186, %v407, %v559
      %v1197 = vsel %vm1186, %v410, %v562
      %v1198 = vsel %vm1186, %v413, %v565
      %v1199 = vsel %vm1186, %v416, %v568
      %v1200 = vsel %vm1186, %v419, %v571
      %v1201 = vsel %vm1186, %v422, %v574
      %v1202 = vsel %vm1186, %v425, %v577
      %vm1203 = vcmask 15360
      %v1204 = vsel %vm1203, %v1187, %v684
      %v1205 = vsel %vm1203, %v1188, %v687
      %v1206 = vsel %vm1203, %v1189, %v690
      %v1207 = vsel %vm1203, %v1190, %v693
      %v1208 = vsel %vm1203, %v1191, %v696
      %v1209 = vsel %vm1203, %v1192, %v699
      %v1210 = vsel %vm1203, %v1193, %v702
      %v1211 = vsel %vm1203, %v1194, %v705
      %v1212 = vsel %vm1203, %v1195, %v708
      %v1213 = vsel %vm1203, %v1196, %v711
      %v1214 = vsel %vm1203, %v1197, %v714
      %v1215 = vsel %vm1203, %v1198, %v717
      %v1216 = vsel %vm1203, %v1199, %v720
      %v1217 = vsel %vm1203, %v1200, %v723
      %v1218 = vsel %vm1203, %v1201, %v726
      %v1219 = vsel %vm1203, %v1202, %v729
      %vm1220 = vcmask 23552
      %v1221 = vsel %vm1220, %v1204, %v836
      %v1222 = vsel %vm1220, %v1205, %v839
      %v1223 = vsel %vm1220, %v1206, %v842
      %v1224 = vsel %vm1220, %v1207, %v845
      %v1225 = vsel %vm1220, %v1208, %v848
      %v1226 = vsel %vm1220, %v1209, %v851
      %v1227 = vsel %vm1220, %v1210, %v854
      %v1228 = vsel %vm1220, %v1211, %v857
      %v1229 = vsel %vm1220, %v1212, %v860
      %v1230 = vsel %vm1220, %v1213, %v863
      %v1231 = vsel %vm1220, %v1214, %v866
      %v1232 = vsel %vm1220, %v1215, %v869
      %v1233 = vsel %vm1220, %v1216, %v872
      %v1234 = vsel %vm1220, %v1217, %v875
      %v1235 = vsel %vm1220, %v1218, %v878
      %v1236 = vsel %vm1220, %v1219, %v881
      %vm1237 = vcmask 31744
      %v1238 = vsel %vm1237, %v1221, %v988
      %v1239 = vsel %vm1237, %v1222, %v991
      %v1240 = vsel %vm1237, %v1223, %v994
      %v1241 = vsel %vm1237, %v1224, %v997
      %v1242 = vsel %vm1237, %v1225, %v1000
      %v1243 = vsel %vm1237, %v1226, %v1003
      %v1244 = vsel %vm1237, %v1227, %v1006
      %v1245 = vsel %vm1237, %v1228, %v1009
      %v1246 = vsel %vm1237, %v1229, %v1012
      %v1247 = vsel %vm1237, %v1230, %v1015
      %v1248 = vsel %vm1237, %v1231, %v1018
      %v1249 = vsel %vm1237, %v1232, %v1021
      %v1250 = vsel %vm1237, %v1233, %v1024
      %v1251 = vsel %vm1237, %v1234, %v1027
      %v1252 = vsel %vm1237, %v1235, %v1030
      %v1253 = vsel %vm1237, %v1236, %v1033
      %vm1254 = vcmask 39936
      %v1255 = vsel %vm1254, %v1238, %v1140
      %v1256 = vsel %vm1254, %v1239, %v1143
      %v1257 = vsel %vm1254, %v1240, %v1146
      %v1258 = vsel %vm1254, %v1241, %v1149
      %v1259 = vsel %vm1254, %v1242, %v1152
      %v1260 = vsel %vm1254, %v1243, %v1155
      %v1261 = vsel %vm1254, %v1244, %v1158
      %v1262 = vsel %vm1254, %v1245, %v1161
      %v1263 = vsel %vm1254, %v1246, %v1164
      %v1264 = vsel %vm1254, %v1247, %v1167
      %v1265 = vsel %vm1254, %v1248, %v1170
      %v1266 = vsel %vm1254, %v1249, %v1173
      %v1267 = vsel %vm1254, %v1250, %v1176
      %v1268 = vsel %vm1254, %v1251, %v1179
      %v1269 = vsel %vm1254, %v1252, %v1182
      %v1270 = vsel %vm1254, %v1253, %v1185
      %v1271 = vld [vmem:[#allocation2] sm:$0xff]
      %v1272 = vld [vmem:[#allocation2 + $0x8] sm:$0xff]
      %v1273 = vld [vmem:[#allocation2 + $0x10] sm:$0xff]
      %v1274 = vld [vmem:[#allocation2 + $0x18] sm:$0xff]
      %v1275 = vld [vmem:[#allocation2 + $0x20] sm:$0xff]
      %v1276 = vld [vmem:[#allocation2 + $0x28] sm:$0xff]
      %v1277 = vld [vmem:[#allocation2 + $0x30] sm:$0xff]
      %v1278 = vld [vmem:[#allocation2 + $0x38] sm:$0xff]
      %v1279 = vld [vmem:[#allocation2 + $0x40] sm:$0xff]
      %v1280 = vld [vmem:[#allocation2 + $0x48] sm:$0xff]
      %v1281 = vld [vmem:[#allocation2 + $0x50] sm:$0xff]
      %v1282 = vld [vmem:[#allocation2 + $0x58] sm:$0xff]
      %v1283 = vld [vmem:[#allocation2 + $0x60] sm:$0xff]
      %v1284 = vld [vmem:[#allocation2 + $0x68] sm:$0xff]
      %v1285 = vld [vmem:[#allocation2 + $0x70] sm:$0xff]
      %v1286 = vld [vmem:[#allocation2 + $0x78] sm:$0xff]
      %v1287 = vmax.f32 %v1271, %v1255
      %v1288 = vmax.f32 %v1272, %v1256
      %v1289 = vmax.f32 %v1273, %v1257
      %v1290 = vmax.f32 %v1274, %v1258
      %v1291 = vmax.f32 %v1275, %v1259
      %v1292 = vmax.f32 %v1276, %v1260
      %v1293 = vmax.f32 %v1277, %v1261
      %v1294 = vmax.f32 %v1278, %v1262
      %v1295 = vmax.f32 %v1279, %v1263
      %v1296 = vmax.f32 %v1280, %v1264
      %v1297 = vmax.f32 %v1281, %v1265
      %v1298 = vmax.f32 %v1282, %v1266
      %v1299 = vmax.f32 %v1283, %v1267
      %v1300 = vmax.f32 %v1284, %v1268
      %v1301 = vmax.f32 %v1285, %v1269
      %v1302 = vmax.f32 %v1286, %v1270
      %vm1303 = vcmask 48128
      %1304 = vst.msk [vmem:[#allocation2] sm:$0xff] %vm1303, %v1287
      %1305 = vst.msk [vmem:[#allocation2 + $0x8] sm:$0xff] %vm1303, %v1288
      %1306 = vst.msk [vmem:[#allocation2 + $0x10] sm:$0xff] %vm1303, %v1289
      %1307 = vst.msk [vmem:[#allocation2 + $0x18] sm:$0xff] %vm1303, %v1290
      %1308 = vst.msk [vmem:[#allocation2 + $0x20] sm:$0xff] %vm1303, %v1291
      %1309 = vst.msk [vmem:[#allocation2 + $0x28] sm:$0xff] %vm1303, %v1292
      %1310 = vst.msk [vmem:[#allocation2 + $0x30] sm:$0xff] %vm1303, %v1293
      %1311 = vst.msk [vmem:[#allocation2 + $0x38] sm:$0xff] %vm1303, %v1294
      %1312 = vst.msk [vmem:[#allocation2 + $0x40] sm:$0xff] %vm1303, %v1295
      %1313 = vst.msk [vmem:[#allocation2 + $0x48] sm:$0xff] %vm1303, %v1296
      %1314 = vst.msk [vmem:[#allocation2 + $0x50] sm:$0xff] %vm1303, %v1297
      %1315 = vst.msk [vmem:[#allocation2 + $0x58] sm:$0xff] %vm1303, %v1298
      %1316 = vst.msk [vmem:[#allocation2 + $0x60] sm:$0xff] %vm1303, %v1299
      %1317 = vst.msk [vmem:[#allocation2 + $0x68] sm:$0xff] %vm1303, %v1300
      %1318 = vst.msk [vmem:[#allocation2 + $0x70] sm:$0xff] %vm1303, %v1301
      %1319 = vst.msk [vmem:[#allocation2 + $0x78] sm:$0xff] %vm1303, %v1302
      // Predicated region
      $region33: #{concat_predictor_encoder.3} parent=27 // pred_check
        %p1320 = pneg %p173
      $region34: #{concat_predictor_encoder.3} parent=27 // pred_check_branch
        %1322 = sbr.rel (%p1320) target = $region36
      $region35: #{concat_predictor_encoder.3} parent=27 // pred_region
        %v1323 = vld [vmem:[#allocation2] sm:$0xff]
        %v1324 = vld [vmem:[#allocation2 + $0x8] sm:$0xff]
        %v1325 = vld [vmem:[#allocation2 + $0x10] sm:$0xff]
        %v1326 = vld [vmem:[#allocation2 + $0x18] sm:$0xff]
        %v1327 = vld [vmem:[#allocation2 + $0x20] sm:$0xff]
        %v1328 = vld [vmem:[#allocation2 + $0x28] sm:$0xff]
        %v1329 = vld [vmem:[#allocation2 + $0x30] sm:$0xff]
        %v1330 = vld [vmem:[#allocation2 + $0x38] sm:$0xff]
        %v1331 = vld [vmem:[#allocation2 + $0x40] sm:$0xff]
        %v1332 = vld [vmem:[#allocation2 + $0x48] sm:$0xff]
        %v1333 = vld [vmem:[#allocation2 + $0x50] sm:$0xff]
        %v1334 = vld [vmem:[#allocation2 + $0x58] sm:$0xff]
        %v1335 = vld [vmem:[#allocation2 + $0x60] sm:$0xff]
        %v1336 = vld [vmem:[#allocation2 + $0x68] sm:$0xff]
        %v1337 = vld [vmem:[#allocation2 + $0x70] sm:$0xff]
        %v1338 = vld [vmem:[#allocation2 + $0x78] sm:$0xff]
        %1339 = vst.msk [vmem:[%s171] sm:$0xff] %vm1303, %v1323
        %1340 = vst.msk [vmem:[%s171 + $0x8] sm:$0xff] %vm1303, %v1324
        %1341 = vst.msk [vmem:[%s171 + $0x10] sm:$0xff] %vm1303, %v1325
        %1342 = vst.msk [vmem:[%s171 + $0x18] sm:$0xff] %vm1303, %v1326
        %1343 = vst.msk [vmem:[%s171 + $0x20] sm:$0xff] %vm1303, %v1327
        %1344 = vst.msk [vmem:[%s171 + $0x28] sm:$0xff] %vm1303, %v1328
        %1345 = vst.msk [vmem:[%s171 + $0x30] sm:$0xff] %vm1303, %v1329
        %1346 = vst.msk [vmem:[%s171 + $0x38] sm:$0xff] %vm1303, %v1330
        %1347 = vst.msk [vmem:[%s171 + $0x40] sm:$0xff] %vm1303, %v1331
        %1348 = vst.msk [vmem:[%s171 + $0x48] sm:$0xff] %vm1303, %v1332
        %1349 = vst.msk [vmem:[%s171 + $0x50] sm:$0xff] %vm1303, %v1333
        %1350 = vst.msk [vmem:[%s171 + $0x58] sm:$0xff] %vm1303, %v1334
        %1351 = vst.msk [vmem:[%s171 + $0x60] sm:$0xff] %vm1303, %v1335
        %1352 = vst.msk [vmem:[%s171 + $0x68] sm:$0xff] %vm1303, %v1336
        %1353 = vst.msk [vmem:[%s171 + $0x70] sm:$0xff] %vm1303, %v1337
        %1354 = vst.msk [vmem:[%s171 + $0x78] sm:$0xff] %vm1303, %v1338
      $region36: #{concat_predictor_encoder.3} parent=27 // pred_fallthru
        _
      %p1355 = scmp.lt.s32.totalorder %s17, 1
      %s1356 = scalar_select %p1355, %s17, 1
      %s1357 = smul.addr %s1356, 16
      %s1358 = smul.addr %s1357, 8
      %s1359 = scalar_lea.vmem %s2, %s1358
      // Predicated region
      $region37: #{concat_predictor_encoder.3} parent=27 // pred_check
        %p1360 = pneg %p92
      $region38: #{concat_predictor_encoder.3} parent=27 // pred_check_branch
        %1362 = sbr.rel (%p1360) target = $region40
      $region39: #{concat_predictor_encoder.3} parent=27 // pred_region
        _
      $region40: #{concat_predictor_encoder.3} parent=27 // pred_fallthru
        _
    $region28: #{concat_predictor_encoder.3} parent=5 // pred_fallthru
      _
    %p1363 = scmp.le.s32.totalorder 2, %s8
    // Predicated region
    $region41: #{concat_predictor_encoder.3} parent=5 // pred_check
      %p1364 = pneg %p1363
    $region42: #{concat_predictor_encoder.3} parent=5 // pred_check_branch
      %1366 = sbr.rel (%p1364) target = $region44
    $region43: #{concat_predictor_encoder.3} parent=5 // pred_region
      %s1367 = ssub.s32 %s8, 2
      // Predicated region
      $region45: #{concat_predictor_encoder.3} parent=43 // pred_check
        %p1368 = pneg %p98
      $region46: #{concat_predictor_encoder.3} parent=43 // pred_check_branch
        %1370 = sbr.rel (%p1368) target = $region48
      $region47: #{concat_predictor_encoder.3} parent=43 // pred_region
        %p1371 = scmp.lt.s32.totalorder %s19, 1
        %s1372 = scalar_select %p1371, %s19, 1
        %s1373 = smul.addr %s1372, 16
        %s1374 = smul.addr %s1373, 8
        %s1375 = scalar_lea.vmem %s2, %s1374
      $region48: #{concat_predictor_encoder.3} parent=43 // pred_fallthru
        _
    $region44: #{concat_predictor_encoder.3} parent=5 // pred_fallthru
      _
  $region6: #{concat_predictor_encoder.3} parent=0 // loop_footer
    %s12 = sadd.s32 1, %s8
  $region7: #{concat_predictor_encoder.3} parent=0 // loop_footer_branch
    %7 = sbr.rel target = $region3
  $region8: #{concat_predictor_encoder.3} parent=0 // loop_exit
    _

// kernel: concat_predictor_encoder.2
$region0: #{concat_predictor_encoder.2}
  #allocation0 [shape = 'u32[]', space=smem, size = 0x4, offset = 0x4, fixed_abs, tag = 'smem constant byte address 0x4 - core index']
  #allocation1 [shape = 'u32[144,128]{1,0:T(1,128)}', space=vmem, size = 0x12000, scoped, tag = 'internal scratch']
  #allocation2 [shape = 'f32[128,6]{1,0:T(8,128)}', space=vmem, size = 0x10000, scoped, tag = 'scratch operand']
  %s0 = inlined_call_operand.hbm [shape: f32[12,32,48], index: 0, kind: input, shape index: {}]
  %s1 = inlined_call_operand.vmem [shape: bf16[128,32], index: 1, kind: input, shape index: {}]
  %s2 = inlined_call_operand.vmem [shape: f32[2,128,6], index: 2, kind: output, shape index: {}]
  %s3 = sld [smem:[#allocation0]]
  $region53: #{concat_predictor_encoder.2} parent=0
    _
  %s5 = ssub.s32 1, %s3
  %s6 = scalar_select 0, %s5, %s3
  $region1: #{concat_predictor_encoder.2} parent=0
    #allocation3 [shape = 'u8[196608]{0}', space=vmem, size = 0x30000, scoped, tag = 'input window, operand 0']
    #allocation4 [shape = 's32[2]{0}', space=sflag, size = 0x8, scoped, tag = 'scoped memory for concat_predictor_encoder.2']
    %7 = vsyncpa [#allocation4], 0
    %s8 = scalar_lea.sflag [#allocation4], 1
    %9 = vsyncpa %s8, 0
    loop: start=0, step=1, limit=4
    $region2: #{concat_predictor_encoder.2} parent=1 // loop_pre_header
      _
    $region3: #{concat_predictor_encoder.2} parent=1 // loop_header
      %s11 = sphi 0, %s15
      %p12 = scmp.ge.s32.totalorder %s11, 4
      %s18 = sphi 0, %s30
      %s19 = sphi 0, %s26
      %s20 = sphi 0, %s18
      %s21 = sphi 0, %s19
      %s22 = sphi 0, %s20
      %s23 = sphi 0, %s21
      %s35 = sphi 0, %s37
      %s38 = sphi 0, %s35
      %s39 = sphi 0, %s38
      %s55 = sphi 0, %s39
      %s59 = sphi 0, %s59
      %s61 = sphi 0, %s59
      %s62 = sphi 0, %s61
      %s76 = sphi 0, %s62
      %s82 = sphi 0, %s84
      %s85 = sphi 0, %s82
      %s86 = sphi 0, %s85
      %s102 = sphi 0, %s86
    $region4: #{concat_predictor_encoder.2} parent=1 // loop_header_branch
      %14 = sbr.rel (%p12) target = $region8
    $region5: #{concat_predictor_encoder.2} parent=1 // loop_body
      %s16 = ssub.s32 %s11, 1
      %s17 = ssub.s32 %s11, 2
      %s24 = sadd.s32 1, %s19
      %p25 = scmp.ge.s32.totalorder %s24, 1
      %s26 = scalar_select %p25, 0, %s24
      %s27 = sadd.s32 1, %s18
      %s28 = scalar_select %p25, %s27, %s18
      %p29 = scmp.ge.s32.totalorder %s28, 2
      %s30 = scalar_select %p29, 0, %s28
      %s31 = ssub.s32 %s18, %s30
      %s32 = ssub.s32 %s19, %s26
      %s33 = sor.u32 %s31, %s32
      %p34 = scmp.eq.s32.totalorder %s33, 0
      %s36 = sadd.s32 %s35, 1
      %s37 = scalar_select %p34, %s35, %s36
      %p40 = pneg %p34
      %p41 = scmp.eq.s32.totalorder %s11, 1
      %p42 = por %p40, %p41
      %p43 = scmp.ne.s32.totalorder %s35, %s38
      %p44 = scmp.eq.s32.totalorder %s11, 0
      %p45 = por %p43, %p44
      %p46 = scmp.ne.s32.totalorder %s35, %s38
      %p47 = scmp.eq.s32.totalorder %s16, 1
      %p48 = por %p46, %p47
      %p49 = scmp.ne.s32.totalorder %s38, %s39
      %p50 = scmp.eq.s32.totalorder %s16, 0
      %p51 = por %p49, %p50
      %p52 = scmp.ne.s32.totalorder %s38, %s39
      %p53 = scmp.eq.s32.totalorder %s17, 1
      %p54 = por %p52, %p53
      %p56 = scmp.ne.s32.totalorder %s39, %s55
      %p57 = scmp.eq.s32.totalorder %s17, 0
      %p58 = por %p56, %p57
      %s60 = sadd.s32 %s59, 1
      %p63 = scmp.eq.s32.totalorder %s11, 1
      %p64 = scmp.ne.s32.totalorder %s59, %s61
      %p65 = scmp.eq.s32.totalorder %s11, 0
      %p66 = por %p64, %p65
      %p67 = scmp.ne.s32.totalorder %s59, %s61
      %p68 = scmp.eq.s32.totalorder %s16, 1
      %p69 = por %p67, %p68
      %p70 = scmp.ne.s32.totalorder %s61, %s62
      %p71 = scmp.eq.s32.totalorder %s16, 0
      %p72 = por %p70, %p71
      %p73 = scmp.ne.s32.totalorder %s61, %s62
      %p74 = scmp.eq.s32.totalorder %s17, 1
      %p75 = por %p73, %p74
      %p77 = scmp.ne.s32.totalorder %s62, %s76
      %p78 = scmp.eq.s32.totalorder %s17, 0
      %p79 = por %p77, %p78
      %s80 = ssub.s32 %s18, %s30
      %p81 = scmp.eq.s32.totalorder %s80, 0
      %s83 = sadd.s32 %s82, 1
      %s84 = scalar_select %p81, %s82, %s83
      %p87 = pneg %p81
      %p88 = scmp.eq.s32.totalorder %s11, 1
      %p89 = por %p87, %p88
      %p90 = scmp.ne.s32.totalorder %s82, %s85
      %p91 = scmp.eq.s32.totalorder %s11, 0
      %p92 = por %p90, %p91
      %p93 = scmp.ne.s32.totalorder %s82, %s85
      %p94 = scmp.eq.s32.totalorder %s16, 1
      %p95 = por %p93, %p94
      %p96 = scmp.ne.s32.totalorder %s85, %s86
      %p97 = scmp.eq.s32.totalorder %s16, 0
      %p98 = por %p96, %p97
      %p99 = scmp.ne.s32.totalorder %s85, %s86
      %p100 = scmp.eq.s32.totalorder %s17, 1
      %p101 = por %p99, %p100
      %p103 = scmp.ne.s32.totalorder %s86, %s102
      %p104 = scmp.eq.s32.totalorder %s17, 0
      %p105 = por %p103, %p104
      %p106 = scmp.le.s32.totalorder 1, %s11
      %p107 = scmp.lt.s32.totalorder %s11, 3
      %p108 = pnand %p106, %p107
      %p109 = pneg %p108
      // Predicated region
      $region9: #{concat_predictor_encoder.2} parent=5 // pred_check
        _
      $region10: #{concat_predictor_encoder.2} parent=5 // pred_check_branch
        %111 = sbr.rel (%p108) target = $region12
      $region11: #{concat_predictor_encoder.2} parent=5 // pred_region
        %s112 = ssub.s32 %s11, 1
        // Predicated region
        $region13: #{concat_predictor_encoder.2} parent=11 // pred_check
          %p113 = pneg %p72
        $region14: #{concat_predictor_encoder.2} parent=11 // pred_check_branch
          %115 = sbr.rel (%p113) target = $region16
        $region15: #{concat_predictor_encoder.2} parent=11 // pred_region
          _
        $region16: #{concat_predictor_encoder.2} parent=11 // pred_fallthru
          _
      $region12: #{concat_predictor_encoder.2} parent=5 // pred_fallthru
        _
      %p116 = scmp.lt.s32.totalorder %s11, 2
      // Predicated region
      $region17: #{concat_predictor_encoder.2} parent=5 // pred_check
        %p117 = pneg %p116
      $region18: #{concat_predictor_encoder.2} parent=5 // pred_check_branch
        %119 = sbr.rel (%p117) target = $region20
      $region19: #{concat_predictor_encoder.2} parent=5 // pred_region
        // Predicated region
        $region21: #{concat_predictor_encoder.2} parent=19 // pred_check
          %p120 = pneg %p45
        $region22: #{concat_predictor_encoder.2} parent=19 // pred_check_branch
          %122 = sbr.rel (%p120) target = $region24
        $region23: #{concat_predictor_encoder.2} parent=19 // pred_region
          %s123 = sand.u32 %s35, 1
          %s124 = scalar_lea.sflag [#allocation4], %s123
          %s125 = sand.u32 %s35, 1
          %s126 = smul.addr %s125, 192
          %s127 = scalar_lea.vmem [#allocation3], %s126
          %s128 = smul.u32 6, %s18
          %s130 = ssub.s32 3072, 3072
          %131 = vsyncadd %s124, %s130
          %s132 = smul.addr %s128, 4
          %s133 = sadd.s32 %s19, %s132
          %s134 = smul.addr %s133, 128
          %s135 = scalar_lea.hbm %s0, %s134
          %s136 = sshll.u32 %s127, 4
          %s137 = int_to_ptr.vmem [resolvable:$true] %s136
          %142 = dma.hbm_to_vmem [thread:$0]  %s135, 3072, %s137, %s124, 128, 128, 8
        $region24: #{concat_predictor_encoder.2} parent=19 // pred_fallthru
          _
      $region20: #{concat_predictor_encoder.2} parent=5 // pred_fallthru
        _
      %p143 = scmp.le.s32.totalorder 1, %s11
      %p144 = scmp.lt.s32.totalorder %s11, 3
      %p145 = pnand %p143, %p144
      %p146 = pneg %p145
      // Predicated region
      $region25: #{concat_predictor_encoder.2} parent=5 // pred_check
        _
      $region26: #{concat_predictor_encoder.2} parent=5 // pred_check_branch
        %148 = sbr.rel (%p145) target = $region28
      $region27: #{concat_predictor_encoder.2} parent=5 // pred_region
        %s149 = ssub.s32 %s11, 1
        %s150 = sand.u32 %s38, 1
        %s151 = scalar_lea.sflag [#allocation4], %s150
        %s152 = sand.u32 %s38, 1
        %s153 = smul.addr %s152, 192
        %s154 = scalar_lea.vmem [#allocation3], %s153
        // Predicated region
        $region29: #{concat_predictor_encoder.2} parent=27 // pred_check
          %p155 = pneg %p51
        $region30: #{concat_predictor_encoder.2} parent=27 // pred_check_branch
          %157 = sbr.rel (%p155) target = $region32
        $region31: #{concat_predictor_encoder.2} parent=27 // pred_region
          %158 = dma.done %s151, 3072
        $region32: #{concat_predictor_encoder.2} parent=27 // pred_fallthru
          _
        %s159 = sand.u32 %s38, 1
        %s160 = scalar_lea.sflag [#allocation4], %s159
        %s161 = sand.u32 %s38, 1
        %s162 = smul.addr %s161, 192
        %s163 = scalar_lea.vmem [#allocation3], %s162
        %p164 = pneg %p51
        %p165 = pneg %p48
        %p166 = pneg %p72
        %p167 = pneg %p69
        %p168 = pneg %p98
        %p169 = pneg %p95
        %p170 = scmp.lt.s32.totalorder %s20, 1
        %s171 = scalar_select %p170, %s20, 1
        %s172 = smul.addr %s171, 16
        %s173 = smul.addr %s172, 8
        %s174 = scalar_lea.vmem %s2, %s173
        %s175 = smul.u32 6, %s20
        %p176 = scmp.lt.s32.totalorder %s20, 1
        %s177 = scalar_select %p176, %s20, 1
        %s178 = smul.addr %s177, 16
        %s179 = smul.addr %s178, 8
        %s180 = scalar_lea.vmem %s2, %s179
        %p182 = scmp.eq.s32.totalorder %s21, 0
        // Predicated region
        $region33: #{concat_predictor_encoder.2} parent=27 // pred_check
          %p183 = pneg %p182
        $region34: #{concat_predictor_encoder.2} parent=27 // pred_check_branch
          %185 = sbr.rel (%p183) target = $region36
        $region35: #{concat_predictor_encoder.2} parent=27 // pred_region
          %vm186 = vcmask 48128
          %187 = vst.msk [vmem:[#allocation2] sm:$0xff] %vm186, -inf
          %188 = vst.msk [vmem:[#allocation2 + $0x8] sm:$0xff] %vm186, -inf
          %189 = vst.msk [vmem:[#allocation2 + $0x10] sm:$0xff] %vm186, -inf
          %190 = vst.msk [vmem:[#allocation2 + $0x18] sm:$0xff] %vm186, -inf
          %191 = vst.msk [vmem:[#allocation2 + $0x20] sm:$0xff] %vm186, -inf
          %192 = vst.msk [vmem:[#allocation2 + $0x28] sm:$0xff] %vm186, -inf
          %193 = vst.msk [vmem:[#allocation2 + $0x30] sm:$0xff] %vm186, -inf
          %194 = vst.msk [vmem:[#allocation2 + $0x38] sm:$0xff] %vm186, -inf
          %195 = vst.msk [vmem:[#allocation2 + $0x40] sm:$0xff] %vm186, -inf
          %196 = vst.msk [vmem:[#allocation2 + $0x48] sm:$0xff] %vm186, -inf
          %197 = vst.msk [vmem:[#allocation2 + $0x50] sm:$0xff] %vm186, -inf
          %198 = vst.msk [vmem:[#allocation2 + $0x58] sm:$0xff] %vm186, -inf
          %199 = vst.msk [vmem:[#allocation2 + $0x60] sm:$0xff] %vm186, -inf
          %200 = vst.msk [vmem:[#allocation2 + $0x68] sm:$0xff] %vm186, -inf
          %201 = vst.msk [vmem:[#allocation2 + $0x70] sm:$0xff] %vm186, -inf
          %202 = vst.msk [vmem:[#allocation2 + $0x78] sm:$0xff] %vm186, -inf
        $region36: #{concat_predictor_encoder.2} parent=27 // pred_fallthru
          _
        %v203 = vld [vmem:[%s1] sm:$0xf]
        %v204 = vld [vmem:[%s1 + $0x4] sm:$0xf]
        %v205 = vld [vmem:[%s1 + $0x8] sm:$0xf]
        %v206 = vld [vmem:[%s1 + $0xc] sm:$0xf]
        %v207 = vld [vmem:[%s1 + $0x10] sm:$0xf]
        %v208 = vld [vmem:[%s1 + $0x14] sm:$0xf]
        %v209 = vld [vmem:[%s1 + $0x18] sm:$0xf]
        %v210 = vld [vmem:[%s1 + $0x1c] sm:$0xf]
        %v211 = vld [vmem:[%s1 + $0x20] sm:$0xf]
        %v212 = vld [vmem:[%s1 + $0x24] sm:$0xf]
        %v213 = vld [vmem:[%s1 + $0x28] sm:$0xf]
        %v214 = vld [vmem:[%s1 + $0x2c] sm:$0xf]
        %v215 = vld [vmem:[%s1 + $0x30] sm:$0xf]
        %v216 = vld [vmem:[%s1 + $0x34] sm:$0xf]
        %v217 = vld [vmem:[%s1 + $0x38] sm:$0xf]
        %v218 = vld [vmem:[%s1 + $0x3c] sm:$0xf]
        %v219 = vld [vmem:[%s154] sm:$0xff]
        %v220 = vld [vmem:[%s154 + $0x8] sm:$0xff]
        %v221 = vld [vmem:[%s154 + $0x10] sm:$0xff]
        %v222 = vld [vmem:[%s154 + $0x18] sm:$0xff]
        %v223 = vpack.c.bf16 %v220, %v219
        %v224 = vpack.c.bf16 %v222, %v221
        %v241 = vunpack.c.l.b16 %v203
        %v242 = vunpack.c.l.b16 %v204
        %v243 = vunpack.c.l.b16 %v205
        %v244 = vunpack.c.l.b16 %v206
        %v245 = vunpack.c.l.b16 %v207
        %v246 = vunpack.c.l.b16 %v208
        %v247 = vunpack.c.l.b16 %v209
        %v248 = vunpack.c.l.b16 %v210
        %v249 = vunpack.c.l.b16 %v211
        %v250 = vunpack.c.l.b16 %v212
        %v251 = vunpack.c.l.b16 %v213
        %v252 = vunpack.c.l.b16 %v214
        %v253 = vunpack.c.l.b16 %v215
        %v254 = vunpack.c.l.b16 %v216
        %v255 = vunpack.c.l.b16 %v217
        %v256 = vunpack.c.l.b16 %v218
        %v257 = vpack.c.b16 %v242, %v241
        %v258 = vpack.c.b16 %v244, %v243
        %v259 = vpack.c.b16 %v246, %v245
        %v260 = vpack.c.b16 %v248, %v247
        %v261 = vpack.c.b16 %v250, %v249
        %v262 = vpack.c.b16 %v252, %v251
        %v263 = vpack.c.b16 %v254, %v253
        %v264 = vpack.c.b16 %v256, %v255
        %vm265 = vcmask 261120
        %v267 = vsel %vm265, %v257, 0
        %v270 = vsel %vm265, %v258, 0
        %v273 = vsel %vm265, %v259, 0
        %v276 = vsel %vm265, %v260, 0
        %v279 = vsel %vm265, %v261, 0
        %v282 = vsel %vm265, %v262, 0
        %v285 = vsel %vm265, %v263, 0
        %v288 = vsel %vm265, %v264, 0
        %290 = vmatprep.subr.bf16.mxu0 0
        %291 = vmatpush1.bf16.msra.mxu0 %v223
        %292 = vmatprep.subr.bf16.mxu0 0
        %293 = vmatpush1.bf16.msra.mxu0 %v224
        %294 = vmatprep.subr.bf16.mxu0 0
        %295 = vmatpush1.bf16.msra.mxu0 0
        %296 = vmatprep.subr.bf16.mxu0 0
        %297 = vmatpush1.bf16.msra.mxu0 0
        %298 = vmatprep.subr.bf16.mxu0 0
        %299 = vmatpush1.bf16.msra.mxu0 0
        %300 = vmatprep.subr.bf16.mxu0 0
        %301 = vmatpush1.bf16.msra.mxu0 0
        %302 = vmatprep.subr.bf16.mxu0 0
        %303 = vmatpush1.bf16.msra.mxu0 0
        %304 = vmatprep.subr.bf16.mxu0 0
        %305 = vmatpush1.bf16.msra.mxu0 0
        %306 = vmatprep.subr.bf16.mxu0 0
        %307 = vmatpush1.bf16.msra.mxu0 0
        %308 = vmatprep.subr.bf16.mxu0 0
        %309 = vmatpush1.bf16.msra.mxu0 0
        %310 = vmatprep.subr.bf16.mxu0 0
        %311 = vmatpush1.bf16.msra.mxu0 0
        %312 = vmatprep.subr.bf16.mxu0 0
        %313 = vmatpush1.bf16.msra.mxu0 0
        %314 = vmatprep.subr.bf16.mxu0 0
        %315 = vmatpush1.bf16.msra.mxu0 0
        %316 = vmatprep.subr.bf16.mxu0 0
        %317 = vmatpush1.bf16.msra.mxu0 0
        %318 = vmatprep.subr.bf16.mxu0 0
        %319 = vmatpush1.bf16.msra.mxu0 0
        %320 = vmatprep.subr.bf16.mxu0 0
        %321 = vmatpush1.bf16.msra.mxu0 0
        %322 = vmatprep.mubr.bf16.mxu0 0
        %323 = vmatmul.mubr.bf16.gmra.mrb[0].mxu0 %v267
        %v324 = vpop.f32.mrb[0].mxu0
        %v325 = vadd.f32 0.0, %v324
        %v326 = vpop.f32.mrb[0].mxu0
        %v327 = vpop.f32.mrb[0].mxu0
        %v328 = vadd.f32 0.0, %v327
        %v329 = vpop.f32.mrb[0].mxu0
        %330 = vmatprep.mubr.bf16.mxu0 0
        %331 = vmatmul.mubr.bf16.gmra.mrb[0].mxu0 %v270
        %v332 = vpop.f32.mrb[0].mxu0
        %v333 = vadd.f32 0.0, %v332
        %v334 = vpop.f32.mrb[0].mxu0
        %v335 = vpop.f32.mrb[0].mxu0
        %v336 = vadd.f32 0.0, %v335
        %v337 = vpop.f32.mrb[0].mxu0
        %338 = vmatprep.mubr.bf16.mxu0 0
        %339 = vmatmul.mubr.bf16.gmra.mrb[0].mxu0 %v273
        %v340 = vpop.f32.mrb[0].mxu0
        %v341 = vadd.f32 0.0, %v340
        %v342 = vpop.f32.mrb[0].mxu0
        %v343 = vpop.f32.mrb[0].mxu0
        %v344 = vadd.f32 0.0, %v343
        %v345 = vpop.f32.mrb[0].mxu0
        %346 = vmatprep.mubr.bf16.mxu0 0
        %347 = vmatmul.mubr.bf16.gmra.mrb[0].mxu0 %v276
        %v348 = vpop.f32.mrb[0].mxu0
        %v349 = vadd.f32 0.0, %v348
        %v350 = vpop.f32.mrb[0].mxu0
        %v351 = vpop.f32.mrb[0].mxu0
        %v352 = vadd.f32 0.0, %v351
        %v353 = vpop.f32.mrb[0].mxu0
        %354 = vmatprep.mubr.bf16.mxu0 0
        %355 = vmatmul.mubr.bf16.gmra.mrb[0].mxu0 %v279
        %v356 = vpop.f32.mrb[0].mxu0
        %v357 = vadd.f32 0.0, %v356
        %v358 = vpop.f32.mrb[0].mxu0
        %v359 = vpop.f32.mrb[0].mxu0
        %v360 = vadd.f32 0.0, %v359
        %v361 = vpop.f32.mrb[0].mxu0
        %362 = vmatprep.mubr.bf16.mxu0 0
        %363 = vmatmul.mubr.bf16.gmra.mrb[0].mxu0 %v282
        %v364 = vpop.f32.mrb[0].mxu0
        %v365 = vadd.f32 0.0, %v364
        %v366 = vpop.f32.mrb[0].mxu0
        %v367 = vpop.f32.mrb[0].mxu0
        %v368 = vadd.f32 0.0, %v367
        %v369 = vpop.f32.mrb[0].mxu0
        %370 = vmatprep.mubr.bf16.mxu0 0
        %371 = vmatmul.mubr.bf16.gmra.mrb[0].mxu0 %v285
        %v372 = vpop.f32.mrb[0].mxu0
        %v373 = vadd.f32 0.0, %v372
        %v374 = vpop.f32.mrb[0].mxu0
        %v375 = vpop.f32.mrb[0].mxu0
        %v376 = vadd.f32 0.0, %v375
        %v377 = vpop.f32.mrb[0].mxu0
        %378 = vmatprep.mubr.bf16.mxu0 0
        %379 = vmatmul.mubr.bf16.gmra.mrb[0].mxu0 %v288
        %v380 = vpop.f32.mrb[0].mxu0
        %v381 = vadd.f32 0.0, %v380
        %v382 = vpop.f32.mrb[0].mxu0
        %v383 = vpop.f32.mrb[0].mxu0
        %v384 = vadd.f32 0.0, %v383
        %v385 = vpop.f32.mrb[0].mxu0
        %386 = vdwg.mxu0
        %vm387 = vcmask 392192
        %v388 = vsel %vm387, %v325, -inf
        %389 = vmax.xlane.f32.xlu0 %v388
        %v390 = vpop.xlane.xlu0 %389
        %v391 = vsel %vm387, %v328, -inf
        %392 = vmax.xlane.f32.xlu0 %v391
        %v393 = vpop.xlane.xlu0 %392
        %v394 = vsel %vm387, %v333, -inf
        %395 = vmax.xlane.f32.xlu0 %v394
        %v396 = vpop.xlane.xlu0 %395
        %v397 = vsel %vm387, %v336, -inf
        %398 = vmax.xlane.f32.xlu0 %v397
        %v399 = vpop.xlane.xlu0 %398
        %v400 = vsel %vm387, %v341, -inf
        %401 = vmax.xlane.f32.xlu0 %v400
        %v402 = vpop.xlane.xlu0 %401
        %v403 = vsel %vm387, %v344, -inf
        %404 = vmax.xlane.f32.xlu0 %v403
        %v405 = vpop.xlane.xlu0 %404
        %v406 = vsel %vm387, %v349, -inf
        %407 = vmax.xlane.f32.xlu0 %v406
        %v408 = vpop.xlane.xlu0 %407
        %v409 = vsel %vm387, %v352, -inf
        %410 = vmax.xlane.f32.xlu0 %v409
        %v411 = vpop.xlane.xlu0 %410
        %v412 = vsel %vm387, %v357, -inf
        %413 = vmax.xlane.f32.xlu0 %v412
        %v414 = vpop.xlane.xlu0 %413
        %v415 = vsel %vm387, %v360, -inf
        %416 = vmax.xlane.f32.xlu0 %v415
        %v417 = vpop.xlane.xlu0 %416
        %v418 = vsel %vm387, %v365, -inf
        %419 = vmax.xlane.f32.xlu0 %v418
        %v420 = vpop.xlane.xlu0 %419
        %v421 = vsel %vm387, %v368, -inf
        %422 = vmax.xlane.f32.xlu0 %v421
        %v423 = vpop.xlane.xlu0 %422
        %v424 = vsel %vm387, %v373, -inf
        %425 = vmax.xlane.f32.xlu0 %v424
        %v426 = vpop.xlane.xlu0 %425
        %v427 = vsel %vm387, %v376, -inf
        %428 = vmax.xlane.f32.xlu0 %v427
        %v429 = vpop.xlane.xlu0 %428
        %v430 = vsel %vm387, %v381, -inf
        %431 = vmax.xlane.f32.xlu0 %v430
        %v432 = vpop.xlane.xlu0 %431
        %v433 = vsel %vm387, %v384, -inf
        %434 = vmax.xlane.f32.xlu0 %v433
        %v435 = vpop.xlane.xlu0 %434
        %s436 = scalar_lea.vmem %s154, 32 [#allocation3]
        %v437 = vld [vmem:[%s436] sm:$0xff]
        %v438 = vld [vmem:[%s436 + $0x8] sm:$0xff]
        %v439 = vld [vmem:[%s436 + $0x10] sm:$0xff]
        %v440 = vld [vmem:[%s436 + $0x18] sm:$0xff]
        %v441 = vpack.c.bf16 %v438, %v437
        %v442 = vpack.c.bf16 %v440, %v439
        %443 = vmatprep.subr.bf16.mxu0 0
        %444 = vmatpush1.bf16.msra.mxu0 %v441
        %445 = vmatprep.subr.bf16.mxu0 0
        %446 = vmatpush1.bf16.msra.mxu0 %v442
        %447 = vmatprep.subr.bf16.mxu0 0
        %448 = vmatpush1.bf16.msra.mxu0 0
        %449 = vmatprep.subr.bf16.mxu0 0
        %450 = vmatpush1.bf16.msra.mxu0 0
        %451 = vmatprep.subr.bf16.mxu0 0
        %452 = vmatpush1.bf16.msra.mxu0 0
        %453 = vmatprep.subr.bf16.mxu0 0
        %454 = vmatpush1.bf16.msra.mxu0 0
        %455 = vmatprep.subr.bf16.mxu0 0
        %456 = vmatpush1.bf16.msra.mxu0 0
        %457 = vmatprep.subr.bf16.mxu0 0
        %458 = vmatpush1.bf16.msra.mxu0 0
        %459 = vmatprep.subr.bf16.mxu0 0
        %460 = vmatpush1.bf16.msra.mxu0 0
        %461 = vmatprep.subr.bf16.mxu0 0
        %462 = vmatpush1.bf16.msra.mxu0 0
        %463 = vmatprep.subr.bf16.mxu0 0
        %464 = vmatpush1.bf16.msra.mxu0 0
        %465 = vmatprep.subr.bf16.mxu0 0
        %466 = vmatpush1.bf16.msra.mxu0 0
        %467 = vmatprep.subr.bf16.mxu0 0
        %468 = vmatpush1.bf16.msra.mxu0 0
        %469 = vmatprep.subr.bf16.mxu0 0
        %470 = vmatpush1.bf16.msra.mxu0 0
        %471 = vmatprep.subr.bf16.mxu0 0
        %472 = vmatpush1.bf16.msra.mxu0 0
        %473 = vmatprep.subr.bf16.mxu0 0
        %474 = vmatpush1.bf16.msra.mxu0 0
        %475 = vmatprep.mubr.bf16.mxu0 0
        %476 = vmatmul.mubr.bf16.gmra.mrb[0].mxu0 %v267
        %v477 = vpop.f32.mrb[0].mxu0
        %v478 = vadd.f32 0.0, %v477
        %v479 = vpop.f32.mrb[0].mxu0
        %v480 = vpop.f32.mrb[0].mxu0
        %v481 = vadd.f32 0.0, %v480
        %v482 = vpop.f32.mrb[0].mxu0
        %483 = vmatprep.mubr.bf16.mxu0 0
        %484 = vmatmul.mubr.bf16.gmra.mrb[0].mxu0 %v270
        %v485 = vpop.f32.mrb[0].mxu0
        %v486 = vadd.f32 0.0, %v485
        %v487 = vpop.f32.mrb[0].mxu0
        %v488 = vpop.f32.mrb[0].mxu0
        %v489 = vadd.f32 0.0, %v488
        %v490 = vpop.f32.mrb[0].mxu0
        %491 = vmatprep.mubr.bf16.mxu0 0
        %492 = vmatmul.mubr.bf16.gmra.mrb[0].mxu0 %v273
        %v493 = vpop.f32.mrb[0].mxu0
        %v494 = vadd.f32 0.0, %v493
        %v495 = vpop.f32.mrb[0].mxu0
        %v496 = vpop.f32.mrb[0].mxu0
        %v497 = vadd.f32 0.0, %v496
        %v498 = vpop.f32.mrb[0].mxu0
        %499 = vmatprep.mubr.bf16.mxu0 0
        %500 = vmatmul.mubr.bf16.gmra.mrb[0].mxu0 %v276
        %v501 = vpop.f32.mrb[0].mxu0
        %v502 = vadd.f32 0.0, %v501
        %v503 = vpop.f32.mrb[0].mxu0
        %v504 = vpop.f32.mrb[0].mxu0
        %v505 = vadd.f32 0.0, %v504
        %v506 = vpop.f32.mrb[0].mxu0
        %507 = vmatprep.mubr.bf16.mxu0 0
        %508 = vmatmul.mubr.bf16.gmra.mrb[0].mxu0 %v279
        %v509 = vpop.f32.mrb[0].mxu0
        %v510 = vadd.f32 0.0, %v509
        %v511 = vpop.f32.mrb[0].mxu0
        %v512 = vpop.f32.mrb[0].mxu0
        %v513 = vadd.f32 0.0, %v512
        %v514 = vpop.f32.mrb[0].mxu0
        %515 = vmatprep.mubr.bf16.mxu0 0
        %516 = vmatmul.mubr.bf16.gmra.mrb[0].mxu0 %v282
        %v517 = vpop.f32.mrb[0].mxu0
        %v518 = vadd.f32 0.0, %v517
        %v519 = vpop.f32.mrb[0].mxu0
        %v520 = vpop.f32.mrb[0].mxu0
        %v521 = vadd.f32 0.0, %v520
        %v522 = vpop.f32.mrb[0].mxu0
        %523 = vmatprep.mubr.bf16.mxu0 0
        %524 = vmatmul.mubr.bf16.gmra.mrb[0].mxu0 %v285
        %v525 = vpop.f32.mrb[0].mxu0
        %v526 = vadd.f32 0.0, %v525
        %v527 = vpop.f32.mrb[0].mxu0
        %v528 = vpop.f32.mrb[0].mxu0
        %v529 = vadd.f32 0.0, %v528
        %v530 = vpop.f32.mrb[0].mxu0
        %531 = vmatprep.mubr.bf16.mxu0 0
        %532 = vmatmul.mubr.bf16.gmra.mrb[0].mxu0 %v288
        %v533 = vpop.f32.mrb[0].mxu0
        %v534 = vadd.f32 0.0, %v533
        %v535 = vpop.f32.mrb[0].mxu0
        %v536 = vpop.f32.mrb[0].mxu0
        %v537 = vadd.f32 0.0, %v536
        %v538 = vpop.f32.mrb[0].mxu0
        %539 = vdwg.mxu0
        %v540 = vsel %vm387, %v478, -inf
        %541 = vmax.xlane.f32.xlu0 %v540
        %v542 = vpop.xlane.xlu0 %541
        %v543 = vsel %vm387, %v481, -inf
        %544 = vmax.xlane.f32.xlu0 %v543
        %v545 = vpop.xlane.xlu0 %544
        %v546 = vsel %vm387, %v486, -inf
        %547 = vmax.xlane.f32.xlu0 %v546
        %v548 = vpop.xlane.xlu0 %547
        %v549 = vsel %vm387, %v489, -inf
        %550 = vmax.xlane.f32.xlu0 %v549
        %v551 = vpop.xlane.xlu0 %550
        %v552 = vsel %vm387, %v494, -inf
        %553 = vmax.xlane.f32.xlu0 %v552
        %v554 = vpop.xlane.xlu0 %553
        %v555 = vsel %vm387, %v497, -inf
        %556 = vmax.xlane.f32.xlu0 %v555
        %v557 = vpop.xlane.xlu0 %556
        %v558 = vsel %vm387, %v502, -inf
        %559 = vmax.xlane.f32.xlu0 %v558
        %v560 = vpop.xlane.xlu0 %559
        %v561 = vsel %vm387, %v505, -inf
        %562 = vmax.xlane.f32.xlu0 %v561
        %v563 = vpop.xlane.xlu0 %562
        %v564 = vsel %vm387, %v510, -inf
        %565 = vmax.xlane.f32.xlu0 %v564
        %v566 = vpop.xlane.xlu0 %565
        %v567 = vsel %vm387, %v513, -inf
        %568 = vmax.xlane.f32.xlu0 %v567
        %v569 = vpop.xlane.xlu0 %568
        %v570 = vsel %vm387, %v518, -inf
        %571 = vmax.xlane.f32.xlu0 %v570
        %v572 = vpop.xlane.xlu0 %571
        %v573 = vsel %vm387, %v521, -inf
        %574 = vmax.xlane.f32.xlu0 %v573
        %v575 = vpop.xlane.xlu0 %574
        %v576 = vsel %vm387, %v526, -inf
        %577 = vmax.xlane.f32.xlu0 %v576
        %v578 = vpop.xlane.xlu0 %577
        %v579 = vsel %vm387, %v529, -inf
        %580 = vmax.xlane.f32.xlu0 %v579
        %v581 = vpop.xlane.xlu0 %580
        %v582 = vsel %vm387, %v534, -inf
        %583 = vmax.xlane.f32.xlu0 %v582
        %v584 = vpop.xlane.xlu0 %583
        %v585 = vsel %vm387, %v537, -inf
        %586 = vmax.xlane.f32.xlu0 %v585
        %v587 = vpop.xlane.xlu0 %586
        %s588 = scalar_lea.vmem %s154, 64 [#allocation3]
        %v589 = vld [vmem:[%s588] sm:$0xff]
        %v590 = vld [vmem:[%s588 + $0x8] sm:$0xff]
        %v591 = vld [vmem:[%s588 + $0x10] sm:$0xff]
        %v592 = vld [vmem:[%s588 + $0x18] sm:$0xff]
        %v593 = vpack.c.bf16 %v590, %v589
        %v594 = vpack.c.bf16 %v592, %v591
        %595 = vmatprep.subr.bf16.mxu0 0
        %596 = vmatpush1.bf16.msra.mxu0 %v593
        %597 = vmatprep.subr.bf16.mxu0 0
        %598 = vmatpush1.bf16.msra.mxu0 %v594
        %599 = vmatprep.subr.bf16.mxu0 0
        %600 = vmatpush1.bf16.msra.mxu0 0
        %601 = vmatprep.subr.bf16.mxu0 0
        %602 = vmatpush1.bf16.msra.mxu0 0
        %603 = vmatprep.subr.bf16.mxu0 0
        %604 = vmatpush1.bf16.msra.mxu0 0
        %605 = vmatprep.subr.bf16.mxu0 0
        %606 = vmatpush1.bf16.msra.mxu0 0
        %607 = vmatprep.subr.bf16.mxu0 0
        %608 = vmatpush1.bf16.msra.mxu0 0
        %609 = vmatprep.subr.bf16.mxu0 0
        %610 = vmatpush1.bf16.msra.mxu0 0
        %611 = vmatprep.subr.bf16.mxu0 0
        %612 = vmatpush1.bf16.msra.mxu0 0
        %613 = vmatprep.subr.bf16.mxu0 0
        %614 = vmatpush1.bf16.msra.mxu0 0
        %615 = vmatprep.subr.bf16.mxu0 0
        %616 = vmatpush1.bf16.msra.mxu0 0
        %617 = vmatprep.subr.bf16.mxu0 0
        %618 = vmatpush1.bf16.msra.mxu0 0
        %619 = vmatprep.subr.bf16.mxu0 0
        %620 = vmatpush1.bf16.msra.mxu0 0
        %621 = vmatprep.subr.bf16.mxu0 0
        %622 = vmatpush1.bf16.msra.mxu0 0
        %623 = vmatprep.subr.bf16.mxu0 0
        %624 = vmatpush1.bf16.msra.mxu0 0
        %625 = vmatprep.subr.bf16.mxu0 0
        %626 = vmatpush1.bf16.msra.mxu0 0
        %627 = vmatprep.mubr.bf16.mxu0 0
        %628 = vmatmul.mubr.bf16.gmra.mrb[0].mxu0 %v267
        %v629 = vpop.f32.mrb[0].mxu0
        %v630 = vadd.f32 0.0, %v629
        %v631 = vpop.f32.mrb[0].mxu0
        %v632 = vpop.f32.mrb[0].mxu0
        %v633 = vadd.f32 0.0, %v632
        %v634 = vpop.f32.mrb[0].mxu0
        %635 = vmatprep.mubr.bf16.mxu0 0
        %636 = vmatmul.mubr.bf16.gmra.mrb[0].mxu0 %v270
        %v637 = vpop.f32.mrb[0].mxu0
        %v638 = vadd.f32 0.0, %v637
        %v639 = vpop.f32.mrb[0].mxu0
        %v640 = vpop.f32.mrb[0].mxu0
        %v641 = vadd.f32 0.0, %v640
        %v642 = vpop.f32.mrb[0].mxu0
        %643 = vmatprep.mubr.bf16.mxu0 0
        %644 = vmatmul.mubr.bf16.gmra.mrb[0].mxu0 %v273
        %v645 = vpop.f32.mrb[0].mxu0
        %v646 = vadd.f32 0.0, %v645
        %v647 = vpop.f32.mrb[0].mxu0
        %v648 = vpop.f32.mrb[0].mxu0
        %v649 = vadd.f32 0.0, %v648
        %v650 = vpop.f32.mrb[0].mxu0
        %651 = vmatprep.mubr.bf16.mxu0 0
        %652 = vmatmul.mubr.bf16.gmra.mrb[0].mxu0 %v276
        %v653 = vpop.f32.mrb[0].mxu0
        %v654 = vadd.f32 0.0, %v653
        %v655 = vpop.f32.mrb[0].mxu0
        %v656 = vpop.f32.mrb[0].mxu0
        %v657 = vadd.f32 0.0, %v656
        %v658 = vpop.f32.mrb[0].mxu0
        %659 = vmatprep.mubr.bf16.mxu0 0
        %660 = vmatmul.mubr.bf16.gmra.mrb[0].mxu0 %v279
        %v661 = vpop.f32.mrb[0].mxu0
        %v662 = vadd.f32 0.0, %v661
        %v663 = vpop.f32.mrb[0].mxu0
        %v664 = vpop.f32.mrb[0].mxu0
        %v665 = vadd.f32 0.0, %v664
        %v666 = vpop.f32.mrb[0].mxu0
        %667 = vmatprep.mubr.bf16.mxu0 0
        %668 = vmatmul.mubr.bf16.gmra.mrb[0].mxu0 %v282
        %v669 = vpop.f32.mrb[0].mxu0
        %v670 = vadd.f32 0.0, %v669
        %v671 = vpop.f32.mrb[0].mxu0
        %v672 = vpop.f32.mrb[0].mxu0
        %v673 = vadd.f32 0.0, %v672
        %v674 = vpop.f32.mrb[0].mxu0
        %675 = vmatprep.mubr.bf16.mxu0 0
        %676 = vmatmul.mubr.bf16.gmra.mrb[0].mxu0 %v285
        %v677 = vpop.f32.mrb[0].mxu0
        %v678 = vadd.f32 0.0, %v677
        %v679 = vpop.f32.mrb[0].mxu0
        %v680 = vpop.f32.mrb[0].mxu0
        %v681 = vadd.f32 0.0, %v680
        %v682 = vpop.f32.mrb[0].mxu0
        %683 = vmatprep.mubr.bf16.mxu0 0
        %684 = vmatmul.mubr.bf16.gmra.mrb[0].mxu0 %v288
        %v685 = vpop.f32.mrb[0].mxu0
        %v686 = vadd.f32 0.0, %v685
        %v687 = vpop.f32.mrb[0].mxu0
        %v688 = vpop.f32.mrb[0].mxu0
        %v689 = vadd.f32 0.0, %v688
        %v690 = vpop.f32.mrb[0].mxu0
        %691 = vdwg.mxu0
        %v692 = vsel %vm387, %v630, -inf
        %693 = vmax.xlane.f32.xlu0 %v692
        %v694 = vpop.xlane.xlu0 %693
        %v695 = vsel %vm387, %v633, -inf
        %696 = vmax.xlane.f32.xlu0 %v695
        %v697 = vpop.xlane.xlu0 %696
        %v698 = vsel %vm387, %v638, -inf
        %699 = vmax.xlane.f32.xlu0 %v698
        %v700 = vpop.xlane.xlu0 %699
        %v701 = vsel %vm387, %v641, -inf
        %702 = vmax.xlane.f32.xlu0 %v701
        %v703 = vpop.xlane.xlu0 %702
        %v704 = vsel %vm387, %v646, -inf
        %705 = vmax.xlane.f32.xlu0 %v704
        %v706 = vpop.xlane.xlu0 %705
        %v707 = vsel %vm387, %v649, -inf
        %708 = vmax.xlane.f32.xlu0 %v707
        %v709 = vpop.xlane.xlu0 %708
        %v710 = vsel %vm387, %v654, -inf
        %711 = vmax.xlane.f32.xlu0 %v710
        %v712 = vpop.xlane.xlu0 %711
        %v713 = vsel %vm387, %v657, -inf
        %714 = vmax.xlane.f32.xlu0 %v713
        %v715 = vpop.xlane.xlu0 %714
        %v716 = vsel %vm387, %v662, -inf
        %717 = vmax.xlane.f32.xlu0 %v716
        %v718 = vpop.xlane.xlu0 %717
        %v719 = vsel %vm387, %v665, -inf
        %720 = vmax.xlane.f32.xlu0 %v719
        %v721 = vpop.xlane.xlu0 %720
        %v722 = vsel %vm387, %v670, -inf
        %723 = vmax.xlane.f32.xlu0 %v722
        %v724 = vpop.xlane.xlu0 %723
        %v725 = vsel %vm387, %v673, -inf
        %726 = vmax.xlane.f32.xlu0 %v725
        %v727 = vpop.xlane.xlu0 %726
        %v728 = vsel %vm387, %v678, -inf
        %729 = vmax.xlane.f32.xlu0 %v728
        %v730 = vpop.xlane.xlu0 %729
        %v731 = vsel %vm387, %v681, -inf
        %732 = vmax.xlane.f32.xlu0 %v731
        %v733 = vpop.xlane.xlu0 %732
        %v734 = vsel %vm387, %v686, -inf
        %735 = vmax.xlane.f32.xlu0 %v734
        %v736 = vpop.xlane.xlu0 %735
        %v737 = vsel %vm387, %v689, -inf
        %738 = vmax.xlane.f32.xlu0 %v737
        %v739 = vpop.xlane.xlu0 %738
        %s740 = scalar_lea.vmem %s154, 96 [#allocation3]
        %v741 = vld [vmem:[%s740] sm:$0xff]
        %v742 = vld [vmem:[%s740 + $0x8] sm:$0xff]
        %v743 = vld [vmem:[%s740 + $0x10] sm:$0xff]
        %v744 = vld [vmem:[%s740 + $0x18] sm:$0xff]
        %v745 = vpack.c.bf16 %v742, %v741
        %v746 = vpack.c.bf16 %v744, %v743
        %747 = vmatprep.subr.bf16.mxu0 0
        %748 = vmatpush1.bf16.msra.mxu0 %v745
        %749 = vmatprep.subr.bf16.mxu0 0
        %750 = vmatpush1.bf16.msra.mxu0 %v746
        %751 = vmatprep.subr.bf16.mxu0 0
        %752 = vmatpush1.bf16.msra.mxu0 0
        %753 = vmatprep.subr.bf16.mxu0 0
        %754 = vmatpush1.bf16.msra.mxu0 0
        %755 = vmatprep.subr.bf16.mxu0 0
        %756 = vmatpush1.bf16.msra.mxu0 0
        %757 = vmatprep.subr.bf16.mxu0 0
        %758 = vmatpush1.bf16.msra.mxu0 0
        %759 = vmatprep.subr.bf16.mxu0 0
        %760 = vmatpush1.bf16.msra.mxu0 0
        %761 = vmatprep.subr.bf16.mxu0 0
        %762 = vmatpush1.bf16.msra.mxu0 0
        %763 = vmatprep.subr.bf16.mxu0 0
        %764 = vmatpush1.bf16.msra.mxu0 0
        %765 = vmatprep.subr.bf16.mxu0 0
        %766 = vmatpush1.bf16.msra.mxu0 0
        %767 = vmatprep.subr.bf16.mxu0 0
        %768 = vmatpush1.bf16.msra.mxu0 0
        %769 = vmatprep.subr.bf16.mxu0 0
        %770 = vmatpush1.bf16.msra.mxu0 0
        %771 = vmatprep.subr.bf16.mxu0 0
        %772 = vmatpush1.bf16.msra.mxu0 0
        %773 = vmatprep.subr.bf16.mxu0 0
        %774 = vmatpush1.bf16.msra.mxu0 0
        %775 = vmatprep.subr.bf16.mxu0 0
        %776 = vmatpush1.bf16.msra.mxu0 0
        %777 = vmatprep.subr.bf16.mxu0 0
        %778 = vmatpush1.bf16.msra.mxu0 0
        %779 = vmatprep.mubr.bf16.mxu0 0
        %780 = vmatmul.mubr.bf16.gmra.mrb[0].mxu0 %v267
        %v781 = vpop.f32.mrb[0].mxu0
        %v782 = vadd.f32 0.0, %v781
        %v783 = vpop.f32.mrb[0].mxu0
        %v784 = vpop.f32.mrb[0].mxu0
        %v785 = vadd.f32 0.0, %v784
        %v786 = vpop.f32.mrb[0].mxu0
        %787 = vmatprep.mubr.bf16.mxu0 0
        %788 = vmatmul.mubr.bf16.gmra.mrb[0].mxu0 %v270
        %v789 = vpop.f32.mrb[0].mxu0
        %v790 = vadd.f32 0.0, %v789
        %v791 = vpop.f32.mrb[0].mxu0
        %v792 = vpop.f32.mrb[0].mxu0
        %v793 = vadd.f32 0.0, %v792
        %v794 = vpop.f32.mrb[0].mxu0
        %795 = vmatprep.mubr.bf16.mxu0 0
        %796 = vmatmul.mubr.bf16.gmra.mrb[0].mxu0 %v273
        %v797 = vpop.f32.mrb[0].mxu0
        %v798 = vadd.f32 0.0, %v797
        %v799 = vpop.f32.mrb[0].mxu0
        %v800 = vpop.f32.mrb[0].mxu0
        %v801 = vadd.f32 0.0, %v800
        %v802 = vpop.f32.mrb[0].mxu0
        %803 = vmatprep.mubr.bf16.mxu0 0
        %804 = vmatmul.mubr.bf16.gmra.mrb[0].mxu0 %v276
        %v805 = vpop.f32.mrb[0].mxu0
        %v806 = vadd.f32 0.0, %v805
        %v807 = vpop.f32.mrb[0].mxu0
        %v808 = vpop.f32.mrb[0].mxu0
        %v809 = vadd.f32 0.0, %v808
        %v810 = vpop.f32.mrb[0].mxu0
        %811 = vmatprep.mubr.bf16.mxu0 0
        %812 = vmatmul.mubr.bf16.gmra.mrb[0].mxu0 %v279
        %v813 = vpop.f32.mrb[0].mxu0
        %v814 = vadd.f32 0.0, %v813
        %v815 = vpop.f32.mrb[0].mxu0
        %v816 = vpop.f32.mrb[0].mxu0
        %v817 = vadd.f32 0.0, %v816
        %v818 = vpop.f32.mrb[0].mxu0
        %819 = vmatprep.mubr.bf16.mxu0 0
        %820 = vmatmul.mubr.bf16.gmra.mrb[0].mxu0 %v282
        %v821 = vpop.f32.mrb[0].mxu0
        %v822 = vadd.f32 0.0, %v821
        %v823 = vpop.f32.mrb[0].mxu0
        %v824 = vpop.f32.mrb[0].mxu0
        %v825 = vadd.f32 0.0, %v824
        %v826 = vpop.f32.mrb[0].mxu0
        %827 = vmatprep.mubr.bf16.mxu0 0
        %828 = vmatmul.mubr.bf16.gmra.mrb[0].mxu0 %v285
        %v829 = vpop.f32.mrb[0].mxu0
        %v830 = vadd.f32 0.0, %v829
        %v831 = vpop.f32.mrb[0].mxu0
        %v832 = vpop.f32.mrb[0].mxu0
        %v833 = vadd.f32 0.0, %v832
        %v834 = vpop.f32.mrb[0].mxu0
        %835 = vmatprep.mubr.bf16.mxu0 0
        %836 = vmatmul.mubr.bf16.gmra.mrb[0].mxu0 %v288
        %v837 = vpop.f32.mrb[0].mxu0
        %v838 = vadd.f32 0.0, %v837
        %v839 = vpop.f32.mrb[0].mxu0
        %v840 = vpop.f32.mrb[0].mxu0
        %v841 = vadd.f32 0.0, %v840
        %v842 = vpop.f32.mrb[0].mxu0
        %843 = vdwg.mxu0
        %v844 = vsel %vm387, %v782, -inf
        %845 = vmax.xlane.f32.xlu0 %v844
        %v846 = vpop.xlane.xlu0 %845
        %v847 = vsel %vm387, %v785, -inf
        %848 = vmax.xlane.f32.xlu0 %v847
        %v849 = vpop.xlane.xlu0 %848
        %v850 = vsel %vm387, %v790, -inf
        %851 = vmax.xlane.f32.xlu0 %v850
        %v852 = vpop.xlane.xlu0 %851
        %v853 = vsel %vm387, %v793, -inf
        %854 = vmax.xlane.f32.xlu0 %v853
        %v855 = vpop.xlane.xlu0 %854
        %v856 = vsel %vm387, %v798, -inf
        %857 = vmax.xlane.f32.xlu0 %v856
        %v858 = vpop.xlane.xlu0 %857
        %v859 = vsel %vm387, %v801, -inf
        %860 = vmax.xlane.f32.xlu0 %v859
        %v861 = vpop.xlane.xlu0 %860
        %v862 = vsel %vm387, %v806, -inf
        %863 = vmax.xlane.f32.xlu0 %v862
        %v864 = vpop.xlane.xlu0 %863
        %v865 = vsel %vm387, %v809, -inf
        %866 = vmax.xlane.f32.xlu0 %v865
        %v867 = vpop.xlane.xlu0 %866
        %v868 = vsel %vm387, %v814, -inf
        %869 = vmax.xlane.f32.xlu0 %v868
        %v870 = vpop.xlane.xlu0 %869
        %v871 = vsel %vm387, %v817, -inf
        %872 = vmax.xlane.f32.xlu0 %v871
        %v873 = vpop.xlane.xlu0 %872
        %v874 = vsel %vm387, %v822, -inf
        %875 = vmax.xlane.f32.xlu0 %v874
        %v876 = vpop.xlane.xlu0 %875
        %v877 = vsel %vm387, %v825, -inf
        %878 = vmax.xlane.f32.xlu0 %v877
        %v879 = vpop.xlane.xlu0 %878
        %v880 = vsel %vm387, %v830, -inf
        %881 = vmax.xlane.f32.xlu0 %v880
        %v882 = vpop.xlane.xlu0 %881
        %v883 = vsel %vm387, %v833, -inf
        %884 = vmax.xlane.f32.xlu0 %v883
        %v885 = vpop.xlane.xlu0 %884
        %v886 = vsel %vm387, %v838, -inf
        %887 = vmax.xlane.f32.xlu0 %v886
        %v888 = vpop.xlane.xlu0 %887
        %v889 = vsel %vm387, %v841, -inf
        %890 = vmax.xlane.f32.xlu0 %v889
        %v891 = vpop.xlane.xlu0 %890
        %s892 = scalar_lea.vmem %s154, 128 [#allocation3]
        %v893 = vld [vmem:[%s892] sm:$0xff]
        %v894 = vld [vmem:[%s892 + $0x8] sm:$0xff]
        %v895 = vld [vmem:[%s892 + $0x10] sm:$0xff]
        %v896 = vld [vmem:[%s892 + $0x18] sm:$0xff]
        %v897 = vpack.c.bf16 %v894, %v893
        %v898 = vpack.c.bf16 %v896, %v895
        %899 = vmatprep.subr.bf16.mxu0 0
        %900 = vmatpush1.bf16.msra.mxu0 %v897
        %901 = vmatprep.subr.bf16.mxu0 0
        %902 = vmatpush1.bf16.msra.mxu0 %v898
        %903 = vmatprep.subr.bf16.mxu0 0
        %904 = vmatpush1.bf16.msra.mxu0 0
        %905 = vmatprep.subr.bf16.mxu0 0
        %906 = vmatpush1.bf16.msra.mxu0 0
        %907 = vmatprep.subr.bf16.mxu0 0
        %908 = vmatpush1.bf16.msra.mxu0 0
        %909 = vmatprep.subr.bf16.mxu0 0
        %910 = vmatpush1.bf16.msra.mxu0 0
        %911 = vmatprep.subr.bf16.mxu0 0
        %912 = vmatpush1.bf16.msra.mxu0 0
        %913 = vmatprep.subr.bf16.mxu0 0
        %914 = vmatpush1.bf16.msra.mxu0 0
        %915 = vmatprep.subr.bf16.mxu0 0
        %916 = vmatpush1.bf16.msra.mxu0 0
        %917 = vmatprep.subr.bf16.mxu0 0
        %918 = vmatpush1.bf16.msra.mxu0 0
        %919 = vmatprep.subr.bf16.mxu0 0
        %920 = vmatpush1.bf16.msra.mxu0 0
        %921 = vmatprep.subr.bf16.mxu0 0
        %922 = vmatpush1.bf16.msra.mxu0 0
        %923 = vmatprep.subr.bf16.mxu0 0
        %924 = vmatpush1.bf16.msra.mxu0 0
        %925 = vmatprep.subr.bf16.mxu0 0
        %926 = vmatpush1.bf16.msra.mxu0 0
        %927 = vmatprep.subr.bf16.mxu0 0
        %928 = vmatpush1.bf16.msra.mxu0 0
        %929 = vmatprep.subr.bf16.mxu0 0
        %930 = vmatpush1.bf16.msra.mxu0 0
        %931 = vmatprep.mubr.bf16.mxu0 0
        %932 = vmatmul.mubr.bf16.gmra.mrb[0].mxu0 %v267
        %v933 = vpop.f32.mrb[0].mxu0
        %v934 = vadd.f32 0.0, %v933
        %v935 = vpop.f32.mrb[0].mxu0
        %v936 = vpop.f32.mrb[0].mxu0
        %v937 = vadd.f32 0.0, %v936
        %v938 = vpop.f32.mrb[0].mxu0
        %939 = vmatprep.mubr.bf16.mxu0 0
        %940 = vmatmul.mubr.bf16.gmra.mrb[0].mxu0 %v270
        %v941 = vpop.f32.mrb[0].mxu0
        %v942 = vadd.f32 0.0, %v941
        %v943 = vpop.f32.mrb[0].mxu0
        %v944 = vpop.f32.mrb[0].mxu0
        %v945 = vadd.f32 0.0, %v944
        %v946 = vpop.f32.mrb[0].mxu0
        %947 = vmatprep.mubr.bf16.mxu0 0
        %948 = vmatmul.mubr.bf16.gmra.mrb[0].mxu0 %v273
        %v949 = vpop.f32.mrb[0].mxu0
        %v950 = vadd.f32 0.0, %v949
        %v951 = vpop.f32.mrb[0].mxu0
        %v952 = vpop.f32.mrb[0].mxu0
        %v953 = vadd.f32 0.0, %v952
        %v954 = vpop.f32.mrb[0].mxu0
        %955 = vmatprep.mubr.bf16.mxu0 0
        %956 = vmatmul.mubr.bf16.gmra.mrb[0].mxu0 %v276
        %v957 = vpop.f32.mrb[0].mxu0
        %v958 = vadd.f32 0.0, %v957
        %v959 = vpop.f32.mrb[0].mxu0
        %v960 = vpop.f32.mrb[0].mxu0
        %v961 = vadd.f32 0.0, %v960
        %v962 = vpop.f32.mrb[0].mxu0
        %963 = vmatprep.mubr.bf16.mxu0 0
        %964 = vmatmul.mubr.bf16.gmra.mrb[0].mxu0 %v279
        %v965 = vpop.f32.mrb[0].mxu0
        %v966 = vadd.f32 0.0, %v965
        %v967 = vpop.f32.mrb[0].mxu0
        %v968 = vpop.f32.mrb[0].mxu0
        %v969 = vadd.f32 0.0, %v968
        %v970 = vpop.f32.mrb[0].mxu0
        %971 = vmatprep.mubr.bf16.mxu0 0
        %972 = vmatmul.mubr.bf16.gmra.mrb[0].mxu0 %v282
        %v973 = vpop.f32.mrb[0].mxu0
        %v974 = vadd.f32 0.0, %v973
        %v975 = vpop.f32.mrb[0].mxu0
        %v976 = vpop.f32.mrb[0].mxu0
        %v977 = vadd.f32 0.0, %v976
        %v978 = vpop.f32.mrb[0].mxu0
        %979 = vmatprep.mubr.bf16.mxu0 0
        %980 = vmatmul.mubr.bf16.gmra.mrb[0].mxu0 %v285
        %v981 = vpop.f32.mrb[0].mxu0
        %v982 = vadd.f32 0.0, %v981
        %v983 = vpop.f32.mrb[0].mxu0
        %v984 = vpop.f32.mrb[0].mxu0
        %v985 = vadd.f32 0.0, %v984
        %v986 = vpop.f32.mrb[0].mxu0
        %987 = vmatprep.mubr.bf16.mxu0 0
        %988 = vmatmul.mubr.bf16.gmra.mrb[0].mxu0 %v288
        %v989 = vpop.f32.mrb[0].mxu0
        %v990 = vadd.f32 0.0, %v989
        %v991 = vpop.f32.mrb[0].mxu0
        %v992 = vpop.f32.mrb[0].mxu0
        %v993 = vadd.f32 0.0, %v992
        %v994 = vpop.f32.mrb[0].mxu0
        %995 = vdwg.mxu0
        %v996 = vsel %vm387, %v934, -inf
        %997 = vmax.xlane.f32.xlu0 %v996
        %v998 = vpop.xlane.xlu0 %997
        %v999 = vsel %vm387, %v937, -inf
        %1000 = vmax.xlane.f32.xlu0 %v999
        %v1001 = vpop.xlane.xlu0 %1000
        %v1002 = vsel %vm387, %v942, -inf
        %1003 = vmax.xlane.f32.xlu0 %v1002
        %v1004 = vpop.xlane.xlu0 %1003
        %v1005 = vsel %vm387, %v945, -inf
        %1006 = vmax.xlane.f32.xlu0 %v1005
        %v1007 = vpop.xlane.xlu0 %1006
        %v1008 = vsel %vm387, %v950, -inf
        %1009 = vmax.xlane.f32.xlu0 %v1008
        %v1010 = vpop.xlane.xlu0 %1009
        %v1011 = vsel %vm387, %v953, -inf
        %1012 = vmax.xlane.f32.xlu0 %v1011
        %v1013 = vpop.xlane.xlu0 %1012
        %v1014 = vsel %vm387, %v958, -inf
        %1015 = vmax.xlane.f32.xlu0 %v1014
        %v1016 = vpop.xlane.xlu0 %1015
        %v1017 = vsel %vm387, %v961, -inf
        %1018 = vmax.xlane.f32.xlu0 %v1017
        %v1019 = vpop.xlane.xlu0 %1018
        %v1020 = vsel %vm387, %v966, -inf
        %1021 = vmax.xlane.f32.xlu0 %v1020
        %v1022 = vpop.xlane.xlu0 %1021
        %v1023 = vsel %vm387, %v969, -inf
        %1024 = vmax.xlane.f32.xlu0 %v1023
        %v1025 = vpop.xlane.xlu0 %1024
        %v1026 = vsel %vm387, %v974, -inf
        %1027 = vmax.xlane.f32.xlu0 %v1026
        %v1028 = vpop.xlane.xlu0 %1027
        %v1029 = vsel %vm387, %v977, -inf
        %1030 = vmax.xlane.f32.xlu0 %v1029
        %v1031 = vpop.xlane.xlu0 %1030
        %v1032 = vsel %vm387, %v982, -inf
        %1033 = vmax.xlane.f32.xlu0 %v1032
        %v1034 = vpop.xlane.xlu0 %1033
        %v1035 = vsel %vm387, %v985, -inf
        %1036 = vmax.xlane.f32.xlu0 %v1035
        %v1037 = vpop.xlane.xlu0 %1036
        %v1038 = vsel %vm387, %v990, -inf
        %1039 = vmax.xlane.f32.xlu0 %v1038
        %v1040 = vpop.xlane.xlu0 %1039
        %v1041 = vsel %vm387, %v993, -inf
        %1042 = vmax.xlane.f32.xlu0 %v1041
        %v1043 = vpop.xlane.xlu0 %1042
        %s1044 = scalar_lea.vmem %s154, 160 [#allocation3]
        %v1045 = vld [vmem:[%s1044] sm:$0xff]
        %v1046 = vld [vmem:[%s1044 + $0x8] sm:$0xff]
        %v1047 = vld [vmem:[%s1044 + $0x10] sm:$0xff]
        %v1048 = vld [vmem:[%s1044 + $0x18] sm:$0xff]
        %v1049 = vpack.c.bf16 %v1046, %v1045
        %v1050 = vpack.c.bf16 %v1048, %v1047
        %1051 = vmatprep.subr.bf16.mxu0 0
        %1052 = vmatpush1.bf16.msra.mxu0 %v1049
        %1053 = vmatprep.subr.bf16.mxu0 0
        %1054 = vmatpush1.bf16.msra.mxu0 %v1050
        %1055 = vmatprep.subr.bf16.mxu0 0
        %1056 = vmatpush1.bf16.msra.mxu0 0
        %1057 = vmatprep.subr.bf16.mxu0 0
        %1058 = vmatpush1.bf16.msra.mxu0 0
        %1059 = vmatprep.subr.bf16.mxu0 0
        %1060 = vmatpush1.bf16.msra.mxu0 0
        %1061 = vmatprep.subr.bf16.mxu0 0
        %1062 = vmatpush1.bf16.msra.mxu0 0
        %1063 = vmatprep.subr.bf16.mxu0 0
        %1064 = vmatpush1.bf16.msra.mxu0 0
        %1065 = vmatprep.subr.bf16.mxu0 0
        %1066 = vmatpush1.bf16.msra.mxu0 0
        %1067 = vmatprep.subr.bf16.mxu0 0
        %1068 = vmatpush1.bf16.msra.mxu0 0
        %1069 = vmatprep.subr.bf16.mxu0 0
        %1070 = vmatpush1.bf16.msra.mxu0 0
        %1071 = vmatprep.subr.bf16.mxu0 0
        %1072 = vmatpush1.bf16.msra.mxu0 0
        %1073 = vmatprep.subr.bf16.mxu0 0
        %1074 = vmatpush1.bf16.msra.mxu0 0
        %1075 = vmatprep.subr.bf16.mxu0 0
        %1076 = vmatpush1.bf16.msra.mxu0 0
        %1077 = vmatprep.subr.bf16.mxu0 0
        %1078 = vmatpush1.bf16.msra.mxu0 0
        %1079 = vmatprep.subr.bf16.mxu0 0
        %1080 = vmatpush1.bf16.msra.mxu0 0
        %1081 = vmatprep.subr.bf16.mxu0 0
        %1082 = vmatpush1.bf16.msra.mxu0 0
        %1083 = vmatprep.mubr.bf16.mxu0 0
        %1084 = vmatmul.mubr.bf16.gmra.mrb[0].mxu0 %v267
        %v1085 = vpop.f32.mrb[0].mxu0
        %v1086 = vadd.f32 0.0, %v1085
        %v1087 = vpop.f32.mrb[0].mxu0
        %v1088 = vpop.f32.mrb[0].mxu0
        %v1089 = vadd.f32 0.0, %v1088
        %v1090 = vpop.f32.mrb[0].mxu0
        %1091 = vmatprep.mubr.bf16.mxu0 0
        %1092 = vmatmul.mubr.bf16.gmra.mrb[0].mxu0 %v270
        %v1093 = vpop.f32.mrb[0].mxu0
        %v1094 = vadd.f32 0.0, %v1093
        %v1095 = vpop.f32.mrb[0].mxu0
        %v1096 = vpop.f32.mrb[0].mxu0
        %v1097 = vadd.f32 0.0, %v1096
        %v1098 = vpop.f32.mrb[0].mxu0
        %1099 = vmatprep.mubr.bf16.mxu0 0
        %1100 = vmatmul.mubr.bf16.gmra.mrb[0].mxu0 %v273
        %v1101 = vpop.f32.mrb[0].mxu0
        %v1102 = vadd.f32 0.0, %v1101
        %v1103 = vpop.f32.mrb[0].mxu0
        %v1104 = vpop.f32.mrb[0].mxu0
        %v1105 = vadd.f32 0.0, %v1104
        %v1106 = vpop.f32.mrb[0].mxu0
        %1107 = vmatprep.mubr.bf16.mxu0 0
        %1108 = vmatmul.mubr.bf16.gmra.mrb[0].mxu0 %v276
        %v1109 = vpop.f32.mrb[0].mxu0
        %v1110 = vadd.f32 0.0, %v1109
        %v1111 = vpop.f32.mrb[0].mxu0
        %v1112 = vpop.f32.mrb[0].mxu0
        %v1113 = vadd.f32 0.0, %v1112
        %v1114 = vpop.f32.mrb[0].mxu0
        %1115 = vmatprep.mubr.bf16.mxu0 0
        %1116 = vmatmul.mubr.bf16.gmra.mrb[0].mxu0 %v279
        %v1117 = vpop.f32.mrb[0].mxu0
        %v1118 = vadd.f32 0.0, %v1117
        %v1119 = vpop.f32.mrb[0].mxu0
        %v1120 = vpop.f32.mrb[0].mxu0
        %v1121 = vadd.f32 0.0, %v1120
        %v1122 = vpop.f32.mrb[0].mxu0
        %1123 = vmatprep.mubr.bf16.mxu0 0
        %1124 = vmatmul.mubr.bf16.gmra.mrb[0].mxu0 %v282
        %v1125 = vpop.f32.mrb[0].mxu0
        %v1126 = vadd.f32 0.0, %v1125
        %v1127 = vpop.f32.mrb[0].mxu0
        %v1128 = vpop.f32.mrb[0].mxu0
        %v1129 = vadd.f32 0.0, %v1128
        %v1130 = vpop.f32.mrb[0].mxu0
        %1131 = vmatprep.mubr.bf16.mxu0 0
        %1132 = vmatmul.mubr.bf16.gmra.mrb[0].mxu0 %v285
        %v1133 = vpop.f32.mrb[0].mxu0
        %v1134 = vadd.f32 0.0, %v1133
        %v1135 = vpop.f32.mrb[0].mxu0
        %v1136 = vpop.f32.mrb[0].mxu0
        %v1137 = vadd.f32 0.0, %v1136
        %v1138 = vpop.f32.mrb[0].mxu0
        %1139 = vmatprep.mubr.bf16.mxu0 0
        %1140 = vmatmul.mubr.bf16.gmra.mrb[0].mxu0 %v288
        %v1141 = vpop.f32.mrb[0].mxu0
        %v1142 = vadd.f32 0.0, %v1141
        %v1143 = vpop.f32.mrb[0].mxu0
        %v1144 = vpop.f32.mrb[0].mxu0
        %v1145 = vadd.f32 0.0, %v1144
        %v1146 = vpop.f32.mrb[0].mxu0
        %1147 = vdwg.mxu0
        %v1148 = vsel %vm387, %v1086, -inf
        %1149 = vmax.xlane.f32.xlu0 %v1148
        %v1150 = vpop.xlane.xlu0 %1149
        %v1151 = vsel %vm387, %v1089, -inf
        %1152 = vmax.xlane.f32.xlu0 %v1151
        %v1153 = vpop.xlane.xlu0 %1152
        %v1154 = vsel %vm387, %v1094, -inf
        %1155 = vmax.xlane.f32.xlu0 %v1154
        %v1156 = vpop.xlane.xlu0 %1155
        %v1157 = vsel %vm387, %v1097, -inf
        %1158 = vmax.xlane.f32.xlu0 %v1157
        %v1159 = vpop.xlane.xlu0 %1158
        %v1160 = vsel %vm387, %v1102, -inf
        %1161 = vmax.xlane.f32.xlu0 %v1160
        %v1162 = vpop.xlane.xlu0 %1161
        %v1163 = vsel %vm387, %v1105, -inf
        %1164 = vmax.xlane.f32.xlu0 %v1163
        %v1165 = vpop.xlane.xlu0 %1164
        %v1166 = vsel %vm387, %v1110, -inf
        %1167 = vmax.xlane.f32.xlu0 %v1166
        %v1168 = vpop.xlane.xlu0 %1167
        %v1169 = vsel %vm387, %v1113, -inf
        %1170 = vmax.xlane.f32.xlu0 %v1169
        %v1171 = vpop.xlane.xlu0 %1170
        %v1172 = vsel %vm387, %v1118, -inf
        %1173 = vmax.xlane.f32.xlu0 %v1172
        %v1174 = vpop.xlane.xlu0 %1173
        %v1175 = vsel %vm387, %v1121, -inf
        %1176 = vmax.xlane.f32.xlu0 %v1175
        %v1177 = vpop.xlane.xlu0 %1176
        %v1178 = vsel %vm387, %v1126, -inf
        %1179 = vmax.xlane.f32.xlu0 %v1178
        %v1180 = vpop.xlane.xlu0 %1179
        %v1181 = vsel %vm387, %v1129, -inf
        %1182 = vmax.xlane.f32.xlu0 %v1181
        %v1183 = vpop.xlane.xlu0 %1182
        %v1184 = vsel %vm387, %v1134, -inf
        %1185 = vmax.xlane.f32.xlu0 %v1184
        %v1186 = vpop.xlane.xlu0 %1185
        %v1187 = vsel %vm387, %v1137, -inf
        %1188 = vmax.xlane.f32.xlu0 %v1187
        %v1189 = vpop.xlane.xlu0 %1188
        %v1190 = vsel %vm387, %v1142, -inf
        %1191 = vmax.xlane.f32.xlu0 %v1190
        %v1192 = vpop.xlane.xlu0 %1191
        %v1193 = vsel %vm387, %v1145, -inf
        %1194 = vmax.xlane.f32.xlu0 %v1193
        %v1195 = vpop.xlane.xlu0 %1194
        %vm1196 = vcmask 7168
        %v1197 = vsel %vm1196, %v390, %v542
        %v1198 = vsel %vm1196, %v393, %v545
        %v1199 = vsel %vm1196, %v396, %v548
        %v1200 = vsel %vm1196, %v399, %v551
        %v1201 = vsel %vm1196, %v402, %v554
        %v1202 = vsel %vm1196, %v405, %v557
        %v1203 = vsel %vm1196, %v408, %v560
        %v1204 = vsel %vm1196, %v411, %v563
        %v1205 = vsel %vm1196, %v414, %v566
        %v1206 = vsel %vm1196, %v417, %v569
        %v1207 = vsel %vm1196, %v420, %v572
        %v1208 = vsel %vm1196, %v423, %v575
        %v1209 = vsel %vm1196, %v426, %v578
        %v1210 = vsel %vm1196, %v429, %v581
        %v1211 = vsel %vm1196, %v432, %v584
        %v1212 = vsel %vm1196, %v435, %v587
        %vm1213 = vcmask 15360
        %v1214 = vsel %vm1213, %v1197, %v694
        %v1215 = vsel %vm1213, %v1198, %v697
        %v1216 = vsel %vm1213, %v1199, %v700
        %v1217 = vsel %vm1213, %v1200, %v703
        %v1218 = vsel %vm1213, %v1201, %v706
        %v1219 = vsel %vm1213, %v1202, %v709
        %v1220 = vsel %vm1213, %v1203, %v712
        %v1221 = vsel %vm1213, %v1204, %v715
        %v1222 = vsel %vm1213, %v1205, %v718
        %v1223 = vsel %vm1213, %v1206, %v721
        %v1224 = vsel %vm1213, %v1207, %v724
        %v1225 = vsel %vm1213, %v1208, %v727
        %v1226 = vsel %vm1213, %v1209, %v730
        %v1227 = vsel %vm1213, %v1210, %v733
        %v1228 = vsel %vm1213, %v1211, %v736
        %v1229 = vsel %vm1213, %v1212, %v739
        %vm1230 = vcmask 23552
        %v1231 = vsel %vm1230, %v1214, %v846
        %v1232 = vsel %vm1230, %v1215, %v849
        %v1233 = vsel %vm1230, %v1216, %v852
        %v1234 = vsel %vm1230, %v1217, %v855
        %v1235 = vsel %vm1230, %v1218, %v858
        %v1236 = vsel %vm1230, %v1219, %v861
        %v1237 = vsel %vm1230, %v1220, %v864
        %v1238 = vsel %vm1230, %v1221, %v867
        %v1239 = vsel %vm1230, %v1222, %v870
        %v1240 = vsel %vm1230, %v1223, %v873
        %v1241 = vsel %vm1230, %v1224, %v876
        %v1242 = vsel %vm1230, %v1225, %v879
        %v1243 = vsel %vm1230, %v1226, %v882
        %v1244 = vsel %vm1230, %v1227, %v885
        %v1245 = vsel %vm1230, %v1228, %v888
        %v1246 = vsel %vm1230, %v1229, %v891
        %vm1247 = vcmask 31744
        %v1248 = vsel %vm1247, %v1231, %v998
        %v1249 = vsel %vm1247, %v1232, %v1001
        %v1250 = vsel %vm1247, %v1233, %v1004
        %v1251 = vsel %vm1247, %v1234, %v1007
        %v1252 = vsel %vm1247, %v1235, %v1010
        %v1253 = vsel %vm1247, %v1236, %v1013
        %v1254 = vsel %vm1247, %v1237, %v1016
        %v1255 = vsel %vm1247, %v1238, %v1019
        %v1256 = vsel %vm1247, %v1239, %v1022
        %v1257 = vsel %vm1247, %v1240, %v1025
        %v1258 = vsel %vm1247, %v1241, %v1028
        %v1259 = vsel %vm1247, %v1242, %v1031
        %v1260 = vsel %vm1247, %v1243, %v1034
        %v1261 = vsel %vm1247, %v1244, %v1037
        %v1262 = vsel %vm1247, %v1245, %v1040
        %v1263 = vsel %vm1247, %v1246, %v1043
        %vm1264 = vcmask 39936
        %v1265 = vsel %vm1264, %v1248, %v1150
        %v1266 = vsel %vm1264, %v1249, %v1153
        %v1267 = vsel %vm1264, %v1250, %v1156
        %v1268 = vsel %vm1264, %v1251, %v1159
        %v1269 = vsel %vm1264, %v1252, %v1162
        %v1270 = vsel %vm1264, %v1253, %v1165
        %v1271 = vsel %vm1264, %v1254, %v1168
        %v1272 = vsel %vm1264, %v1255, %v1171
        %v1273 = vsel %vm1264, %v1256, %v1174
        %v1274 = vsel %vm1264, %v1257, %v1177
        %v1275 = vsel %vm1264, %v1258, %v1180
        %v1276 = vsel %vm1264, %v1259, %v1183
        %v1277 = vsel %vm1264, %v1260, %v1186
        %v1278 = vsel %vm1264, %v1261, %v1189
        %v1279 = vsel %vm1264, %v1262, %v1192
        %v1280 = vsel %vm1264, %v1263, %v1195
        %v1281 = vld [vmem:[#allocation2] sm:$0xff]
        %v1282 = vld [vmem:[#allocation2 + $0x8] sm:$0xff]
        %v1283 = vld [vmem:[#allocation2 + $0x10] sm:$0xff]
        %v1284 = vld [vmem:[#allocation2 + $0x18] sm:$0xff]
        %v1285 = vld [vmem:[#allocation2 + $0x20] sm:$0xff]
        %v1286 = vld [vmem:[#allocation2 + $0x28] sm:$0xff]
        %v1287 = vld [vmem:[#allocation2 + $0x30] sm:$0xff]
        %v1288 = vld [vmem:[#allocation2 + $0x38] sm:$0xff]
        %v1289 = vld [vmem:[#allocation2 + $0x40] sm:$0xff]
        %v1290 = vld [vmem:[#allocation2 + $0x48] sm:$0xff]
        %v1291 = vld [vmem:[#allocation2 + $0x50] sm:$0xff]
        %v1292 = vld [vmem:[#allocation2 + $0x58] sm:$0xff]
        %v1293 = vld [vmem:[#allocation2 + $0x60] sm:$0xff]
        %v1294 = vld [vmem:[#allocation2 + $0x68] sm:$0xff]
        %v1295 = vld [vmem:[#allocation2 + $0x70] sm:$0xff]
        %v1296 = vld [vmem:[#allocation2 + $0x78] sm:$0xff]
        %v1297 = vmax.f32 %v1281, %v1265
        %v1298 = vmax.f32 %v1282, %v1266
        %v1299 = vmax.f32 %v1283, %v1267
        %v1300 = vmax.f32 %v1284, %v1268
        %v1301 = vmax.f32 %v1285, %v1269
        %v1302 = vmax.f32 %v1286, %v1270
        %v1303 = vmax.f32 %v1287, %v1271
        %v1304 = vmax.f32 %v1288, %v1272
        %v1305 = vmax.f32 %v1289, %v1273
        %v1306 = vmax.f32 %v1290, %v1274
        %v1307 = vmax.f32 %v1291, %v1275
        %v1308 = vmax.f32 %v1292, %v1276
        %v1309 = vmax.f32 %v1293, %v1277
        %v1310 = vmax.f32 %v1294, %v1278
        %v1311 = vmax.f32 %v1295, %v1279
        %v1312 = vmax.f32 %v1296, %v1280
        %vm1313 = vcmask 48128
        %1314 = vst.msk [vmem:[#allocation2] sm:$0xff] %vm1313, %v1297
        %1315 = vst.msk [vmem:[#allocation2 + $0x8] sm:$0xff] %vm1313, %v1298
        %1316 = vst.msk [vmem:[#allocation2 + $0x10] sm:$0xff] %vm1313, %v1299
        %1317 = vst.msk [vmem:[#allocation2 + $0x18] sm:$0xff] %vm1313, %v1300
        %1318 = vst.msk [vmem:[#allocation2 + $0x20] sm:$0xff] %vm1313, %v1301
        %1319 = vst.msk [vmem:[#allocation2 + $0x28] sm:$0xff] %vm1313, %v1302
        %1320 = vst.msk [vmem:[#allocation2 + $0x30] sm:$0xff] %vm1313, %v1303
        %1321 = vst.msk [vmem:[#allocation2 + $0x38] sm:$0xff] %vm1313, %v1304
        %1322 = vst.msk [vmem:[#allocation2 + $0x40] sm:$0xff] %vm1313, %v1305
        %1323 = vst.msk [vmem:[#allocation2 + $0x48] sm:$0xff] %vm1313, %v1306
        %1324 = vst.msk [vmem:[#allocation2 + $0x50] sm:$0xff] %vm1313, %v1307
        %1325 = vst.msk [vmem:[#allocation2 + $0x58] sm:$0xff] %vm1313, %v1308
        %1326 = vst.msk [vmem:[#allocation2 + $0x60] sm:$0xff] %vm1313, %v1309
        %1327 = vst.msk [vmem:[#allocation2 + $0x68] sm:$0xff] %vm1313, %v1310
        %1328 = vst.msk [vmem:[#allocation2 + $0x70] sm:$0xff] %vm1313, %v1311
        %1329 = vst.msk [vmem:[#allocation2 + $0x78] sm:$0xff] %vm1313, %v1312
        // Predicated region
        $region37: #{concat_predictor_encoder.2} parent=27 // pred_check
          %p1330 = pneg %p182
        $region38: #{concat_predictor_encoder.2} parent=27 // pred_check_branch
          %1332 = sbr.rel (%p1330) target = $region40
        $region39: #{concat_predictor_encoder.2} parent=27 // pred_region
          %v1333 = vld [vmem:[#allocation2] sm:$0xff]
          %v1334 = vld [vmem:[#allocation2 + $0x8] sm:$0xff]
          %v1335 = vld [vmem:[#allocation2 + $0x10] sm:$0xff]
          %v1336 = vld [vmem:[#allocation2 + $0x18] sm:$0xff]
          %v1337 = vld [vmem:[#allocation2 + $0x20] sm:$0xff]
          %v1338 = vld [vmem:[#allocation2 + $0x28] sm:$0xff]
          %v1339 = vld [vmem:[#allocation2 + $0x30] sm:$0xff]
          %v1340 = vld [vmem:[#allocation2 + $0x38] sm:$0xff]
          %v1341 = vld [vmem:[#allocation2 + $0x40] sm:$0xff]
          %v1342 = vld [vmem:[#allocation2 + $0x48] sm:$0xff]
          %v1343 = vld [vmem:[#allocation2 + $0x50] sm:$0xff]
          %v1344 = vld [vmem:[#allocation2 + $0x58] sm:$0xff]
          %v1345 = vld [vmem:[#allocation2 + $0x60] sm:$0xff]
          %v1346 = vld [vmem:[#allocation2 + $0x68] sm:$0xff]
          %v1347 = vld [vmem:[#allocation2 + $0x70] sm:$0xff]
          %v1348 = vld [vmem:[#allocation2 + $0x78] sm:$0xff]
          %1349 = vst.msk [vmem:[%s180] sm:$0xff] %vm1313, %v1333
          %1350 = vst.msk [vmem:[%s180 + $0x8] sm:$0xff] %vm1313, %v1334
          %1351 = vst.msk [vmem:[%s180 + $0x10] sm:$0xff] %vm1313, %v1335
          %1352 = vst.msk [vmem:[%s180 + $0x18] sm:$0xff] %vm1313, %v1336
          %1353 = vst.msk [vmem:[%s180 + $0x20] sm:$0xff] %vm1313, %v1337
          %1354 = vst.msk [vmem:[%s180 + $0x28] sm:$0xff] %vm1313, %v1338
          %1355 = vst.msk [vmem:[%s180 + $0x30] sm:$0xff] %vm1313, %v1339
          %1356 = vst.msk [vmem:[%s180 + $0x38] sm:$0xff] %vm1313, %v1340
          %1357 = vst.msk [vmem:[%s180 + $0x40] sm:$0xff] %vm1313, %v1341
          %1358 = vst.msk [vmem:[%s180 + $0x48] sm:$0xff] %vm1313, %v1342
          %1359 = vst.msk [vmem:[%s180 + $0x50] sm:$0xff] %vm1313, %v1343
          %1360 = vst.msk [vmem:[%s180 + $0x58] sm:$0xff] %vm1313, %v1344
          %1361 = vst.msk [vmem:[%s180 + $0x60] sm:$0xff] %vm1313, %v1345
          %1362 = vst.msk [vmem:[%s180 + $0x68] sm:$0xff] %vm1313, %v1346
          %1363 = vst.msk [vmem:[%s180 + $0x70] sm:$0xff] %vm1313, %v1347
          %1364 = vst.msk [vmem:[%s180 + $0x78] sm:$0xff] %vm1313, %v1348
        $region40: #{concat_predictor_encoder.2} parent=27 // pred_fallthru
          _
        %p1365 = scmp.lt.s32.totalorder %s20, 1
        %s1366 = scalar_select %p1365, %s20, 1
        %s1367 = smul.addr %s1366, 16
        %s1368 = smul.addr %s1367, 8
        %s1369 = scalar_lea.vmem %s2, %s1368
        // Predicated region
        $region41: #{concat_predictor_encoder.2} parent=27 // pred_check
          %p1370 = pneg %p95
        $region42: #{concat_predictor_encoder.2} parent=27 // pred_check_branch
          %1372 = sbr.rel (%p1370) target = $region44
        $region43: #{concat_predictor_encoder.2} parent=27 // pred_region
          _
        $region44: #{concat_predictor_encoder.2} parent=27 // pred_fallthru
          _
      $region28: #{concat_predictor_encoder.2} parent=5 // pred_fallthru
        _
      %p1373 = scmp.le.s32.totalorder 2, %s11
      // Predicated region
      $region45: #{concat_predictor_encoder.2} parent=5 // pred_check
        %p1374 = pneg %p1373
      $region46: #{concat_predictor_encoder.2} parent=5 // pred_check_branch
        %1376 = sbr.rel (%p1374) target = $region48
      $region47: #{concat_predictor_encoder.2} parent=5 // pred_region
        %s1377 = ssub.s32 %s11, 2
        // Predicated region
        $region49: #{concat_predictor_encoder.2} parent=47 // pred_check
          %p1378 = pneg %p101
        $region50: #{concat_predictor_encoder.2} parent=47 // pred_check_branch
          %1380 = sbr.rel (%p1378) target = $region52
        $region51: #{concat_predictor_encoder.2} parent=47 // pred_region
          %p1381 = scmp.lt.s32.totalorder %s22, 1
          %s1382 = scalar_select %p1381, %s22, 1
          %s1383 = smul.addr %s1382, 16
          %s1384 = smul.addr %s1383, 8
          %s1385 = scalar_lea.vmem %s2, %s1384
        $region52: #{concat_predictor_encoder.2} parent=47 // pred_fallthru
          _
      $region48: #{concat_predictor_encoder.2} parent=5 // pred_fallthru
        _
    $region6: #{concat_predictor_encoder.2} parent=1 // loop_footer
      %s15 = sadd.s32 1, %s11
    $region7: #{concat_predictor_encoder.2} parent=1 // loop_footer_branch
      %10 = sbr.rel target = $region3
    $region8: #{concat_predictor_encoder.2} parent=1 // loop_exit
      _
    %1386 = vsyncpa [#allocation4], 1
    %s1387 = scalar_lea.sflag [#allocation4], 1
    %1388 = vsyncpa %s1387, 1

</llo_original>
